<compile_context>
chip_gen: v7x
topology: tpu7x:2x2x1
jax: 0.10.0
libtpu: 0.0.40
codegen_flags: <defaults>
</compile_context>

<pallas_src>
import jax
import jax.numpy as jnp
from jax.experimental import pallas as pl
from jax.experimental.pallas import tpu as pltpu


# --------------------------- fused forward kernel ---------------------------
def ian_btm2_kernel(ctx_x_ref, ctx_mask_ref, ctx_inv_ref,
                    tgt_x_ref, tgt_mask_ref, tgt_inv_ref,
                    wih_c_ref, whh_c_ref, b_c_ref,
                    wih_t_ref, whh_t_ref, b_t_ref,
                    wk_at_ref, bk_at_ref, wq_at_ref, bq_at_ref,
                    wbi_at_ref, wp_at_ref, bp_at_ref,
                    wk_ac_ref, bk_ac_ref, wq_ac_ref, bq_ac_ref,
                    wbi_ac_ref, wp_ac_ref, bp_ac_ref,
                    wd_ref, bd_ref, o_ref):
    f32 = jnp.float32
    B = ctx_inv_ref.shape[0]              # batch
    H = whh_c_ref.shape[0]                # hidden dim
    L = ctx_x_ref.shape[0] // B           # context length
    GB = tgt_inv_ref.shape[0]             # num_targets * B
    T = tgt_x_ref.shape[0] // GB          # target length
    NT = GB // B                          # num targets

    def tile_rows(x, n):                  # repeat along sublanes (rows)
        return jnp.concatenate([x] * n, axis=0)

    def lstm_seq(x_all, mask_all, wih, whh, bias, rows, steps):
        """Time-major LSTM; rows = batch rows per step, steps = seq length.

        x_all:   (steps*rows, E) rows ordered [t, row]
        mask_all:(steps*rows, 1) 1.0 where t < length else 0.0
        Returns (masked outputs (steps*rows, H), sum over valid steps (rows, H)).
        """
        # input projection hoisted out of the recurrence: one larger matmul
        gates_x = jnp.dot(x_all, wih, preferred_element_type=f32) + bias
        h = jnp.zeros((rows, H), f32)
        c = jnp.zeros((rows, H), f32)
        pool = jnp.zeros((rows, H), f32)
        outs = []
        for t in range(steps):            # fully unrolled, static slices
            g = gates_x[t * rows:(t + 1) * rows, :] + jnp.dot(
                h, whh, preferred_element_type=f32)
            # gate columns laid out [i, f, o, g]: one sigmoid over 3H lanes
            sig = jax.nn.sigmoid(g[:, :3 * H])
            i_g = sig[:, :H]
            f_g = sig[:, H:2 * H]
            o_g = sig[:, 2 * H:3 * H]
            g_g = jnp.tanh(g[:, 3 * H:])
            c = f_g * c + i_g * g_g
            h = o_g * jnp.tanh(c)
            mh = h * mask_all[t * rows:(t + 1) * rows, :]   # zero padded steps
            pool = pool + mh
            outs.append(mh)
        return jnp.concatenate(outs, axis=0), pool

    # ---- context LSTM (computed once; torch recomputes identical per target) --
    ctx_out, ctx_sum = lstm_seq(ctx_x_ref[...], ctx_mask_ref[...],
                                wih_c_ref[...], whh_c_ref[...], b_c_ref[...],
                                B, L)
    ctx_pool = ctx_sum * ctx_inv_ref[...]                       # (B, H)

    # ---- target LSTM: 3 targets batched along rows --------------------------
    tgt_out, tgt_sum = lstm_seq(tgt_x_ref[...], tgt_mask_ref[...],
                                wih_t_ref[...], whh_t_ref[...], b_t_ref[...],
                                GB, T)
    tgt_pool = tgt_sum * tgt_inv_ref[...]                       # (GB, H)

    # ---- attention_target: k = target sequence, q = context mean-pool -------
    kx_t = jnp.dot(tgt_out, wk_at_ref[...],
                   preferred_element_type=f32) + bk_at_ref[...]  # (T*GB, H)
    qx_t = jnp.dot(ctx_pool, wq_at_ref[...],
                   preferred_element_type=f32) + bq_at_ref[...]  # (B, H)
    qw_t = jnp.dot(qx_t, wbi_at_ref[...], preferred_element_type=f32)
    qw_t = tile_rows(qw_t, NT)                                   # (GB, H)
    score_cols = [jnp.sum(qw_t * kx_t[s * GB:(s + 1) * GB, :],
                          axis=-1, keepdims=True) for s in range(T)]
    score_t = jax.nn.softmax(jnp.concatenate(score_cols, axis=-1), axis=-1)
    att_t = jnp.zeros((GB, H), f32)
    for s in range(T):
        att_t = att_t + score_t[:, s:s + 1] * kx_t[s * GB:(s + 1) * GB, :]
    target_final = jnp.dot(att_t, wp_at_ref[...],
                           preferred_element_type=f32) + bp_at_ref[...]  # (GB,H)

    # ---- attention_context: k = context sequence (shared), q = target pool --
    kx_c = jnp.dot(ctx_out, wk_ac_ref[...],
                   preferred_element_type=f32) + bk_ac_ref[...]  # (L*B, H)
    qx_c = jnp.dot(tgt_pool, wq_ac_ref[...],
                   preferred_element_type=f32) + bq_ac_ref[...]  # (GB, H)
    qw_c = jnp.dot(qx_c, wbi_ac_ref[...], preferred_element_type=f32)
    kx_blocks = []
    score_cols = []
    for t in range(L):
        blk = tile_rows(kx_c[t * B:(t + 1) * B, :], NT)          # (GB, H)
        kx_blocks.append(blk)
        score_cols.append(jnp.sum(qw_c * blk, axis=-1, keepdims=True))
    score_c = jax.nn.softmax(jnp.concatenate(score_cols, axis=-1), axis=-1)
    att_c = jnp.zeros((GB, H), f32)
    for t in range(L):
        att_c = att_c + score_c[:, t:t + 1] * kx_blocks[t]
    context_final = jnp.dot(att_c, wp_ac_ref[...],
                            preferred_element_type=f32) + bp_ac_ref[...]  # (GB,H)

    # ---- per-target concat([target_final, context_final]) -> dense ----------
    feats = jnp.concatenate(
        [jnp.concatenate([target_final[g * B:(g + 1) * B, :],
                          context_final[g * B:(g + 1) * B, :]], axis=-1)
         for g in range(NT)], axis=-1)                           # (B, 2*NT*H)
    o_ref[...] = jnp.dot(feats, wd_ref[...],
                         preferred_element_type=f32) + bd_ref[...]


# ------------------------------ full forward --------------------------------
def forward(text_raw_indices, target_topic_words_indices, params):
    emb = params['embedding']
    B, L = text_raw_indices.shape
    NT, _, T = target_topic_words_indices.shape
    P = params['dense_w'].shape[1]

    text_len = jnp.sum(text_raw_indices != 0, axis=-1).astype(jnp.float32)   # (B,)
    tgt_len = jnp.sum(target_topic_words_indices != 0,
                      axis=-1).astype(jnp.float32)                           # (NT, B)

    # embedding gather stays outside the kernel (jnp.take); only the tiny int32
    # index tensors are transposed to time-major, not the embedded data.
    ctx_idx = jnp.transpose(text_raw_indices, (1, 0)).reshape(-1)            # (L*B,)
    ctx_x = jnp.take(emb, ctx_idx, axis=0)                                   # (L*B, E)
    tgt_idx = jnp.transpose(target_topic_words_indices, (2, 0, 1)).reshape(-1)
    tgt_x = jnp.take(emb, tgt_idx, axis=0)                                   # (T*NT*B, E)

    ctx_mask = (jnp.arange(L, dtype=jnp.float32)[:, None]
                < text_len[None, :]).astype(jnp.float32).reshape(L * B, 1)
    tgt_mask = (jnp.arange(T, dtype=jnp.float32)[:, None, None]
                < tgt_len[None, :, :]).astype(jnp.float32).reshape(T * NT * B, 1)
    ctx_inv = (1.0 / text_len).reshape(B, 1)
    tgt_inv = (1.0 / tgt_len).reshape(NT * B, 1)

    inputs = (ctx_x, ctx_mask, ctx_inv, tgt_x, tgt_mask, tgt_inv,
              *params['lstm_context'], *params['lstm_target'],
              *params['attn_target'], *params['attn_context'],
              params['dense_w'], params['dense_b'])

    def fs(a):
        n = a.ndim
        return pl.BlockSpec(a.shape, lambda i, n=n: (0,) * n)

    return pl.pallas_call(
        ian_btm2_kernel,
        out_shape=jax.ShapeDtypeStruct((B, P), jnp.float32),
        grid=(1,),
        in_specs=[fs(a) for a in inputs],
        out_specs=pl.BlockSpec((B, P), lambda i: (0, 0)),
        compiler_params=pltpu.CompilerParams(dimension_semantics=("arbitrary",)),
    )(*inputs)


# ------------------------ deterministic parameters ---------------------------
def init_params(key, vocab, E, H, P):
    keys = iter(jax.random.split(key, 32))

    def nrm(shape, scale=0.1):
        return jax.random.normal(next(keys), shape, jnp.float32) * scale

    def lstm_params():
        # stored transposed: W_ih^T (E,4H), W_hh^T (H,4H), combined bias (1,4H)
        # gate-column order is [i, f, o, g]
        return (nrm((E, 4 * H)), nrm((H, 4 * H)),
                nrm((1, 4 * H)) + nrm((1, 4 * H)))

    def attn_params():
        # (Wk^T, bk, Wq^T, bq, bi_linear weight, Wproj^T, bproj)
        return (nrm((H, H)), nrm((1, H)), nrm((H, H)), nrm((1, H)),
                nrm((H, H)), nrm((H, H)), nrm((1, H)))

    return dict(
        embedding=nrm((vocab, E), 1.0),
        lstm_context=lstm_params(),
        lstm_target=lstm_params(),
        attn_target=attn_params(),
        attn_context=attn_params(),
        dense_w=nrm((6 * H, P)),
        dense_b=nrm((1, P)),
    )


def make_indices(key, batch, seqlen, lengths, vocab):
    idx = jax.random.randint(key, (batch, seqlen), 1, vocab, dtype=jnp.int32)
    pos = jnp.arange(seqlen)[None, :]
    return jnp.where(pos < jnp.array(lengths)[:, None], idx, 0)


if __name__ == "__main__":
    B, L, T, E, H, P = 4, 8, 4, 32, 32, 3
    VOCAB = 50

    key = jax.random.PRNGKey(0)
    kp, kt, k0, k1, k2 = jax.random.split(key, 5)
    params = init_params(kp, VOCAB, E, H, P)

    # lengths chosen so max length == full seq width (matches pad_packed width)
    text_raw_indices = make_indices(kt, B, L, [L, L - 2, L - 3, L - 1], VOCAB)
    target_topic_words_indices = jnp.stack([
        make_indices(k0, B, T, [T, T - 1, T - 2, T - 1], VOCAB),
        make_indices(k1, B, T, [T - 1, T, T - 2, T - 3], VOCAB),
        make_indices(k2, B, T, [T, T, T - 1, T - 2], VOCAB),
    ])

    fwd = jax.jit(forward)
    out = fwd(text_raw_indices, target_topic_words_indices, params)
    out = jax.block_until_ready(out)
    assert out.shape == (B, P) and out.dtype == jnp.float32
    assert bool(jnp.all(jnp.isfinite(out)))
    print("KERNEL_OK")
</pallas_src>

<mosaic_0001>
module attributes {stable_mosaic.version = 11 : i64} {
  func.func @ian_btm2_kernel(%arg0: i32, %arg1: memref<32x32xf32, #tpu.memory_space<vmem>>, %arg2: memref<32x1xf32, #tpu.memory_space<vmem>>, %arg3: memref<4x1xf32, #tpu.memory_space<vmem>>, %arg4: memref<48x32xf32, #tpu.memory_space<vmem>>, %arg5: memref<48x1xf32, #tpu.memory_space<vmem>>, %arg6: memref<12x1xf32, #tpu.memory_space<vmem>>, %arg7: memref<32x128xf32, #tpu.memory_space<vmem>>, %arg8: memref<32x128xf32, #tpu.memory_space<vmem>>, %arg9: memref<1x128xf32, #tpu.memory_space<vmem>>, %arg10: memref<32x128xf32, #tpu.memory_space<vmem>>, %arg11: memref<32x128xf32, #tpu.memory_space<vmem>>, %arg12: memref<1x128xf32, #tpu.memory_space<vmem>>, %arg13: memref<32x32xf32, #tpu.memory_space<vmem>>, %arg14: memref<1x32xf32, #tpu.memory_space<vmem>>, %arg15: memref<32x32xf32, #tpu.memory_space<vmem>>, %arg16: memref<1x32xf32, #tpu.memory_space<vmem>>, %arg17: memref<32x32xf32, #tpu.memory_space<vmem>>, %arg18: memref<32x32xf32, #tpu.memory_space<vmem>>, %arg19: memref<1x32xf32, #tpu.memory_space<vmem>>, %arg20: memref<32x32xf32, #tpu.memory_space<vmem>>, %arg21: memref<1x32xf32, #tpu.memory_space<vmem>>, %arg22: memref<32x32xf32, #tpu.memory_space<vmem>>, %arg23: memref<1x32xf32, #tpu.memory_space<vmem>>, %arg24: memref<32x32xf32, #tpu.memory_space<vmem>>, %arg25: memref<32x32xf32, #tpu.memory_space<vmem>>, %arg26: memref<1x32xf32, #tpu.memory_space<vmem>>, %arg27: memref<192x3xf32, #tpu.memory_space<vmem>>, %arg28: memref<1x3xf32, #tpu.memory_space<vmem>>, %arg29: memref<4x3xf32, #tpu.memory_space<vmem>>) attributes {dimension_semantics = [#tpu.dimension_semantics<arbitrary>], iteration_bounds = array<i64: 1>, scalar_prefetch = 0 : i64, scratch_operands = 0 : i64, tpu.core_type = #tpu.core_type<tc>, window_params = [{pipeline_mode = #tpu.pipeline_mode<synchronous>, transform_indices = @transform_0, window_bounds = array<i64: 32, 32>}, {pipeline_mode = #tpu.pipeline_mode<synchronous>, transform_indices = @transform_1, window_bounds = array<i64: 32, 1>}, {pipeline_mode = #tpu.pipeline_mode<synchronous>, transform_indices = @transform_2, window_bounds = array<i64: 4, 1>}, {pipeline_mode = #tpu.pipeline_mode<synchronous>, transform_indices = @transform_3, window_bounds = array<i64: 48, 32>}, {pipeline_mode = #tpu.pipeline_mode<synchronous>, transform_indices = @transform_4, window_bounds = array<i64: 48, 1>}, {pipeline_mode = #tpu.pipeline_mode<synchronous>, transform_indices = @transform_5, window_bounds = array<i64: 12, 1>}, {pipeline_mode = #tpu.pipeline_mode<synchronous>, transform_indices = @transform_6, window_bounds = array<i64: 32, 128>}, {pipeline_mode = #tpu.pipeline_mode<synchronous>, transform_indices = @transform_7, window_bounds = array<i64: 32, 128>}, {pipeline_mode = #tpu.pipeline_mode<synchronous>, transform_indices = @transform_8, window_bounds = array<i64: 1, 128>}, {pipeline_mode = #tpu.pipeline_mode<synchronous>, transform_indices = @transform_9, window_bounds = array<i64: 32, 128>}, {pipeline_mode = #tpu.pipeline_mode<synchronous>, transform_indices = @transform_10, window_bounds = array<i64: 32, 128>}, {pipeline_mode = #tpu.pipeline_mode<synchronous>, transform_indices = @transform_11, window_bounds = array<i64: 1, 128>}, {pipeline_mode = #tpu.pipeline_mode<synchronous>, transform_indices = @transform_12, window_bounds = array<i64: 32, 32>}, {pipeline_mode = #tpu.pipeline_mode<synchronous>, transform_indices = @transform_13, window_bounds = array<i64: 1, 32>}, {pipeline_mode = #tpu.pipeline_mode<synchronous>, transform_indices = @transform_14, window_bounds = array<i64: 32, 32>}, {pipeline_mode = #tpu.pipeline_mode<synchronous>, transform_indices = @transform_15, window_bounds = array<i64: 1, 32>}, {pipeline_mode = #tpu.pipeline_mode<synchronous>, transform_indices = @transform_16, window_bounds = array<i64: 32, 32>}, {pipeline_mode = #tpu.pipeline_mode<synchronous>, transform_indices = @transform_17, window_bounds = array<i64: 32, 32>}, {pipeline_mode = #tpu.pipeline_mode<synchronous>, transform_indices = @transform_18, window_bounds = array<i64: 1, 32>}, {pipeline_mode = #tpu.pipeline_mode<synchronous>, transform_indices = @transform_19, window_bounds = array<i64: 32, 32>}, {pipeline_mode = #tpu.pipeline_mode<synchronous>, transform_indices = @transform_20, window_bounds = array<i64: 1, 32>}, {pipeline_mode = #tpu.pipeline_mode<synchronous>, transform_indices = @transform_21, window_bounds = array<i64: 32, 32>}, {pipeline_mode = #tpu.pipeline_mode<synchronous>, transform_indices = @transform_22, window_bounds = array<i64: 1, 32>}, {pipeline_mode = #tpu.pipeline_mode<synchronous>, transform_indices = @transform_23, window_bounds = array<i64: 32, 32>}, {pipeline_mode = #tpu.pipeline_mode<synchronous>, transform_indices = @transform_24, window_bounds = array<i64: 32, 32>}, {pipeline_mode = #tpu.pipeline_mode<synchronous>, transform_indices = @transform_25, window_bounds = array<i64: 1, 32>}, {pipeline_mode = #tpu.pipeline_mode<synchronous>, transform_indices = @transform_26, window_bounds = array<i64: 192, 3>}, {pipeline_mode = #tpu.pipeline_mode<synchronous>, transform_indices = @transform_27, window_bounds = array<i64: 1, 3>}, {pipeline_mode = #tpu.pipeline_mode<synchronous>, transform_indices = @transform_28, window_bounds = array<i64: 4, 3>}]} {
    %c0 = arith.constant 0 : index
    %c0_0 = arith.constant 0 : index
    %0 = vector.load %arg1[%c0, %c0_0] : memref<32x32xf32, #tpu.memory_space<vmem>>, vector<32x32xf32>
    %c0_1 = arith.constant 0 : index
    %c0_2 = arith.constant 0 : index
    %1 = vector.load %arg2[%c0_1, %c0_2] : memref<32x1xf32, #tpu.memory_space<vmem>>, vector<32x1xf32>
    %c0_3 = arith.constant 0 : index
    %c0_4 = arith.constant 0 : index
    %2 = vector.load %arg7[%c0_3, %c0_4] : memref<32x128xf32, #tpu.memory_space<vmem>>, vector<32x128xf32>
    %c0_5 = arith.constant 0 : index
    %c0_6 = arith.constant 0 : index
    %3 = vector.load %arg8[%c0_5, %c0_6] : memref<32x128xf32, #tpu.memory_space<vmem>>, vector<32x128xf32>
    %c0_7 = arith.constant 0 : index
    %c0_8 = arith.constant 0 : index
    %4 = vector.load %arg9[%c0_7, %c0_8] : memref<1x128xf32, #tpu.memory_space<vmem>>, vector<1x128xf32>
    %cst = arith.constant dense<0.000000e+00> : vector<32x128xf32>
    %5 = tpu.matmul %0, %2, %cst {dimension_numbers = #tpu.dot_dimension_numbers<[1], [0], [0], [1], [0, 0, 1, 1], [], []>} : vector<32x32xf32>, vector<32x128xf32>, vector<32x128xf32> -> vector<32x128xf32>
    %6 = vector.broadcast %4 : vector<1x128xf32> to vector<32x128xf32>
    %7 = arith.addf %5, %6 : vector<32x128xf32>
    %cst_9 = arith.constant 0.000000e+00 : f32
    %8 = vector.broadcast %cst_9 : f32 to vector<4x32xf32>
    %cst_10 = arith.constant 0.000000e+00 : f32
    %9 = vector.broadcast %cst_10 : f32 to vector<4x32xf32>
    %cst_11 = arith.constant 0.000000e+00 : f32
    %10 = vector.broadcast %cst_11 : f32 to vector<4x32xf32>
    %11 = vector.extract_strided_slice %7 {offsets = [0, 0], sizes = [4, 128], strides = [1, 1]} : vector<32x128xf32> to vector<4x128xf32>
    %cst_12 = arith.constant dense<0.000000e+00> : vector<4x128xf32>
    %12 = tpu.matmul %8, %3, %cst_12 {dimension_numbers = #tpu.dot_dimension_numbers<[1], [0], [0], [1], [0, 0, 1, 1], [], []>} : vector<4x32xf32>, vector<32x128xf32>, vector<4x128xf32> -> vector<4x128xf32>
    %13 = arith.addf %11, %12 : vector<4x128xf32>
    %14 = vector.extract_strided_slice %13 {offsets = [0, 0], sizes = [4, 96], strides = [1, 1]} : vector<4x128xf32> to vector<4x96xf32>
    %15 = arith.negf %14 : vector<4x96xf32>
    %16 = math.exp %15 : vector<4x96xf32>
    %cst_13 = arith.constant 1.000000e+00 : f32
    %17 = vector.broadcast %cst_13 : f32 to vector<4x96xf32>
    %18 = arith.addf %17, %16 : vector<4x96xf32>
    %19 = arith.divf %17, %18 : vector<4x96xf32>
    %20 = vector.extract_strided_slice %19 {offsets = [0, 0], sizes = [4, 32], strides = [1, 1]} : vector<4x96xf32> to vector<4x32xf32>
    %21 = vector.extract_strided_slice %19 {offsets = [0, 32], sizes = [4, 32], strides = [1, 1]} : vector<4x96xf32> to vector<4x32xf32>
    %22 = vector.extract_strided_slice %19 {offsets = [0, 64], sizes = [4, 32], strides = [1, 1]} : vector<4x96xf32> to vector<4x32xf32>
    %23 = vector.extract_strided_slice %13 {offsets = [0, 96], sizes = [4, 32], strides = [1, 1]} : vector<4x128xf32> to vector<4x32xf32>
    %24 = math.tanh %23 : vector<4x32xf32>
    %25 = arith.mulf %21, %9 : vector<4x32xf32>
    %26 = arith.mulf %20, %24 : vector<4x32xf32>
    %27 = arith.addf %25, %26 : vector<4x32xf32>
    %28 = math.tanh %27 : vector<4x32xf32>
    %29 = arith.mulf %22, %28 : vector<4x32xf32>
    %30 = vector.extract_strided_slice %1 {offsets = [0, 0], sizes = [4, 1], strides = [1, 1]} : vector<32x1xf32> to vector<4x1xf32>
    %31 = vector.broadcast %30 : vector<4x1xf32> to vector<4x32xf32>
    %32 = arith.mulf %29, %31 : vector<4x32xf32>
    %33 = arith.addf %10, %32 : vector<4x32xf32>
    %34 = vector.extract_strided_slice %7 {offsets = [4, 0], sizes = [4, 128], strides = [1, 1]} : vector<32x128xf32> to vector<4x128xf32>
    %cst_14 = arith.constant dense<0.000000e+00> : vector<4x128xf32>
    %35 = tpu.matmul %29, %3, %cst_14 {dimension_numbers = #tpu.dot_dimension_numbers<[1], [0], [0], [1], [0, 0, 1, 1], [], []>} : vector<4x32xf32>, vector<32x128xf32>, vector<4x128xf32> -> vector<4x128xf32>
    %36 = arith.addf %34, %35 : vector<4x128xf32>
    %37 = vector.extract_strided_slice %36 {offsets = [0, 0], sizes = [4, 96], strides = [1, 1]} : vector<4x128xf32> to vector<4x96xf32>
    %38 = arith.negf %37 : vector<4x96xf32>
    %39 = math.exp %38 : vector<4x96xf32>
    %cst_15 = arith.constant 1.000000e+00 : f32
    %40 = vector.broadcast %cst_15 : f32 to vector<4x96xf32>
    %41 = arith.addf %40, %39 : vector<4x96xf32>
    %42 = arith.divf %40, %41 : vector<4x96xf32>
    %43 = vector.extract_strided_slice %42 {offsets = [0, 0], sizes = [4, 32], strides = [1, 1]} : vector<4x96xf32> to vector<4x32xf32>
    %44 = vector.extract_strided_slice %42 {offsets = [0, 32], sizes = [4, 32], strides = [1, 1]} : vector<4x96xf32> to vector<4x32xf32>
    %45 = vector.extract_strided_slice %42 {offsets = [0, 64], sizes = [4, 32], strides = [1, 1]} : vector<4x96xf32> to vector<4x32xf32>
    %46 = vector.extract_strided_slice %36 {offsets = [0, 96], sizes = [4, 32], strides = [1, 1]} : vector<4x128xf32> to vector<4x32xf32>
    %47 = math.tanh %46 : vector<4x32xf32>
    %48 = arith.mulf %44, %27 : vector<4x32xf32>
    %49 = arith.mulf %43, %47 : vector<4x32xf32>
    %50 = arith.addf %48, %49 : vector<4x32xf32>
    %51 = math.tanh %50 : vector<4x32xf32>
    %52 = arith.mulf %45, %51 : vector<4x32xf32>
    %53 = vector.extract_strided_slice %1 {offsets = [4, 0], sizes = [4, 1], strides = [1, 1]} : vector<32x1xf32> to vector<4x1xf32>
    %54 = vector.broadcast %53 : vector<4x1xf32> to vector<4x32xf32>
    %55 = arith.mulf %52, %54 : vector<4x32xf32>
    %56 = arith.addf %33, %55 : vector<4x32xf32>
    %57 = vector.extract_strided_slice %7 {offsets = [8, 0], sizes = [4, 128], strides = [1, 1]} : vector<32x128xf32> to vector<4x128xf32>
    %cst_16 = arith.constant dense<0.000000e+00> : vector<4x128xf32>
    %58 = tpu.matmul %52, %3, %cst_16 {dimension_numbers = #tpu.dot_dimension_numbers<[1], [0], [0], [1], [0, 0, 1, 1], [], []>} : vector<4x32xf32>, vector<32x128xf32>, vector<4x128xf32> -> vector<4x128xf32>
    %59 = arith.addf %57, %58 : vector<4x128xf32>
    %60 = vector.extract_strided_slice %59 {offsets = [0, 0], sizes = [4, 96], strides = [1, 1]} : vector<4x128xf32> to vector<4x96xf32>
    %61 = arith.negf %60 : vector<4x96xf32>
    %62 = math.exp %61 : vector<4x96xf32>
    %cst_17 = arith.constant 1.000000e+00 : f32
    %63 = vector.broadcast %cst_17 : f32 to vector<4x96xf32>
    %64 = arith.addf %63, %62 : vector<4x96xf32>
    %65 = arith.divf %63, %64 : vector<4x96xf32>
    %66 = vector.extract_strided_slice %65 {offsets = [0, 0], sizes = [4, 32], strides = [1, 1]} : vector<4x96xf32> to vector<4x32xf32>
    %67 = vector.extract_strided_slice %65 {offsets = [0, 32], sizes = [4, 32], strides = [1, 1]} : vector<4x96xf32> to vector<4x32xf32>
    %68 = vector.extract_strided_slice %65 {offsets = [0, 64], sizes = [4, 32], strides = [1, 1]} : vector<4x96xf32> to vector<4x32xf32>
    %69 = vector.extract_strided_slice %59 {offsets = [0, 96], sizes = [4, 32], strides = [1, 1]} : vector<4x128xf32> to vector<4x32xf32>
    %70 = math.tanh %69 : vector<4x32xf32>
    %71 = arith.mulf %67, %50 : vector<4x32xf32>
    %72 = arith.mulf %66, %70 : vector<4x32xf32>
    %73 = arith.addf %71, %72 : vector<4x32xf32>
    %74 = math.tanh %73 : vector<4x32xf32>
    %75 = arith.mulf %68, %74 : vector<4x32xf32>
    %76 = vector.extract_strided_slice %1 {offsets = [8, 0], sizes = [4, 1], strides = [1, 1]} : vector<32x1xf32> to vector<4x1xf32>
    %77 = vector.broadcast %76 : vector<4x1xf32> to vector<4x32xf32>
    %78 = arith.mulf %75, %77 : vector<4x32xf32>
    %79 = arith.addf %56, %78 : vector<4x32xf32>
    %80 = vector.extract_strided_slice %7 {offsets = [12, 0], sizes = [4, 128], strides = [1, 1]} : vector<32x128xf32> to vector<4x128xf32>
    %cst_18 = arith.constant dense<0.000000e+00> : vector<4x128xf32>
    %81 = tpu.matmul %75, %3, %cst_18 {dimension_numbers = #tpu.dot_dimension_numbers<[1], [0], [0], [1], [0, 0, 1, 1], [], []>} : vector<4x32xf32>, vector<32x128xf32>, vector<4x128xf32> -> vector<4x128xf32>
    %82 = arith.addf %80, %81 : vector<4x128xf32>
    %83 = vector.extract_strided_slice %82 {offsets = [0, 0], sizes = [4, 96], strides = [1, 1]} : vector<4x128xf32> to vector<4x96xf32>
    %84 = arith.negf %83 : vector<4x96xf32>
    %85 = math.exp %84 : vector<4x96xf32>
    %cst_19 = arith.constant 1.000000e+00 : f32
    %86 = vector.broadcast %cst_19 : f32 to vector<4x96xf32>
    %87 = arith.addf %86, %85 : vector<4x96xf32>
    %88 = arith.divf %86, %87 : vector<4x96xf32>
    %89 = vector.extract_strided_slice %88 {offsets = [0, 0], sizes = [4, 32], strides = [1, 1]} : vector<4x96xf32> to vector<4x32xf32>
    %90 = vector.extract_strided_slice %88 {offsets = [0, 32], sizes = [4, 32], strides = [1, 1]} : vector<4x96xf32> to vector<4x32xf32>
    %91 = vector.extract_strided_slice %88 {offsets = [0, 64], sizes = [4, 32], strides = [1, 1]} : vector<4x96xf32> to vector<4x32xf32>
    %92 = vector.extract_strided_slice %82 {offsets = [0, 96], sizes = [4, 32], strides = [1, 1]} : vector<4x128xf32> to vector<4x32xf32>
    %93 = math.tanh %92 : vector<4x32xf32>
    %94 = arith.mulf %90, %73 : vector<4x32xf32>
    %95 = arith.mulf %89, %93 : vector<4x32xf32>
    %96 = arith.addf %94, %95 : vector<4x32xf32>
    %97 = math.tanh %96 : vector<4x32xf32>
    %98 = arith.mulf %91, %97 : vector<4x32xf32>
    %99 = vector.extract_strided_slice %1 {offsets = [12, 0], sizes = [4, 1], strides = [1, 1]} : vector<32x1xf32> to vector<4x1xf32>
    %100 = vector.broadcast %99 : vector<4x1xf32> to vector<4x32xf32>
    %101 = arith.mulf %98, %100 : vector<4x32xf32>
    %102 = arith.addf %79, %101 : vector<4x32xf32>
    %103 = vector.extract_strided_slice %7 {offsets = [16, 0], sizes = [4, 128], strides = [1, 1]} : vector<32x128xf32> to vector<4x128xf32>
    %cst_20 = arith.constant dense<0.000000e+00> : vector<4x128xf32>
    %104 = tpu.matmul %98, %3, %cst_20 {dimension_numbers = #tpu.dot_dimension_numbers<[1], [0], [0], [1], [0, 0, 1, 1], [], []>} : vector<4x32xf32>, vector<32x128xf32>, vector<4x128xf32> -> vector<4x128xf32>
    %105 = arith.addf %103, %104 : vector<4x128xf32>
    %106 = vector.extract_strided_slice %105 {offsets = [0, 0], sizes = [4, 96], strides = [1, 1]} : vector<4x128xf32> to vector<4x96xf32>
    %107 = arith.negf %106 : vector<4x96xf32>
    %108 = math.exp %107 : vector<4x96xf32>
    %cst_21 = arith.constant 1.000000e+00 : f32
    %109 = vector.broadcast %cst_21 : f32 to vector<4x96xf32>
    %110 = arith.addf %109, %108 : vector<4x96xf32>
    %111 = arith.divf %109, %110 : vector<4x96xf32>
    %112 = vector.extract_strided_slice %111 {offsets = [0, 0], sizes = [4, 32], strides = [1, 1]} : vector<4x96xf32> to vector<4x32xf32>
    %113 = vector.extract_strided_slice %111 {offsets = [0, 32], sizes = [4, 32], strides = [1, 1]} : vector<4x96xf32> to vector<4x32xf32>
    %114 = vector.extract_strided_slice %111 {offsets = [0, 64], sizes = [4, 32], strides = [1, 1]} : vector<4x96xf32> to vector<4x32xf32>
    %115 = vector.extract_strided_slice %105 {offsets = [0, 96], sizes = [4, 32], strides = [1, 1]} : vector<4x128xf32> to vector<4x32xf32>
    %116 = math.tanh %115 : vector<4x32xf32>
    %117 = arith.mulf %113, %96 : vector<4x32xf32>
    %118 = arith.mulf %112, %116 : vector<4x32xf32>
    %119 = arith.addf %117, %118 : vector<4x32xf32>
    %120 = math.tanh %119 : vector<4x32xf32>
    %121 = arith.mulf %114, %120 : vector<4x32xf32>
    %122 = vector.extract_strided_slice %1 {offsets = [16, 0], sizes = [4, 1], strides = [1, 1]} : vector<32x1xf32> to vector<4x1xf32>
    %123 = vector.broadcast %122 : vector<4x1xf32> to vector<4x32xf32>
    %124 = arith.mulf %121, %123 : vector<4x32xf32>
    %125 = arith.addf %102, %124 : vector<4x32xf32>
    %126 = vector.extract_strided_slice %7 {offsets = [20, 0], sizes = [4, 128], strides = [1, 1]} : vector<32x128xf32> to vector<4x128xf32>
    %cst_22 = arith.constant dense<0.000000e+00> : vector<4x128xf32>
    %127 = tpu.matmul %121, %3, %cst_22 {dimension_numbers = #tpu.dot_dimension_numbers<[1], [0], [0], [1], [0, 0, 1, 1], [], []>} : vector<4x32xf32>, vector<32x128xf32>, vector<4x128xf32> -> vector<4x128xf32>
    %128 = arith.addf %126, %127 : vector<4x128xf32>
    %129 = vector.extract_strided_slice %128 {offsets = [0, 0], sizes = [4, 96], strides = [1, 1]} : vector<4x128xf32> to vector<4x96xf32>
    %130 = arith.negf %129 : vector<4x96xf32>
    %131 = math.exp %130 : vector<4x96xf32>
    %cst_23 = arith.constant 1.000000e+00 : f32
    %132 = vector.broadcast %cst_23 : f32 to vector<4x96xf32>
    %133 = arith.addf %132, %131 : vector<4x96xf32>
    %134 = arith.divf %132, %133 : vector<4x96xf32>
    %135 = vector.extract_strided_slice %134 {offsets = [0, 0], sizes = [4, 32], strides = [1, 1]} : vector<4x96xf32> to vector<4x32xf32>
    %136 = vector.extract_strided_slice %134 {offsets = [0, 32], sizes = [4, 32], strides = [1, 1]} : vector<4x96xf32> to vector<4x32xf32>
    %137 = vector.extract_strided_slice %134 {offsets = [0, 64], sizes = [4, 32], strides = [1, 1]} : vector<4x96xf32> to vector<4x32xf32>
    %138 = vector.extract_strided_slice %128 {offsets = [0, 96], sizes = [4, 32], strides = [1, 1]} : vector<4x128xf32> to vector<4x32xf32>
    %139 = math.tanh %138 : vector<4x32xf32>
    %140 = arith.mulf %136, %119 : vector<4x32xf32>
    %141 = arith.mulf %135, %139 : vector<4x32xf32>
    %142 = arith.addf %140, %141 : vector<4x32xf32>
    %143 = math.tanh %142 : vector<4x32xf32>
    %144 = arith.mulf %137, %143 : vector<4x32xf32>
    %145 = vector.extract_strided_slice %1 {offsets = [20, 0], sizes = [4, 1], strides = [1, 1]} : vector<32x1xf32> to vector<4x1xf32>
    %146 = vector.broadcast %145 : vector<4x1xf32> to vector<4x32xf32>
    %147 = arith.mulf %144, %146 : vector<4x32xf32>
    %148 = arith.addf %125, %147 : vector<4x32xf32>
    %149 = vector.extract_strided_slice %7 {offsets = [24, 0], sizes = [4, 128], strides = [1, 1]} : vector<32x128xf32> to vector<4x128xf32>
    %cst_24 = arith.constant dense<0.000000e+00> : vector<4x128xf32>
    %150 = tpu.matmul %144, %3, %cst_24 {dimension_numbers = #tpu.dot_dimension_numbers<[1], [0], [0], [1], [0, 0, 1, 1], [], []>} : vector<4x32xf32>, vector<32x128xf32>, vector<4x128xf32> -> vector<4x128xf32>
    %151 = arith.addf %149, %150 : vector<4x128xf32>
    %152 = vector.extract_strided_slice %151 {offsets = [0, 0], sizes = [4, 96], strides = [1, 1]} : vector<4x128xf32> to vector<4x96xf32>
    %153 = arith.negf %152 : vector<4x96xf32>
    %154 = math.exp %153 : vector<4x96xf32>
    %cst_25 = arith.constant 1.000000e+00 : f32
    %155 = vector.broadcast %cst_25 : f32 to vector<4x96xf32>
    %156 = arith.addf %155, %154 : vector<4x96xf32>
    %157 = arith.divf %155, %156 : vector<4x96xf32>
    %158 = vector.extract_strided_slice %157 {offsets = [0, 0], sizes = [4, 32], strides = [1, 1]} : vector<4x96xf32> to vector<4x32xf32>
    %159 = vector.extract_strided_slice %157 {offsets = [0, 32], sizes = [4, 32], strides = [1, 1]} : vector<4x96xf32> to vector<4x32xf32>
    %160 = vector.extract_strided_slice %157 {offsets = [0, 64], sizes = [4, 32], strides = [1, 1]} : vector<4x96xf32> to vector<4x32xf32>
    %161 = vector.extract_strided_slice %151 {offsets = [0, 96], sizes = [4, 32], strides = [1, 1]} : vector<4x128xf32> to vector<4x32xf32>
    %162 = math.tanh %161 : vector<4x32xf32>
    %163 = arith.mulf %159, %142 : vector<4x32xf32>
    %164 = arith.mulf %158, %162 : vector<4x32xf32>
    %165 = arith.addf %163, %164 : vector<4x32xf32>
    %166 = math.tanh %165 : vector<4x32xf32>
    %167 = arith.mulf %160, %166 : vector<4x32xf32>
    %168 = vector.extract_strided_slice %1 {offsets = [24, 0], sizes = [4, 1], strides = [1, 1]} : vector<32x1xf32> to vector<4x1xf32>
    %169 = vector.broadcast %168 : vector<4x1xf32> to vector<4x32xf32>
    %170 = arith.mulf %167, %169 : vector<4x32xf32>
    %171 = arith.addf %148, %170 : vector<4x32xf32>
    %172 = vector.extract_strided_slice %7 {offsets = [28, 0], sizes = [4, 128], strides = [1, 1]} : vector<32x128xf32> to vector<4x128xf32>
    %cst_26 = arith.constant dense<0.000000e+00> : vector<4x128xf32>
    %173 = tpu.matmul %167, %3, %cst_26 {dimension_numbers = #tpu.dot_dimension_numbers<[1], [0], [0], [1], [0, 0, 1, 1], [], []>} : vector<4x32xf32>, vector<32x128xf32>, vector<4x128xf32> -> vector<4x128xf32>
    %174 = arith.addf %172, %173 : vector<4x128xf32>
    %175 = vector.extract_strided_slice %174 {offsets = [0, 0], sizes = [4, 96], strides = [1, 1]} : vector<4x128xf32> to vector<4x96xf32>
    %176 = arith.negf %175 : vector<4x96xf32>
    %177 = math.exp %176 : vector<4x96xf32>
    %cst_27 = arith.constant 1.000000e+00 : f32
    %178 = vector.broadcast %cst_27 : f32 to vector<4x96xf32>
    %179 = arith.addf %178, %177 : vector<4x96xf32>
    %180 = arith.divf %178, %179 : vector<4x96xf32>
    %181 = vector.extract_strided_slice %180 {offsets = [0, 0], sizes = [4, 32], strides = [1, 1]} : vector<4x96xf32> to vector<4x32xf32>
    %182 = vector.extract_strided_slice %180 {offsets = [0, 32], sizes = [4, 32], strides = [1, 1]} : vector<4x96xf32> to vector<4x32xf32>
    %183 = vector.extract_strided_slice %180 {offsets = [0, 64], sizes = [4, 32], strides = [1, 1]} : vector<4x96xf32> to vector<4x32xf32>
    %184 = vector.extract_strided_slice %174 {offsets = [0, 96], sizes = [4, 32], strides = [1, 1]} : vector<4x128xf32> to vector<4x32xf32>
    %185 = math.tanh %184 : vector<4x32xf32>
    %186 = arith.mulf %182, %165 : vector<4x32xf32>
    %187 = arith.mulf %181, %185 : vector<4x32xf32>
    %188 = arith.addf %186, %187 : vector<4x32xf32>
    %189 = math.tanh %188 : vector<4x32xf32>
    %190 = arith.mulf %183, %189 : vector<4x32xf32>
    %191 = vector.extract_strided_slice %1 {offsets = [28, 0], sizes = [4, 1], strides = [1, 1]} : vector<32x1xf32> to vector<4x1xf32>
    %192 = vector.broadcast %191 : vector<4x1xf32> to vector<4x32xf32>
    %193 = arith.mulf %190, %192 : vector<4x32xf32>
    %194 = arith.addf %171, %193 : vector<4x32xf32>
    %195 = tpu.concatenate %32, %55, %78, %101, %124, %147, %170, %193 in 0 : vector<4x32xf32>, vector<4x32xf32>, vector<4x32xf32>, vector<4x32xf32>, vector<4x32xf32>, vector<4x32xf32>, vector<4x32xf32>, vector<4x32xf32> -> vector<32x32xf32>
    %c0_28 = arith.constant 0 : index
    %c0_29 = arith.constant 0 : index
    %196 = vector.load %arg3[%c0_28, %c0_29] : memref<4x1xf32, #tpu.memory_space<vmem>>, vector<4x1xf32>
    %197 = vector.broadcast %196 : vector<4x1xf32> to vector<4x32xf32>
    %198 = arith.mulf %194, %197 : vector<4x32xf32>
    %c0_30 = arith.constant 0 : index
    %c0_31 = arith.constant 0 : index
    %199 = vector.load %arg4[%c0_30, %c0_31] : memref<48x32xf32, #tpu.memory_space<vmem>>, vector<48x32xf32>
    %c0_32 = arith.constant 0 : index
    %c0_33 = arith.constant 0 : index
    %200 = vector.load %arg5[%c0_32, %c0_33] : memref<48x1xf32, #tpu.memory_space<vmem>>, vector<48x1xf32>
    %c0_34 = arith.constant 0 : index
    %c0_35 = arith.constant 0 : index
    %201 = vector.load %arg10[%c0_34, %c0_35] : memref<32x128xf32, #tpu.memory_space<vmem>>, vector<32x128xf32>
    %c0_36 = arith.constant 0 : index
    %c0_37 = arith.constant 0 : index
    %202 = vector.load %arg11[%c0_36, %c0_37] : memref<32x128xf32, #tpu.memory_space<vmem>>, vector<32x128xf32>
    %c0_38 = arith.constant 0 : index
    %c0_39 = arith.constant 0 : index
    %203 = vector.load %arg12[%c0_38, %c0_39] : memref<1x128xf32, #tpu.memory_space<vmem>>, vector<1x128xf32>
    %cst_40 = arith.constant dense<0.000000e+00> : vector<48x128xf32>
    %204 = tpu.matmul %199, %201, %cst_40 {dimension_numbers = #tpu.dot_dimension_numbers<[1], [0], [0], [1], [0, 0, 1, 1], [], []>} : vector<48x32xf32>, vector<32x128xf32>, vector<48x128xf32> -> vector<48x128xf32>
    %205 = vector.broadcast %203 : vector<1x128xf32> to vector<48x128xf32>
    %206 = arith.addf %204, %205 : vector<48x128xf32>
    %cst_41 = arith.constant 0.000000e+00 : f32
    %207 = vector.broadcast %cst_41 : f32 to vector<12x32xf32>
    %cst_42 = arith.constant 0.000000e+00 : f32
    %208 = vector.broadcast %cst_42 : f32 to vector<12x32xf32>
    %cst_43 = arith.constant 0.000000e+00 : f32
    %209 = vector.broadcast %cst_43 : f32 to vector<12x32xf32>
    %210 = vector.extract_strided_slice %206 {offsets = [0, 0], sizes = [12, 128], strides = [1, 1]} : vector<48x128xf32> to vector<12x128xf32>
    %cst_44 = arith.constant dense<0.000000e+00> : vector<12x128xf32>
    %211 = tpu.matmul %207, %202, %cst_44 {dimension_numbers = #tpu.dot_dimension_numbers<[1], [0], [0], [1], [0, 0, 1, 1], [], []>} : vector<12x32xf32>, vector<32x128xf32>, vector<12x128xf32> -> vector<12x128xf32>
    %212 = arith.addf %210, %211 : vector<12x128xf32>
    %213 = vector.extract_strided_slice %212 {offsets = [0, 0], sizes = [12, 96], strides = [1, 1]} : vector<12x128xf32> to vector<12x96xf32>
    %214 = arith.negf %213 : vector<12x96xf32>
    %215 = math.exp %214 : vector<12x96xf32>
    %cst_45 = arith.constant 1.000000e+00 : f32
    %216 = vector.broadcast %cst_45 : f32 to vector<12x96xf32>
    %217 = arith.addf %216, %215 : vector<12x96xf32>
    %218 = arith.divf %216, %217 : vector<12x96xf32>
    %219 = vector.extract_strided_slice %218 {offsets = [0, 0], sizes = [12, 32], strides = [1, 1]} : vector<12x96xf32> to vector<12x32xf32>
    %220 = vector.extract_strided_slice %218 {offsets = [0, 32], sizes = [12, 32], strides = [1, 1]} : vector<12x96xf32> to vector<12x32xf32>
    %221 = vector.extract_strided_slice %218 {offsets = [0, 64], sizes = [12, 32], strides = [1, 1]} : vector<12x96xf32> to vector<12x32xf32>
    %222 = vector.extract_strided_slice %212 {offsets = [0, 96], sizes = [12, 32], strides = [1, 1]} : vector<12x128xf32> to vector<12x32xf32>
    %223 = math.tanh %222 : vector<12x32xf32>
    %224 = arith.mulf %220, %208 : vector<12x32xf32>
    %225 = arith.mulf %219, %223 : vector<12x32xf32>
    %226 = arith.addf %224, %225 : vector<12x32xf32>
    %227 = math.tanh %226 : vector<12x32xf32>
    %228 = arith.mulf %221, %227 : vector<12x32xf32>
    %229 = vector.extract_strided_slice %200 {offsets = [0, 0], sizes = [12, 1], strides = [1, 1]} : vector<48x1xf32> to vector<12x1xf32>
    %230 = vector.broadcast %229 : vector<12x1xf32> to vector<12x32xf32>
    %231 = arith.mulf %228, %230 : vector<12x32xf32>
    %232 = arith.addf %209, %231 : vector<12x32xf32>
    %233 = vector.extract_strided_slice %206 {offsets = [12, 0], sizes = [12, 128], strides = [1, 1]} : vector<48x128xf32> to vector<12x128xf32>
    %cst_46 = arith.constant dense<0.000000e+00> : vector<12x128xf32>
    %234 = tpu.matmul %228, %202, %cst_46 {dimension_numbers = #tpu.dot_dimension_numbers<[1], [0], [0], [1], [0, 0, 1, 1], [], []>} : vector<12x32xf32>, vector<32x128xf32>, vector<12x128xf32> -> vector<12x128xf32>
    %235 = arith.addf %233, %234 : vector<12x128xf32>
    %236 = vector.extract_strided_slice %235 {offsets = [0, 0], sizes = [12, 96], strides = [1, 1]} : vector<12x128xf32> to vector<12x96xf32>
    %237 = arith.negf %236 : vector<12x96xf32>
    %238 = math.exp %237 : vector<12x96xf32>
    %cst_47 = arith.constant 1.000000e+00 : f32
    %239 = vector.broadcast %cst_47 : f32 to vector<12x96xf32>
    %240 = arith.addf %239, %238 : vector<12x96xf32>
    %241 = arith.divf %239, %240 : vector<12x96xf32>
    %242 = vector.extract_strided_slice %241 {offsets = [0, 0], sizes = [12, 32], strides = [1, 1]} : vector<12x96xf32> to vector<12x32xf32>
    %243 = vector.extract_strided_slice %241 {offsets = [0, 32], sizes = [12, 32], strides = [1, 1]} : vector<12x96xf32> to vector<12x32xf32>
    %244 = vector.extract_strided_slice %241 {offsets = [0, 64], sizes = [12, 32], strides = [1, 1]} : vector<12x96xf32> to vector<12x32xf32>
    %245 = vector.extract_strided_slice %235 {offsets = [0, 96], sizes = [12, 32], strides = [1, 1]} : vector<12x128xf32> to vector<12x32xf32>
    %246 = math.tanh %245 : vector<12x32xf32>
    %247 = arith.mulf %243, %226 : vector<12x32xf32>
    %248 = arith.mulf %242, %246 : vector<12x32xf32>
    %249 = arith.addf %247, %248 : vector<12x32xf32>
    %250 = math.tanh %249 : vector<12x32xf32>
    %251 = arith.mulf %244, %250 : vector<12x32xf32>
    %252 = vector.extract_strided_slice %200 {offsets = [12, 0], sizes = [12, 1], strides = [1, 1]} : vector<48x1xf32> to vector<12x1xf32>
    %253 = vector.broadcast %252 : vector<12x1xf32> to vector<12x32xf32>
    %254 = arith.mulf %251, %253 : vector<12x32xf32>
    %255 = arith.addf %232, %254 : vector<12x32xf32>
    %256 = vector.extract_strided_slice %206 {offsets = [24, 0], sizes = [12, 128], strides = [1, 1]} : vector<48x128xf32> to vector<12x128xf32>
    %cst_48 = arith.constant dense<0.000000e+00> : vector<12x128xf32>
    %257 = tpu.matmul %251, %202, %cst_48 {dimension_numbers = #tpu.dot_dimension_numbers<[1], [0], [0], [1], [0, 0, 1, 1], [], []>} : vector<12x32xf32>, vector<32x128xf32>, vector<12x128xf32> -> vector<12x128xf32>
    %258 = arith.addf %256, %257 : vector<12x128xf32>
    %259 = vector.extract_strided_slice %258 {offsets = [0, 0], sizes = [12, 96], strides = [1, 1]} : vector<12x128xf32> to vector<12x96xf32>
    %260 = arith.negf %259 : vector<12x96xf32>
    %261 = math.exp %260 : vector<12x96xf32>
    %cst_49 = arith.constant 1.000000e+00 : f32
    %262 = vector.broadcast %cst_49 : f32 to vector<12x96xf32>
    %263 = arith.addf %262, %261 : vector<12x96xf32>
    %264 = arith.divf %262, %263 : vector<12x96xf32>
    %265 = vector.extract_strided_slice %264 {offsets = [0, 0], sizes = [12, 32], strides = [1, 1]} : vector<12x96xf32> to vector<12x32xf32>
    %266 = vector.extract_strided_slice %264 {offsets = [0, 32], sizes = [12, 32], strides = [1, 1]} : vector<12x96xf32> to vector<12x32xf32>
    %267 = vector.extract_strided_slice %264 {offsets = [0, 64], sizes = [12, 32], strides = [1, 1]} : vector<12x96xf32> to vector<12x32xf32>
    %268 = vector.extract_strided_slice %258 {offsets = [0, 96], sizes = [12, 32], strides = [1, 1]} : vector<12x128xf32> to vector<12x32xf32>
    %269 = math.tanh %268 : vector<12x32xf32>
    %270 = arith.mulf %266, %249 : vector<12x32xf32>
    %271 = arith.mulf %265, %269 : vector<12x32xf32>
    %272 = arith.addf %270, %271 : vector<12x32xf32>
    %273 = math.tanh %272 : vector<12x32xf32>
    %274 = arith.mulf %267, %273 : vector<12x32xf32>
    %275 = vector.extract_strided_slice %200 {offsets = [24, 0], sizes = [12, 1], strides = [1, 1]} : vector<48x1xf32> to vector<12x1xf32>
    %276 = vector.broadcast %275 : vector<12x1xf32> to vector<12x32xf32>
    %277 = arith.mulf %274, %276 : vector<12x32xf32>
    %278 = arith.addf %255, %277 : vector<12x32xf32>
    %279 = vector.extract_strided_slice %206 {offsets = [36, 0], sizes = [12, 128], strides = [1, 1]} : vector<48x128xf32> to vector<12x128xf32>
    %cst_50 = arith.constant dense<0.000000e+00> : vector<12x128xf32>
    %280 = tpu.matmul %274, %202, %cst_50 {dimension_numbers = #tpu.dot_dimension_numbers<[1], [0], [0], [1], [0, 0, 1, 1], [], []>} : vector<12x32xf32>, vector<32x128xf32>, vector<12x128xf32> -> vector<12x128xf32>
    %281 = arith.addf %279, %280 : vector<12x128xf32>
    %282 = vector.extract_strided_slice %281 {offsets = [0, 0], sizes = [12, 96], strides = [1, 1]} : vector<12x128xf32> to vector<12x96xf32>
    %283 = arith.negf %282 : vector<12x96xf32>
    %284 = math.exp %283 : vector<12x96xf32>
    %cst_51 = arith.constant 1.000000e+00 : f32
    %285 = vector.broadcast %cst_51 : f32 to vector<12x96xf32>
    %286 = arith.addf %285, %284 : vector<12x96xf32>
    %287 = arith.divf %285, %286 : vector<12x96xf32>
    %288 = vector.extract_strided_slice %287 {offsets = [0, 0], sizes = [12, 32], strides = [1, 1]} : vector<12x96xf32> to vector<12x32xf32>
    %289 = vector.extract_strided_slice %287 {offsets = [0, 32], sizes = [12, 32], strides = [1, 1]} : vector<12x96xf32> to vector<12x32xf32>
    %290 = vector.extract_strided_slice %287 {offsets = [0, 64], sizes = [12, 32], strides = [1, 1]} : vector<12x96xf32> to vector<12x32xf32>
    %291 = vector.extract_strided_slice %281 {offsets = [0, 96], sizes = [12, 32], strides = [1, 1]} : vector<12x128xf32> to vector<12x32xf32>
    %292 = math.tanh %291 : vector<12x32xf32>
    %293 = arith.mulf %289, %272 : vector<12x32xf32>
    %294 = arith.mulf %288, %292 : vector<12x32xf32>
    %295 = arith.addf %293, %294 : vector<12x32xf32>
    %296 = math.tanh %295 : vector<12x32xf32>
    %297 = arith.mulf %290, %296 : vector<12x32xf32>
    %298 = vector.extract_strided_slice %200 {offsets = [36, 0], sizes = [12, 1], strides = [1, 1]} : vector<48x1xf32> to vector<12x1xf32>
    %299 = vector.broadcast %298 : vector<12x1xf32> to vector<12x32xf32>
    %300 = arith.mulf %297, %299 : vector<12x32xf32>
    %301 = arith.addf %278, %300 : vector<12x32xf32>
    %302 = tpu.concatenate %231, %254, %277, %300 in 0 : vector<12x32xf32>, vector<12x32xf32>, vector<12x32xf32>, vector<12x32xf32> -> vector<48x32xf32>
    %c0_52 = arith.constant 0 : index
    %c0_53 = arith.constant 0 : index
    %303 = vector.load %arg6[%c0_52, %c0_53] : memref<12x1xf32, #tpu.memory_space<vmem>>, vector<12x1xf32>
    %304 = vector.broadcast %303 : vector<12x1xf32> to vector<12x32xf32>
    %305 = arith.mulf %301, %304 : vector<12x32xf32>
    %c0_54 = arith.constant 0 : index
    %c0_55 = arith.constant 0 : index
    %306 = vector.load %arg13[%c0_54, %c0_55] : memref<32x32xf32, #tpu.memory_space<vmem>>, vector<32x32xf32>
    %cst_56 = arith.constant dense<0.000000e+00> : vector<48x32xf32>
    %307 = tpu.matmul %302, %306, %cst_56 {dimension_numbers = #tpu.dot_dimension_numbers<[1], [0], [0], [1], [0, 0, 1, 1], [], []>} : vector<48x32xf32>, vector<32x32xf32>, vector<48x32xf32> -> vector<48x32xf32>
    %c0_57 = arith.constant 0 : index
    %c0_58 = arith.constant 0 : index
    %308 = vector.load %arg14[%c0_57, %c0_58] : memref<1x32xf32, #tpu.memory_space<vmem>>, vector<1x32xf32>
    %309 = vector.broadcast %308 : vector<1x32xf32> to vector<48x32xf32>
    %310 = arith.addf %307, %309 : vector<48x32xf32>
    %c0_59 = arith.constant 0 : index
    %c0_60 = arith.constant 0 : index
    %311 = vector.load %arg15[%c0_59, %c0_60] : memref<32x32xf32, #tpu.memory_space<vmem>>, vector<32x32xf32>
    %cst_61 = arith.constant dense<0.000000e+00> : vector<4x32xf32>
    %312 = tpu.matmul %198, %311, %cst_61 {dimension_numbers = #tpu.dot_dimension_numbers<[1], [0], [0], [1], [0, 0, 1, 1], [], []>} : vector<4x32xf32>, vector<32x32xf32>, vector<4x32xf32> -> vector<4x32xf32>
    %c0_62 = arith.constant 0 : index
    %c0_63 = arith.constant 0 : index
    %313 = vector.load %arg16[%c0_62, %c0_63] : memref<1x32xf32, #tpu.memory_space<vmem>>, vector<1x32xf32>
    %314 = vector.broadcast %313 : vector<1x32xf32> to vector<4x32xf32>
    %315 = arith.addf %312, %314 : vector<4x32xf32>
    %c0_64 = arith.constant 0 : index
    %c0_65 = arith.constant 0 : index
    %316 = vector.load %arg17[%c0_64, %c0_65] : memref<32x32xf32, #tpu.memory_space<vmem>>, vector<32x32xf32>
    %cst_66 = arith.constant dense<0.000000e+00> : vector<4x32xf32>
    %317 = tpu.matmul %315, %316, %cst_66 {dimension_numbers = #tpu.dot_dimension_numbers<[1], [0], [0], [1], [0, 0, 1, 1], [], []>} : vector<4x32xf32>, vector<32x32xf32>, vector<4x32xf32> -> vector<4x32xf32>
    %318 = tpu.concatenate %317, %317, %317 in 0 : vector<4x32xf32>, vector<4x32xf32>, vector<4x32xf32> -> vector<12x32xf32>
    %319 = vector.extract_strided_slice %310 {offsets = [0, 0], sizes = [12, 32], strides = [1, 1]} : vector<48x32xf32> to vector<12x32xf32>
    %320 = arith.mulf %318, %319 : vector<12x32xf32>
    %cst_67 = arith.constant dense<0.000000e+00> : vector<12xf32>
    %321 = vector.multi_reduction <add>, %320, %cst_67 [1] : vector<12x32xf32> to vector<12xf32>
    %322 = vector.shape_cast %321 : vector<12xf32> to vector<12x1xf32>
    %323 = vector.extract_strided_slice %310 {offsets = [12, 0], sizes = [12, 32], strides = [1, 1]} : vector<48x32xf32> to vector<12x32xf32>
    %324 = arith.mulf %318, %323 : vector<12x32xf32>
    %cst_68 = arith.constant dense<0.000000e+00> : vector<12xf32>
    %325 = vector.multi_reduction <add>, %324, %cst_68 [1] : vector<12x32xf32> to vector<12xf32>
    %326 = vector.shape_cast %325 : vector<12xf32> to vector<12x1xf32>
    %327 = vector.extract_strided_slice %310 {offsets = [24, 0], sizes = [12, 32], strides = [1, 1]} : vector<48x32xf32> to vector<12x32xf32>
    %328 = arith.mulf %318, %327 : vector<12x32xf32>
    %cst_69 = arith.constant dense<0.000000e+00> : vector<12xf32>
    %329 = vector.multi_reduction <add>, %328, %cst_69 [1] : vector<12x32xf32> to vector<12xf32>
    %330 = vector.shape_cast %329 : vector<12xf32> to vector<12x1xf32>
    %331 = vector.extract_strided_slice %310 {offsets = [36, 0], sizes = [12, 32], strides = [1, 1]} : vector<48x32xf32> to vector<12x32xf32>
    %332 = arith.mulf %318, %331 : vector<12x32xf32>
    %cst_70 = arith.constant dense<0.000000e+00> : vector<12xf32>
    %333 = vector.multi_reduction <add>, %332, %cst_70 [1] : vector<12x32xf32> to vector<12xf32>
    %334 = vector.shape_cast %333 : vector<12xf32> to vector<12x1xf32>
    %335 = tpu.concatenate %322, %326, %330, %334 in 1 : vector<12x1xf32>, vector<12x1xf32>, vector<12x1xf32>, vector<12x1xf32> -> vector<12x4xf32>
    %cst_71 = arith.constant dense<0xFF800000> : vector<12xf32>
    %336 = vector.multi_reduction <maximumf>, %335, %cst_71 [1] : vector<12x4xf32> to vector<12xf32>
    %cst_72 = arith.constant 0xFF800000 : f32
    %337 = vector.broadcast %cst_72 : f32 to vector<12xf32>
    %338 = arith.maximumf %337, %336 : vector<12xf32>
    %339 = vector.shape_cast %338 : vector<12xf32> to vector<12x1xf32>
    %340 = vector.broadcast %339 : vector<12x1xf32> to vector<12x4xf32>
    %341 = arith.subf %335, %340 : vector<12x4xf32>
    %342 = math.exp %341 : vector<12x4xf32>
    %cst_73 = arith.constant dense<0.000000e+00> : vector<12xf32>
    %343 = vector.multi_reduction <add>, %342, %cst_73 [1] : vector<12x4xf32> to vector<12xf32>
    %344 = vector.shape_cast %343 : vector<12xf32> to vector<12x1xf32>
    %345 = vector.broadcast %344 : vector<12x1xf32> to vector<12x4xf32>
    %346 = arith.divf %342, %345 : vector<12x4xf32>
    %cst_74 = arith.constant 0.000000e+00 : f32
    %347 = vector.broadcast %cst_74 : f32 to vector<12x32xf32>
    %348 = vector.extract_strided_slice %346 {offsets = [0, 0], sizes = [12, 1], strides = [1, 1]} : vector<12x4xf32> to vector<12x1xf32>
    %349 = vector.extract_strided_slice %310 {offsets = [0, 0], sizes = [12, 32], strides = [1, 1]} : vector<48x32xf32> to vector<12x32xf32>
    %350 = vector.broadcast %348 : vector<12x1xf32> to vector<12x32xf32>
    %351 = arith.mulf %350, %349 : vector<12x32xf32>
    %352 = arith.addf %347, %351 : vector<12x32xf32>
    %353 = vector.extract_strided_slice %346 {offsets = [0, 1], sizes = [12, 1], strides = [1, 1]} : vector<12x4xf32> to vector<12x1xf32>
    %354 = vector.extract_strided_slice %310 {offsets = [12, 0], sizes = [12, 32], strides = [1, 1]} : vector<48x32xf32> to vector<12x32xf32>
    %355 = vector.broadcast %353 : vector<12x1xf32> to vector<12x32xf32>
    %356 = arith.mulf %355, %354 : vector<12x32xf32>
    %357 = arith.addf %352, %356 : vector<12x32xf32>
    %358 = vector.extract_strided_slice %346 {offsets = [0, 2], sizes = [12, 1], strides = [1, 1]} : vector<12x4xf32> to vector<12x1xf32>
    %359 = vector.extract_strided_slice %310 {offsets = [24, 0], sizes = [12, 32], strides = [1, 1]} : vector<48x32xf32> to vector<12x32xf32>
    %360 = vector.broadcast %358 : vector<12x1xf32> to vector<12x32xf32>
    %361 = arith.mulf %360, %359 : vector<12x32xf32>
    %362 = arith.addf %357, %361 : vector<12x32xf32>
    %363 = vector.extract_strided_slice %346 {offsets = [0, 3], sizes = [12, 1], strides = [1, 1]} : vector<12x4xf32> to vector<12x1xf32>
    %364 = vector.extract_strided_slice %310 {offsets = [36, 0], sizes = [12, 32], strides = [1, 1]} : vector<48x32xf32> to vector<12x32xf32>
    %365 = vector.broadcast %363 : vector<12x1xf32> to vector<12x32xf32>
    %366 = arith.mulf %365, %364 : vector<12x32xf32>
    %367 = arith.addf %362, %366 : vector<12x32xf32>
    %c0_75 = arith.constant 0 : index
    %c0_76 = arith.constant 0 : index
    %368 = vector.load %arg18[%c0_75, %c0_76] : memref<32x32xf32, #tpu.memory_space<vmem>>, vector<32x32xf32>
    %cst_77 = arith.constant dense<0.000000e+00> : vector<12x32xf32>
    %369 = tpu.matmul %367, %368, %cst_77 {dimension_numbers = #tpu.dot_dimension_numbers<[1], [0], [0], [1], [0, 0, 1, 1], [], []>} : vector<12x32xf32>, vector<32x32xf32>, vector<12x32xf32> -> vector<12x32xf32>
    %c0_78 = arith.constant 0 : index
    %c0_79 = arith.constant 0 : index
    %370 = vector.load %arg19[%c0_78, %c0_79] : memref<1x32xf32, #tpu.memory_space<vmem>>, vector<1x32xf32>
    %371 = vector.broadcast %370 : vector<1x32xf32> to vector<12x32xf32>
    %372 = arith.addf %369, %371 : vector<12x32xf32>
    %c0_80 = arith.constant 0 : index
    %c0_81 = arith.constant 0 : index
    %373 = vector.load %arg20[%c0_80, %c0_81] : memref<32x32xf32, #tpu.memory_space<vmem>>, vector<32x32xf32>
    %cst_82 = arith.constant dense<0.000000e+00> : vector<32x32xf32>
    %374 = tpu.matmul %195, %373, %cst_82 {dimension_numbers = #tpu.dot_dimension_numbers<[1], [0], [0], [1], [0, 0, 1, 1], [], []>} : vector<32x32xf32>, vector<32x32xf32>, vector<32x32xf32> -> vector<32x32xf32>
    %c0_83 = arith.constant 0 : index
    %c0_84 = arith.constant 0 : index
    %375 = vector.load %arg21[%c0_83, %c0_84] : memref<1x32xf32, #tpu.memory_space<vmem>>, vector<1x32xf32>
    %376 = vector.broadcast %375 : vector<1x32xf32> to vector<32x32xf32>
    %377 = arith.addf %374, %376 : vector<32x32xf32>
    %c0_85 = arith.constant 0 : index
    %c0_86 = arith.constant 0 : index
    %378 = vector.load %arg22[%c0_85, %c0_86] : memref<32x32xf32, #tpu.memory_space<vmem>>, vector<32x32xf32>
    %cst_87 = arith.constant dense<0.000000e+00> : vector<12x32xf32>
    %379 = tpu.matmul %305, %378, %cst_87 {dimension_numbers = #tpu.dot_dimension_numbers<[1], [0], [0], [1], [0, 0, 1, 1], [], []>} : vector<12x32xf32>, vector<32x32xf32>, vector<12x32xf32> -> vector<12x32xf32>
    %c0_88 = arith.constant 0 : index
    %c0_89 = arith.constant 0 : index
    %380 = vector.load %arg23[%c0_88, %c0_89] : memref<1x32xf32, #tpu.memory_space<vmem>>, vector<1x32xf32>
    %381 = vector.broadcast %380 : vector<1x32xf32> to vector<12x32xf32>
    %382 = arith.addf %379, %381 : vector<12x32xf32>
    %c0_90 = arith.constant 0 : index
    %c0_91 = arith.constant 0 : index
    %383 = vector.load %arg24[%c0_90, %c0_91] : memref<32x32xf32, #tpu.memory_space<vmem>>, vector<32x32xf32>
    %cst_92 = arith.constant dense<0.000000e+00> : vector<12x32xf32>
    %384 = tpu.matmul %382, %383, %cst_92 {dimension_numbers = #tpu.dot_dimension_numbers<[1], [0], [0], [1], [0, 0, 1, 1], [], []>} : vector<12x32xf32>, vector<32x32xf32>, vector<12x32xf32> -> vector<12x32xf32>
    %385 = vector.extract_strided_slice %377 {offsets = [0, 0], sizes = [4, 32], strides = [1, 1]} : vector<32x32xf32> to vector<4x32xf32>
    %386 = tpu.concatenate %385, %385, %385 in 0 : vector<4x32xf32>, vector<4x32xf32>, vector<4x32xf32> -> vector<12x32xf32>
    %387 = arith.mulf %384, %386 : vector<12x32xf32>
    %cst_93 = arith.constant dense<0.000000e+00> : vector<12xf32>
    %388 = vector.multi_reduction <add>, %387, %cst_93 [1] : vector<12x32xf32> to vector<12xf32>
    %389 = vector.shape_cast %388 : vector<12xf32> to vector<12x1xf32>
    %390 = vector.extract_strided_slice %377 {offsets = [4, 0], sizes = [4, 32], strides = [1, 1]} : vector<32x32xf32> to vector<4x32xf32>
    %391 = tpu.concatenate %390, %390, %390 in 0 : vector<4x32xf32>, vector<4x32xf32>, vector<4x32xf32> -> vector<12x32xf32>
    %392 = arith.mulf %384, %391 : vector<12x32xf32>
    %cst_94 = arith.constant dense<0.000000e+00> : vector<12xf32>
    %393 = vector.multi_reduction <add>, %392, %cst_94 [1] : vector<12x32xf32> to vector<12xf32>
    %394 = vector.shape_cast %393 : vector<12xf32> to vector<12x1xf32>
    %395 = vector.extract_strided_slice %377 {offsets = [8, 0], sizes = [4, 32], strides = [1, 1]} : vector<32x32xf32> to vector<4x32xf32>
    %396 = tpu.concatenate %395, %395, %395 in 0 : vector<4x32xf32>, vector<4x32xf32>, vector<4x32xf32> -> vector<12x32xf32>
    %397 = arith.mulf %384, %396 : vector<12x32xf32>
    %cst_95 = arith.constant dense<0.000000e+00> : vector<12xf32>
    %398 = vector.multi_reduction <add>, %397, %cst_95 [1] : vector<12x32xf32> to vector<12xf32>
    %399 = vector.shape_cast %398 : vector<12xf32> to vector<12x1xf32>
    %400 = vector.extract_strided_slice %377 {offsets = [12, 0], sizes = [4, 32], strides = [1, 1]} : vector<32x32xf32> to vector<4x32xf32>
    %401 = tpu.concatenate %400, %400, %400 in 0 : vector<4x32xf32>, vector<4x32xf32>, vector<4x32xf32> -> vector<12x32xf32>
    %402 = arith.mulf %384, %401 : vector<12x32xf32>
    %cst_96 = arith.constant dense<0.000000e+00> : vector<12xf32>
    %403 = vector.multi_reduction <add>, %402, %cst_96 [1] : vector<12x32xf32> to vector<12xf32>
    %404 = vector.shape_cast %403 : vector<12xf32> to vector<12x1xf32>
    %405 = vector.extract_strided_slice %377 {offsets = [16, 0], sizes = [4, 32], strides = [1, 1]} : vector<32x32xf32> to vector<4x32xf32>
    %406 = tpu.concatenate %405, %405, %405 in 0 : vector<4x32xf32>, vector<4x32xf32>, vector<4x32xf32> -> vector<12x32xf32>
    %407 = arith.mulf %384, %406 : vector<12x32xf32>
    %cst_97 = arith.constant dense<0.000000e+00> : vector<12xf32>
    %408 = vector.multi_reduction <add>, %407, %cst_97 [1] : vector<12x32xf32> to vector<12xf32>
    %409 = vector.shape_cast %408 : vector<12xf32> to vector<12x1xf32>
    %410 = vector.extract_strided_slice %377 {offsets = [20, 0], sizes = [4, 32], strides = [1, 1]} : vector<32x32xf32> to vector<4x32xf32>
    %411 = tpu.concatenate %410, %410, %410 in 0 : vector<4x32xf32>, vector<4x32xf32>, vector<4x32xf32> -> vector<12x32xf32>
    %412 = arith.mulf %384, %411 : vector<12x32xf32>
    %cst_98 = arith.constant dense<0.000000e+00> : vector<12xf32>
    %413 = vector.multi_reduction <add>, %412, %cst_98 [1] : vector<12x32xf32> to vector<12xf32>
    %414 = vector.shape_cast %413 : vector<12xf32> to vector<12x1xf32>
    %415 = vector.extract_strided_slice %377 {offsets = [24, 0], sizes = [4, 32], strides = [1, 1]} : vector<32x32xf32> to vector<4x32xf32>
    %416 = tpu.concatenate %415, %415, %415 in 0 : vector<4x32xf32>, vector<4x32xf32>, vector<4x32xf32> -> vector<12x32xf32>
    %417 = arith.mulf %384, %416 : vector<12x32xf32>
    %cst_99 = arith.constant dense<0.000000e+00> : vector<12xf32>
    %418 = vector.multi_reduction <add>, %417, %cst_99 [1] : vector<12x32xf32> to vector<12xf32>
    %419 = vector.shape_cast %418 : vector<12xf32> to vector<12x1xf32>
    %420 = vector.extract_strided_slice %377 {offsets = [28, 0], sizes = [4, 32], strides = [1, 1]} : vector<32x32xf32> to vector<4x32xf32>
    %421 = tpu.concatenate %420, %420, %420 in 0 : vector<4x32xf32>, vector<4x32xf32>, vector<4x32xf32> -> vector<12x32xf32>
    %422 = arith.mulf %384, %421 : vector<12x32xf32>
    %cst_100 = arith.constant dense<0.000000e+00> : vector<12xf32>
    %423 = vector.multi_reduction <add>, %422, %cst_100 [1] : vector<12x32xf32> to vector<12xf32>
    %424 = vector.shape_cast %423 : vector<12xf32> to vector<12x1xf32>
    %425 = tpu.concatenate %389, %394, %399, %404, %409, %414, %419, %424 in 1 : vector<12x1xf32>, vector<12x1xf32>, vector<12x1xf32>, vector<12x1xf32>, vector<12x1xf32>, vector<12x1xf32>, vector<12x1xf32>, vector<12x1xf32> -> vector<12x8xf32>
    %cst_101 = arith.constant dense<0xFF800000> : vector<12xf32>
    %426 = vector.multi_reduction <maximumf>, %425, %cst_101 [1] : vector<12x8xf32> to vector<12xf32>
    %cst_102 = arith.constant 0xFF800000 : f32
    %427 = vector.broadcast %cst_102 : f32 to vector<12xf32>
    %428 = arith.maximumf %427, %426 : vector<12xf32>
    %429 = vector.shape_cast %428 : vector<12xf32> to vector<12x1xf32>
    %430 = vector.broadcast %429 : vector<12x1xf32> to vector<12x8xf32>
    %431 = arith.subf %425, %430 : vector<12x8xf32>
    %432 = math.exp %431 : vector<12x8xf32>
    %cst_103 = arith.constant dense<0.000000e+00> : vector<12xf32>
    %433 = vector.multi_reduction <add>, %432, %cst_103 [1] : vector<12x8xf32> to vector<12xf32>
    %434 = vector.shape_cast %433 : vector<12xf32> to vector<12x1xf32>
    %435 = vector.broadcast %434 : vector<12x1xf32> to vector<12x8xf32>
    %436 = arith.divf %432, %435 : vector<12x8xf32>
    %cst_104 = arith.constant 0.000000e+00 : f32
    %437 = vector.broadcast %cst_104 : f32 to vector<12x32xf32>
    %438 = vector.extract_strided_slice %436 {offsets = [0, 0], sizes = [12, 1], strides = [1, 1]} : vector<12x8xf32> to vector<12x1xf32>
    %439 = vector.broadcast %438 : vector<12x1xf32> to vector<12x32xf32>
    %440 = arith.mulf %439, %386 : vector<12x32xf32>
    %441 = arith.addf %437, %440 : vector<12x32xf32>
    %442 = vector.extract_strided_slice %436 {offsets = [0, 1], sizes = [12, 1], strides = [1, 1]} : vector<12x8xf32> to vector<12x1xf32>
    %443 = vector.broadcast %442 : vector<12x1xf32> to vector<12x32xf32>
    %444 = arith.mulf %443, %391 : vector<12x32xf32>
    %445 = arith.addf %441, %444 : vector<12x32xf32>
    %446 = vector.extract_strided_slice %436 {offsets = [0, 2], sizes = [12, 1], strides = [1, 1]} : vector<12x8xf32> to vector<12x1xf32>
    %447 = vector.broadcast %446 : vector<12x1xf32> to vector<12x32xf32>
    %448 = arith.mulf %447, %396 : vector<12x32xf32>
    %449 = arith.addf %445, %448 : vector<12x32xf32>
    %450 = vector.extract_strided_slice %436 {offsets = [0, 3], sizes = [12, 1], strides = [1, 1]} : vector<12x8xf32> to vector<12x1xf32>
    %451 = vector.broadcast %450 : vector<12x1xf32> to vector<12x32xf32>
    %452 = arith.mulf %451, %401 : vector<12x32xf32>
    %453 = arith.addf %449, %452 : vector<12x32xf32>
    %454 = vector.extract_strided_slice %436 {offsets = [0, 4], sizes = [12, 1], strides = [1, 1]} : vector<12x8xf32> to vector<12x1xf32>
    %455 = vector.broadcast %454 : vector<12x1xf32> to vector<12x32xf32>
    %456 = arith.mulf %455, %406 : vector<12x32xf32>
    %457 = arith.addf %453, %456 : vector<12x32xf32>
    %458 = vector.extract_strided_slice %436 {offsets = [0, 5], sizes = [12, 1], strides = [1, 1]} : vector<12x8xf32> to vector<12x1xf32>
    %459 = vector.broadcast %458 : vector<12x1xf32> to vector<12x32xf32>
    %460 = arith.mulf %459, %411 : vector<12x32xf32>
    %461 = arith.addf %457, %460 : vector<12x32xf32>
    %462 = vector.extract_strided_slice %436 {offsets = [0, 6], sizes = [12, 1], strides = [1, 1]} : vector<12x8xf32> to vector<12x1xf32>
    %463 = vector.broadcast %462 : vector<12x1xf32> to vector<12x32xf32>
    %464 = arith.mulf %463, %416 : vector<12x32xf32>
    %465 = arith.addf %461, %464 : vector<12x32xf32>
    %466 = vector.extract_strided_slice %436 {offsets = [0, 7], sizes = [12, 1], strides = [1, 1]} : vector<12x8xf32> to vector<12x1xf32>
    %467 = vector.broadcast %466 : vector<12x1xf32> to vector<12x32xf32>
    %468 = arith.mulf %467, %421 : vector<12x32xf32>
    %469 = arith.addf %465, %468 : vector<12x32xf32>
    %c0_105 = arith.constant 0 : index
    %c0_106 = arith.constant 0 : index
    %470 = vector.load %arg25[%c0_105, %c0_106] : memref<32x32xf32, #tpu.memory_space<vmem>>, vector<32x32xf32>
    %cst_107 = arith.constant dense<0.000000e+00> : vector<12x32xf32>
    %471 = tpu.matmul %469, %470, %cst_107 {dimension_numbers = #tpu.dot_dimension_numbers<[1], [0], [0], [1], [0, 0, 1, 1], [], []>} : vector<12x32xf32>, vector<32x32xf32>, vector<12x32xf32> -> vector<12x32xf32>
    %c0_108 = arith.constant 0 : index
    %c0_109 = arith.constant 0 : index
    %472 = vector.load %arg26[%c0_108, %c0_109] : memref<1x32xf32, #tpu.memory_space<vmem>>, vector<1x32xf32>
    %473 = vector.broadcast %472 : vector<1x32xf32> to vector<12x32xf32>
    %474 = arith.addf %471, %473 : vector<12x32xf32>
    %475 = vector.extract_strided_slice %372 {offsets = [0, 0], sizes = [4, 32], strides = [1, 1]} : vector<12x32xf32> to vector<4x32xf32>
    %476 = vector.extract_strided_slice %474 {offsets = [0, 0], sizes = [4, 32], strides = [1, 1]} : vector<12x32xf32> to vector<4x32xf32>
    %477 = tpu.concatenate %475, %476 in 1 : vector<4x32xf32>, vector<4x32xf32> -> vector<4x64xf32>
    %478 = vector.extract_strided_slice %372 {offsets = [4, 0], sizes = [4, 32], strides = [1, 1]} : vector<12x32xf32> to vector<4x32xf32>
    %479 = vector.extract_strided_slice %474 {offsets = [4, 0], sizes = [4, 32], strides = [1, 1]} : vector<12x32xf32> to vector<4x32xf32>
    %480 = tpu.concatenate %478, %479 in 1 : vector<4x32xf32>, vector<4x32xf32> -> vector<4x64xf32>
    %481 = vector.extract_strided_slice %372 {offsets = [8, 0], sizes = [4, 32], strides = [1, 1]} : vector<12x32xf32> to vector<4x32xf32>
    %482 = vector.extract_strided_slice %474 {offsets = [8, 0], sizes = [4, 32], strides = [1, 1]} : vector<12x32xf32> to vector<4x32xf32>
    %483 = tpu.concatenate %481, %482 in 1 : vector<4x32xf32>, vector<4x32xf32> -> vector<4x64xf32>
    %484 = tpu.concatenate %477, %480, %483 in 1 : vector<4x64xf32>, vector<4x64xf32>, vector<4x64xf32> -> vector<4x192xf32>
    %c0_110 = arith.constant 0 : index
    %c0_111 = arith.constant 0 : index
    %485 = vector.load %arg27[%c0_110, %c0_111] : memref<192x3xf32, #tpu.memory_space<vmem>>, vector<192x3xf32>
    %cst_112 = arith.constant dense<0.000000e+00> : vector<4x3xf32>
    %486 = tpu.matmul %484, %485, %cst_112 {dimension_numbers = #tpu.dot_dimension_numbers<[1], [0], [0], [1], [0, 0, 1, 1], [], []>} : vector<4x192xf32>, vector<192x3xf32>, vector<4x3xf32> -> vector<4x3xf32>
    %c0_113 = arith.constant 0 : index
    %c0_114 = arith.constant 0 : index
    %487 = vector.load %arg28[%c0_113, %c0_114] : memref<1x3xf32, #tpu.memory_space<vmem>>, vector<1x3xf32>
    %488 = vector.broadcast %487 : vector<1x3xf32> to vector<4x3xf32>
    %489 = arith.addf %486, %488 : vector<4x3xf32>
    %c0_115 = arith.constant 0 : index
    %c0_116 = arith.constant 0 : index
    %490 = vector.load %arg29[%c0_115, %c0_116] : memref<4x3xf32, #tpu.memory_space<vmem>>, vector<4x3xf32>
    tpu.vector_store %arg29[%c0_115, %c0_116], %489 {strides = array<i32>} : memref<4x3xf32, #tpu.memory_space<vmem>>, vector<4x3xf32>,
    return
  }
  func.func @transform_0(%arg0: i32) -> (i32, i32) {
    %c0_i32 = arith.constant 0 : i32
    %c0_i32_0 = arith.constant 0 : i32
    %c0_i32_1 = arith.constant 0 : i32
    return %c0_i32, %c0_i32_0 : i32, i32
  }
  func.func @transform_1(%arg0: i32) -> (i32, i32) {
    %c0_i32 = arith.constant 0 : i32
    %c0_i32_0 = arith.constant 0 : i32
    %c0_i32_1 = arith.constant 0 : i32
    return %c0_i32, %c0_i32_0 : i32, i32
  }
  func.func @transform_2(%arg0: i32) -> (i32, i32) {
    %c0_i32 = arith.constant 0 : i32
    %c0_i32_0 = arith.constant 0 : i32
    %c0_i32_1 = arith.constant 0 : i32
    return %c0_i32, %c0_i32_0 : i32, i32
  }
  func.func @transform_3(%arg0: i32) -> (i32, i32) {
    %c0_i32 = arith.constant 0 : i32
    %c0_i32_0 = arith.constant 0 : i32
    %c0_i32_1 = arith.constant 0 : i32
    return %c0_i32, %c0_i32_0 : i32, i32
  }
  func.func @transform_4(%arg0: i32) -> (i32, i32) {
    %c0_i32 = arith.constant 0 : i32
    %c0_i32_0 = arith.constant 0 : i32
    %c0_i32_1 = arith.constant 0 : i32
    return %c0_i32, %c0_i32_0 : i32, i32
  }
  func.func @transform_5(%arg0: i32) -> (i32, i32) {
    %c0_i32 = arith.constant 0 : i32
    %c0_i32_0 = arith.constant 0 : i32
    %c0_i32_1 = arith.constant 0 : i32
    return %c0_i32, %c0_i32_0 : i32, i32
  }
  func.func @transform_6(%arg0: i32) -> (i32, i32) {
    %c0_i32 = arith.constant 0 : i32
    %c0_i32_0 = arith.constant 0 : i32
    %c0_i32_1 = arith.constant 0 : i32
    return %c0_i32, %c0_i32_0 : i32, i32
  }
  func.func @transform_7(%arg0: i32) -> (i32, i32) {
    %c0_i32 = arith.constant 0 : i32
    %c0_i32_0 = arith.constant 0 : i32
    %c0_i32_1 = arith.constant 0 : i32
    return %c0_i32, %c0_i32_0 : i32, i32
  }
  func.func @transform_8(%arg0: i32) -> (i32, i32) {
    %c0_i32 = arith.constant 0 : i32
    %c0_i32_0 = arith.constant 0 : i32
    %c0_i32_1 = arith.constant 0 : i32
    return %c0_i32, %c0_i32_0 : i32, i32
  }
  func.func @transform_9(%arg0: i32) -> (i32, i32) {
    %c0_i32 = arith.constant 0 : i32
    %c0_i32_0 = arith.constant 0 : i32
    %c0_i32_1 = arith.constant 0 : i32
    return %c0_i32, %c0_i32_0 : i32, i32
  }
  func.func @transform_10(%arg0: i32) -> (i32, i32) {
    %c0_i32 = arith.constant 0 : i32
    %c0_i32_0 = arith.constant 0 : i32
    %c0_i32_1 = arith.constant 0 : i32
    return %c0_i32, %c0_i32_0 : i32, i32
  }
  func.func @transform_11(%arg0: i32) -> (i32, i32) {
    %c0_i32 = arith.constant 0 : i32
    %c0_i32_0 = arith.constant 0 : i32
    %c0_i32_1 = arith.constant 0 : i32
    return %c0_i32, %c0_i32_0 : i32, i32
  }
  func.func @transform_12(%arg0: i32) -> (i32, i32) {
    %c0_i32 = arith.constant 0 : i32
    %c0_i32_0 = arith.constant 0 : i32
    %c0_i32_1 = arith.constant 0 : i32
    return %c0_i32, %c0_i32_0 : i32, i32
  }
  func.func @transform_13(%arg0: i32) -> (i32, i32) {
    %c0_i32 = arith.constant 0 : i32
    %c0_i32_0 = arith.constant 0 : i32
    %c0_i32_1 = arith.constant 0 : i32
    return %c0_i32, %c0_i32_0 : i32, i32
  }
  func.func @transform_14(%arg0: i32) -> (i32, i32) {
    %c0_i32 = arith.constant 0 : i32
    %c0_i32_0 = arith.constant 0 : i32
    %c0_i32_1 = arith.constant 0 : i32
    return %c0_i32, %c0_i32_0 : i32, i32
  }
  func.func @transform_15(%arg0: i32) -> (i32, i32) {
    %c0_i32 = arith.constant 0 : i32
    %c0_i32_0 = arith.constant 0 : i32
    %c0_i32_1 = arith.constant 0 : i32
    return %c0_i32, %c0_i32_0 : i32, i32
  }
  func.func @transform_16(%arg0: i32) -> (i32, i32) {
    %c0_i32 = arith.constant 0 : i32
    %c0_i32_0 = arith.constant 0 : i32
    %c0_i32_1 = arith.constant 0 : i32
    return %c0_i32, %c0_i32_0 : i32, i32
  }
  func.func @transform_17(%arg0: i32) -> (i32, i32) {
    %c0_i32 = arith.constant 0 : i32
    %c0_i32_0 = arith.constant 0 : i32
    %c0_i32_1 = arith.constant 0 : i32
    return %c0_i32, %c0_i32_0 : i32, i32
  }
  func.func @transform_18(%arg0: i32) -> (i32, i32) {
    %c0_i32 = arith.constant 0 : i32
    %c0_i32_0 = arith.constant 0 : i32
    %c0_i32_1 = arith.constant 0 : i32
    return %c0_i32, %c0_i32_0 : i32, i32
  }
  func.func @transform_19(%arg0: i32) -> (i32, i32) {
    %c0_i32 = arith.constant 0 : i32
    %c0_i32_0 = arith.constant 0 : i32
    %c0_i32_1 = arith.constant 0 : i32
    return %c0_i32, %c0_i32_0 : i32, i32
  }
  func.func @transform_20(%arg0: i32) -> (i32, i32) {
    %c0_i32 = arith.constant 0 : i32
    %c0_i32_0 = arith.constant 0 : i32
    %c0_i32_1 = arith.constant 0 : i32
    return %c0_i32, %c0_i32_0 : i32, i32
  }
  func.func @transform_21(%arg0: i32) -> (i32, i32) {
    %c0_i32 = arith.constant 0 : i32
    %c0_i32_0 = arith.constant 0 : i32
    %c0_i32_1 = arith.constant 0 : i32
    return %c0_i32, %c0_i32_0 : i32, i32
  }
  func.func @transform_22(%arg0: i32) -> (i32, i32) {
    %c0_i32 = arith.constant 0 : i32
    %c0_i32_0 = arith.constant 0 : i32
    %c0_i32_1 = arith.constant 0 : i32
    return %c0_i32, %c0_i32_0 : i32, i32
  }
  func.func @transform_23(%arg0: i32) -> (i32, i32) {
    %c0_i32 = arith.constant 0 : i32
    %c0_i32_0 = arith.constant 0 : i32
    %c0_i32_1 = arith.constant 0 : i32
    return %c0_i32, %c0_i32_0 : i32, i32
  }
  func.func @transform_24(%arg0: i32) -> (i32, i32) {
    %c0_i32 = arith.constant 0 : i32
    %c0_i32_0 = arith.constant 0 : i32
    %c0_i32_1 = arith.constant 0 : i32
    return %c0_i32, %c0_i32_0 : i32, i32
  }
  func.func @transform_25(%arg0: i32) -> (i32, i32) {
    %c0_i32 = arith.constant 0 : i32
    %c0_i32_0 = arith.constant 0 : i32
    %c0_i32_1 = arith.constant 0 : i32
    return %c0_i32, %c0_i32_0 : i32, i32
  }
  func.func @transform_26(%arg0: i32) -> (i32, i32) {
    %c0_i32 = arith.constant 0 : i32
    %c0_i32_0 = arith.constant 0 : i32
    %c0_i32_1 = arith.constant 0 : i32
    return %c0_i32, %c0_i32_0 : i32, i32
  }
  func.func @transform_27(%arg0: i32) -> (i32, i32) {
    %c0_i32 = arith.constant 0 : i32
    %c0_i32_0 = arith.constant 0 : i32
    %c0_i32_1 = arith.constant 0 : i32
    return %c0_i32, %c0_i32_0 : i32, i32
  }
  func.func @transform_28(%arg0: i32) -> (i32, i32) {
    %c0_i32 = arith.constant 0 : i32
    %c0_i32_0 = arith.constant 0 : i32
    %c0_i32_1 = arith.constant 0 : i32
    return %c0_i32, %c0_i32_0 : i32, i32
  }
}

</mosaic_0001>

<llo_original>
// kernel: forward.1
$region0: #{forward.1}
  #allocation0 [shape = 'u32[]', space=smem, size = 0x4, offset = 0x4, fixed_abs, tag = 'smem constant byte address 0x4 - core index']
  #allocation1 [shape = 'u32[144,128]{1,0:T(1,128)}', space=vmem, size = 0x12000, scoped, tag = 'internal scratch']
  %s0 = inlined_call_operand.vmem [shape: f32[32,32], index: 0, kind: input, shape index: {}]
  %s1 = inlined_call_operand.vmem [shape: f32[32,1], index: 1, kind: input, shape index: {}]
  %s2 = inlined_call_operand.vmem [shape: f32[4,1], index: 2, kind: input, shape index: {}]
  %s3 = inlined_call_operand.vmem [shape: f32[48,32], index: 3, kind: input, shape index: {}]
  %s4 = inlined_call_operand.vmem [shape: f32[48,1], index: 4, kind: input, shape index: {}]
  %s5 = inlined_call_operand.vmem [shape: f32[12,1], index: 5, kind: input, shape index: {}]
  %s6 = inlined_call_operand.vmem [shape: f32[32,128], index: 6, kind: input, shape index: {}]
  %s7 = inlined_call_operand.vmem [shape: f32[32,128], index: 7, kind: input, shape index: {}]
  %s8 = inlined_call_operand.vmem [shape: f32[1,128], index: 8, kind: input, shape index: {}]
  %s9 = inlined_call_operand.vmem [shape: f32[32,128], index: 9, kind: input, shape index: {}]
  %s10 = inlined_call_operand.vmem [shape: f32[32,128], index: 10, kind: input, shape index: {}]
  %s11 = inlined_call_operand.vmem [shape: f32[1,128], index: 11, kind: input, shape index: {}]
  %s12 = inlined_call_operand.vmem [shape: f32[32,32], index: 12, kind: input, shape index: {}]
  %s13 = inlined_call_operand.vmem [shape: f32[1,32], index: 13, kind: input, shape index: {}]
  %s14 = inlined_call_operand.vmem [shape: f32[32,32], index: 14, kind: input, shape index: {}]
  %s15 = inlined_call_operand.vmem [shape: f32[1,32], index: 15, kind: input, shape index: {}]
  %s16 = inlined_call_operand.vmem [shape: f32[32,32], index: 16, kind: input, shape index: {}]
  %s17 = inlined_call_operand.vmem [shape: f32[32,32], index: 17, kind: input, shape index: {}]
  %s18 = inlined_call_operand.vmem [shape: f32[1,32], index: 18, kind: input, shape index: {}]
  %s19 = inlined_call_operand.vmem [shape: f32[32,32], index: 19, kind: input, shape index: {}]
  %s20 = inlined_call_operand.vmem [shape: f32[1,32], index: 20, kind: input, shape index: {}]
  %s21 = inlined_call_operand.vmem [shape: f32[32,32], index: 21, kind: input, shape index: {}]
  %s22 = inlined_call_operand.vmem [shape: f32[1,32], index: 22, kind: input, shape index: {}]
  %s23 = inlined_call_operand.vmem [shape: f32[32,32], index: 23, kind: input, shape index: {}]
  %s24 = inlined_call_operand.vmem [shape: f32[32,32], index: 24, kind: input, shape index: {}]
  %s25 = inlined_call_operand.vmem [shape: f32[1,32], index: 25, kind: input, shape index: {}]
  %s26 = inlined_call_operand.vmem [shape: f32[192,3], index: 26, kind: input, shape index: {}]
  %s27 = inlined_call_operand.vmem [shape: f32[1,3], index: 27, kind: input, shape index: {}]
  %s28 = inlined_call_operand.hbm [shape: f32[4,3], index: 28, kind: output, shape index: {}]
  %s29 = sld [smem:[#allocation0]]
  $region122: #{forward.1} parent=0
    _
  %s31 = ssub.s32 1, %s29
  %s32 = scalar_select 0, %s31, %s29
  $region1: #{forward.1} parent=0
    #allocation2 [shape = 'u8[2048]{0}', space=vmem, size = 0x800, scoped, tag = 'output window, operand 0, single buffered']
    #allocation3 [shape = 's32[1]{0}', space=sflag, size = 0x4, scoped, tag = 'scoped memory for forward.1']
    %33 = vsyncpa [#allocation3], 0
    // Predicated region
    $region2: #{forward.1} parent=1 // pred_check
      _
    $region3: #{forward.1} parent=1 // pred_check_branch
      %35 = sbr.rel (0) target = $region5
    $region4: #{forward.1} parent=1 // pred_region
      _
    $region5: #{forward.1} parent=1 // pred_fallthru
      _
    // Predicated region
    $region6: #{forward.1} parent=1 // pred_check
      _
    $region7: #{forward.1} parent=1 // pred_check_branch
      %37 = sbr.rel (0) target = $region9
    $region8: #{forward.1} parent=1 // pred_region
      _
    $region9: #{forward.1} parent=1 // pred_fallthru
      _
    // Predicated region
    $region10: #{forward.1} parent=1 // pred_check
      _
    $region11: #{forward.1} parent=1 // pred_check_branch
      %39 = sbr.rel (0) target = $region13
    $region12: #{forward.1} parent=1 // pred_region
      _
    $region13: #{forward.1} parent=1 // pred_fallthru
      _
    // Predicated region
    $region14: #{forward.1} parent=1 // pred_check
      _
    $region15: #{forward.1} parent=1 // pred_check_branch
      %41 = sbr.rel (0) target = $region17
    $region16: #{forward.1} parent=1 // pred_region
      _
    $region17: #{forward.1} parent=1 // pred_fallthru
      _
    // Predicated region
    $region18: #{forward.1} parent=1 // pred_check
      _
    $region19: #{forward.1} parent=1 // pred_check_branch
      %43 = sbr.rel (0) target = $region21
    $region20: #{forward.1} parent=1 // pred_region
      _
    $region21: #{forward.1} parent=1 // pred_fallthru
      _
    // Predicated region
    $region22: #{forward.1} parent=1 // pred_check
      _
    $region23: #{forward.1} parent=1 // pred_check_branch
      %45 = sbr.rel (0) target = $region25
    $region24: #{forward.1} parent=1 // pred_region
      _
    $region25: #{forward.1} parent=1 // pred_fallthru
      _
    // Predicated region
    $region26: #{forward.1} parent=1 // pred_check
      _
    $region27: #{forward.1} parent=1 // pred_check_branch
      %47 = sbr.rel (0) target = $region29
    $region28: #{forward.1} parent=1 // pred_region
      _
    $region29: #{forward.1} parent=1 // pred_fallthru
      _
    // Predicated region
    $region30: #{forward.1} parent=1 // pred_check
      _
    $region31: #{forward.1} parent=1 // pred_check_branch
      %49 = sbr.rel (0) target = $region33
    $region32: #{forward.1} parent=1 // pred_region
      _
    $region33: #{forward.1} parent=1 // pred_fallthru
      _
    // Predicated region
    $region34: #{forward.1} parent=1 // pred_check
      _
    $region35: #{forward.1} parent=1 // pred_check_branch
      %51 = sbr.rel (0) target = $region37
    $region36: #{forward.1} parent=1 // pred_region
      _
    $region37: #{forward.1} parent=1 // pred_fallthru
      _
    // Predicated region
    $region38: #{forward.1} parent=1 // pred_check
      _
    $region39: #{forward.1} parent=1 // pred_check_branch
      %53 = sbr.rel (0) target = $region41
    $region40: #{forward.1} parent=1 // pred_region
      _
    $region41: #{forward.1} parent=1 // pred_fallthru
      _
    // Predicated region
    $region42: #{forward.1} parent=1 // pred_check
      _
    $region43: #{forward.1} parent=1 // pred_check_branch
      %55 = sbr.rel (0) target = $region45
    $region44: #{forward.1} parent=1 // pred_region
      _
    $region45: #{forward.1} parent=1 // pred_fallthru
      _
    // Predicated region
    $region46: #{forward.1} parent=1 // pred_check
      _
    $region47: #{forward.1} parent=1 // pred_check_branch
      %57 = sbr.rel (0) target = $region49
    $region48: #{forward.1} parent=1 // pred_region
      _
    $region49: #{forward.1} parent=1 // pred_fallthru
      _
    // Predicated region
    $region50: #{forward.1} parent=1 // pred_check
      _
    $region51: #{forward.1} parent=1 // pred_check_branch
      %59 = sbr.rel (0) target = $region53
    $region52: #{forward.1} parent=1 // pred_region
      _
    $region53: #{forward.1} parent=1 // pred_fallthru
      _
    // Predicated region
    $region54: #{forward.1} parent=1 // pred_check
      _
    $region55: #{forward.1} parent=1 // pred_check_branch
      %61 = sbr.rel (0) target = $region57
    $region56: #{forward.1} parent=1 // pred_region
      _
    $region57: #{forward.1} parent=1 // pred_fallthru
      _
    // Predicated region
    $region58: #{forward.1} parent=1 // pred_check
      _
    $region59: #{forward.1} parent=1 // pred_check_branch
      %63 = sbr.rel (0) target = $region61
    $region60: #{forward.1} parent=1 // pred_region
      _
    $region61: #{forward.1} parent=1 // pred_fallthru
      _
    // Predicated region
    $region62: #{forward.1} parent=1 // pred_check
      _
    $region63: #{forward.1} parent=1 // pred_check_branch
      %65 = sbr.rel (0) target = $region65
    $region64: #{forward.1} parent=1 // pred_region
      _
    $region65: #{forward.1} parent=1 // pred_fallthru
      _
    // Predicated region
    $region66: #{forward.1} parent=1 // pred_check
      _
    $region67: #{forward.1} parent=1 // pred_check_branch
      %67 = sbr.rel (0) target = $region69
    $region68: #{forward.1} parent=1 // pred_region
      _
    $region69: #{forward.1} parent=1 // pred_fallthru
      _
    // Predicated region
    $region70: #{forward.1} parent=1 // pred_check
      _
    $region71: #{forward.1} parent=1 // pred_check_branch
      %69 = sbr.rel (0) target = $region73
    $region72: #{forward.1} parent=1 // pred_region
      _
    $region73: #{forward.1} parent=1 // pred_fallthru
      _
    // Predicated region
    $region74: #{forward.1} parent=1 // pred_check
      _
    $region75: #{forward.1} parent=1 // pred_check_branch
      %71 = sbr.rel (0) target = $region77
    $region76: #{forward.1} parent=1 // pred_region
      _
    $region77: #{forward.1} parent=1 // pred_fallthru
      _
    // Predicated region
    $region78: #{forward.1} parent=1 // pred_check
      _
    $region79: #{forward.1} parent=1 // pred_check_branch
      %73 = sbr.rel (0) target = $region81
    $region80: #{forward.1} parent=1 // pred_region
      _
    $region81: #{forward.1} parent=1 // pred_fallthru
      _
    // Predicated region
    $region82: #{forward.1} parent=1 // pred_check
      _
    $region83: #{forward.1} parent=1 // pred_check_branch
      %75 = sbr.rel (0) target = $region85
    $region84: #{forward.1} parent=1 // pred_region
      _
    $region85: #{forward.1} parent=1 // pred_fallthru
      _
    // Predicated region
    $region86: #{forward.1} parent=1 // pred_check
      _
    $region87: #{forward.1} parent=1 // pred_check_branch
      %77 = sbr.rel (0) target = $region89
    $region88: #{forward.1} parent=1 // pred_region
      _
    $region89: #{forward.1} parent=1 // pred_fallthru
      _
    // Predicated region
    $region90: #{forward.1} parent=1 // pred_check
      _
    $region91: #{forward.1} parent=1 // pred_check_branch
      %79 = sbr.rel (0) target = $region93
    $region92: #{forward.1} parent=1 // pred_region
      _
    $region93: #{forward.1} parent=1 // pred_fallthru
      _
    // Predicated region
    $region94: #{forward.1} parent=1 // pred_check
      _
    $region95: #{forward.1} parent=1 // pred_check_branch
      %81 = sbr.rel (0) target = $region97
    $region96: #{forward.1} parent=1 // pred_region
      _
    $region97: #{forward.1} parent=1 // pred_fallthru
      _
    // Predicated region
    $region98: #{forward.1} parent=1 // pred_check
      _
    $region99: #{forward.1} parent=1 // pred_check_branch
      %83 = sbr.rel (0) target = $region101
    $region100: #{forward.1} parent=1 // pred_region
      _
    $region101: #{forward.1} parent=1 // pred_fallthru
      _
    // Predicated region
    $region102: #{forward.1} parent=1 // pred_check
      _
    $region103: #{forward.1} parent=1 // pred_check_branch
      %85 = sbr.rel (0) target = $region105
    $region104: #{forward.1} parent=1 // pred_region
      _
    $region105: #{forward.1} parent=1 // pred_fallthru
      _
    // Predicated region
    $region106: #{forward.1} parent=1 // pred_check
      _
    $region107: #{forward.1} parent=1 // pred_check_branch
      %87 = sbr.rel (0) target = $region109
    $region108: #{forward.1} parent=1 // pred_region
      _
    $region109: #{forward.1} parent=1 // pred_fallthru
      _
    // Predicated region
    $region110: #{forward.1} parent=1 // pred_check
      _
    $region111: #{forward.1} parent=1 // pred_check_branch
      %89 = sbr.rel (0) target = $region113
    $region112: #{forward.1} parent=1 // pred_region
      _
    $region113: #{forward.1} parent=1 // pred_fallthru
      _
    %v90 = vld [vmem:[%s0] sm:$0xff]
    %v91 = vld [vmem:[%s0 + $0x8] sm:$0xff]
    %v92 = vld [vmem:[%s0 + $0x10] sm:$0xff]
    %v93 = vld [vmem:[%s0 + $0x18] sm:$0xff]
    %v94 = vld [vmem:[%s1] sm:$0xff]
    %v95 = vld [vmem:[%s1 + $0x8] sm:$0xff]
    %v96 = vld [vmem:[%s1 + $0x10] sm:$0xff]
    %v97 = vld [vmem:[%s1 + $0x18] sm:$0xff]
    %v98 = vld [vmem:[%s6] sm:$0xff]
    %v99 = vld [vmem:[%s6 + $0x8] sm:$0xff]
    %v100 = vld [vmem:[%s6 + $0x10] sm:$0xff]
    %v101 = vld [vmem:[%s6 + $0x18] sm:$0xff]
    %v102 = vld [vmem:[%s7] sm:$0xff]
    %v103 = vld [vmem:[%s7 + $0x8] sm:$0xff]
    %v104 = vld [vmem:[%s7 + $0x10] sm:$0xff]
    %v105 = vld [vmem:[%s7 + $0x18] sm:$0xff]
    %v106 = vld [vmem:[%s8] sm:$0x1]
    %v108 = vlaneseq
    %v109 = vshrl.u32 %v108, 7
    %v110 = vsub.s32 0, %v109
    %v111 = vrot.slane %v106, %v110
    %vm113 = vcmask 261120
    %v115 = vsel %vm113, %v90, 0
    %v118 = vsel %vm113, %v91, 0
    %v121 = vsel %vm113, %v92, 0
    %v124 = vsel %vm113, %v93, 0
    %126 = vmatprep.subr.mxu0 0.0
    %127 = vmatpush1.msra.mxu0 %v98
    %128 = vmatprep.subr.mxu0 0.0
    %129 = vmatpush1.msra.mxu0 %v99
    %130 = vmatprep.subr.mxu0 0.0
    %131 = vmatpush1.msra.mxu0 %v100
    %132 = vmatprep.subr.mxu0 0.0
    %133 = vmatpush1.msra.mxu0 %v101
    %134 = vmatprep.subr.mxu0 0.0
    %135 = vmatpush1.msra.mxu0 0.0
    %136 = vmatprep.subr.mxu0 0.0
    %137 = vmatpush1.msra.mxu0 0.0
    %138 = vmatprep.subr.mxu0 0.0
    %139 = vmatpush1.msra.mxu0 0.0
    %140 = vmatprep.subr.mxu0 0.0
    %141 = vmatpush1.msra.mxu0 0.0
    %142 = vmatprep.subr.mxu0 0.0
    %143 = vmatpush1.msra.mxu0 0.0
    %144 = vmatprep.subr.mxu0 0.0
    %145 = vmatpush1.msra.mxu0 0.0
    %146 = vmatprep.subr.mxu0 0.0
    %147 = vmatpush1.msra.mxu0 0.0
    %148 = vmatprep.subr.mxu0 0.0
    %149 = vmatpush1.msra.mxu0 0.0
    %150 = vmatprep.subr.mxu0 0.0
    %151 = vmatpush1.msra.mxu0 0.0
    %152 = vmatprep.subr.mxu0 0.0
    %153 = vmatpush1.msra.mxu0 0.0
    %154 = vmatprep.subr.mxu0 0.0
    %155 = vmatpush1.msra.mxu0 0.0
    %156 = vmatprep.subr.mxu0 0.0
    %157 = vmatpush1.msra.mxu0 0.0
    %158 = vmatprep.subr.mxu0 0.0
    %159 = vmatpush1.msra.mxu0 0.0
    %160 = vmatprep.subr.mxu0 0.0
    %161 = vmatpush1.msra.mxu0 0.0
    %162 = vmatprep.subr.mxu0 0.0
    %163 = vmatpush1.msra.mxu0 0.0
    %164 = vmatprep.subr.mxu0 0.0
    %165 = vmatpush1.msra.mxu0 0.0
    %166 = vmatprep.subr.mxu0 0.0
    %167 = vmatpush1.msra.mxu0 0.0
    %168 = vmatprep.subr.mxu0 0.0
    %169 = vmatpush1.msra.mxu0 0.0
    %170 = vmatprep.subr.mxu0 0.0
    %171 = vmatpush1.msra.mxu0 0.0
    %172 = vmatprep.subr.mxu0 0.0
    %173 = vmatpush1.msra.mxu0 0.0
    %174 = vmatprep.subr.mxu0 0.0
    %175 = vmatpush1.msra.mxu0 0.0
    %176 = vmatprep.subr.mxu0 0.0
    %177 = vmatpush1.msra.mxu0 0.0
    %178 = vmatprep.subr.mxu0 0.0
    %179 = vmatpush1.msra.mxu0 0.0
    %180 = vmatprep.subr.mxu0 0.0
    %181 = vmatpush1.msra.mxu0 0.0
    %182 = vmatprep.subr.mxu0 0.0
    %183 = vmatpush1.msra.mxu0 0.0
    %184 = vmatprep.subr.mxu0 0.0
    %185 = vmatpush1.msra.mxu0 0.0
    %186 = vmatprep.subr.mxu0 0.0
    %187 = vmatpush1.msra.mxu0 0.0
    %188 = vmatprep.subr.mxu0 0.0
    %189 = vmatpush1.msra.mxu0 0.0
    %190 = vmatprep.mubr.f32.mxu0 0.0
    %191 = vmatmul.mubr.f32.gmra.mrb[0].mxu0 %v115
    %v192 = vpop.f32.mrb[0].mxu0
    %v193 = vadd.f32 %v111, %v192
    %v194 = vpop.f32.mrb[0].mxu0
    %195 = vmatprep.mubr.f32.mxu0 0.0
    %196 = vmatmul.mubr.f32.gmra.mrb[0].mxu0 %v118
    %v197 = vpop.f32.mrb[0].mxu0
    %v198 = vadd.f32 %v111, %v197
    %v199 = vpop.f32.mrb[0].mxu0
    %200 = vmatprep.mubr.f32.mxu0 0.0
    %201 = vmatmul.mubr.f32.gmra.mrb[0].mxu0 %v121
    %v202 = vpop.f32.mrb[0].mxu0
    %v203 = vadd.f32 %v111, %v202
    %v204 = vpop.f32.mrb[0].mxu0
    %205 = vmatprep.mubr.f32.mxu0 0.0
    %206 = vmatmul.mubr.f32.gmra.mrb[0].mxu0 %v124
    %v207 = vpop.f32.mrb[0].mxu0
    %v208 = vadd.f32 %v111, %v207
    %v209 = vpop.f32.mrb[0].mxu0
    %210 = vdwg.mxu0
    %v212 = vsel %vm113, 0.0, 0
    %214 = vmatprep.subr.mxu0 0.0
    %215 = vmatpush1.msra.mxu0 %v102
    %216 = vmatprep.subr.mxu0 0.0
    %217 = vmatpush1.msra.mxu0 %v103
    %218 = vmatprep.subr.mxu0 0.0
    %219 = vmatpush1.msra.mxu0 %v104
    %220 = vmatprep.subr.mxu0 0.0
    %221 = vmatpush1.msra.mxu0 %v105
    %222 = vmatprep.subr.mxu0 0.0
    %223 = vmatpush1.msra.mxu0 0.0
    %224 = vmatprep.subr.mxu0 0.0
    %225 = vmatpush1.msra.mxu0 0.0
    %226 = vmatprep.subr.mxu0 0.0
    %227 = vmatpush1.msra.mxu0 0.0
    %228 = vmatprep.subr.mxu0 0.0
    %229 = vmatpush1.msra.mxu0 0.0
    %230 = vmatprep.subr.mxu0 0.0
    %231 = vmatpush1.msra.mxu0 0.0
    %232 = vmatprep.subr.mxu0 0.0
    %233 = vmatpush1.msra.mxu0 0.0
    %234 = vmatprep.subr.mxu0 0.0
    %235 = vmatpush1.msra.mxu0 0.0
    %236 = vmatprep.subr.mxu0 0.0
    %237 = vmatpush1.msra.mxu0 0.0
    %238 = vmatprep.subr.mxu0 0.0
    %239 = vmatpush1.msra.mxu0 0.0
    %240 = vmatprep.subr.mxu0 0.0
    %241 = vmatpush1.msra.mxu0 0.0
    %242 = vmatprep.subr.mxu0 0.0
    %243 = vmatpush1.msra.mxu0 0.0
    %244 = vmatprep.subr.mxu0 0.0
    %245 = vmatpush1.msra.mxu0 0.0
    %246 = vmatprep.subr.mxu0 0.0
    %247 = vmatpush1.msra.mxu0 0.0
    %248 = vmatprep.subr.mxu0 0.0
    %249 = vmatpush1.msra.mxu0 0.0
    %250 = vmatprep.subr.mxu0 0.0
    %251 = vmatpush1.msra.mxu0 0.0
    %252 = vmatprep.subr.mxu0 0.0
    %253 = vmatpush1.msra.mxu0 0.0
    %254 = vmatprep.subr.mxu0 0.0
    %255 = vmatpush1.msra.mxu0 0.0
    %256 = vmatprep.subr.mxu0 0.0
    %257 = vmatpush1.msra.mxu0 0.0
    %258 = vmatprep.subr.mxu0 0.0
    %259 = vmatpush1.msra.mxu0 0.0
    %260 = vmatprep.subr.mxu0 0.0
    %261 = vmatpush1.msra.mxu0 0.0
    %262 = vmatprep.subr.mxu0 0.0
    %263 = vmatpush1.msra.mxu0 0.0
    %264 = vmatprep.subr.mxu0 0.0
    %265 = vmatpush1.msra.mxu0 0.0
    %266 = vmatprep.subr.mxu0 0.0
    %267 = vmatpush1.msra.mxu0 0.0
    %268 = vmatprep.subr.mxu0 0.0
    %269 = vmatpush1.msra.mxu0 0.0
    %270 = vmatprep.subr.mxu0 0.0
    %271 = vmatpush1.msra.mxu0 0.0
    %272 = vmatprep.subr.mxu0 0.0
    %273 = vmatpush1.msra.mxu0 0.0
    %274 = vmatprep.subr.mxu0 0.0
    %275 = vmatpush1.msra.mxu0 0.0
    %276 = vmatprep.subr.mxu0 0.0
    %277 = vmatpush1.msra.mxu0 0.0
    %278 = vmatprep.mubr.f32.mxu0 0.0
    %279 = vmatmul.mubr.f32.gmra.mrb[0].mxu0 %v212
    %v280 = vpop.f32.mrb[0].mxu0
    %v281 = vadd.f32 0.0, %v280
    %v282 = vpop.f32.mrb[0].mxu0
    %283 = vdwg.mxu0
    %v284 = vadd.f32 %v193, %v281
    %v285 = vxor.u32 %v284, 2147483648
    %v286 = vmul.f32 %v285, 1.442695
    %v287 = vpow.pop %v286
    %v288 = vadd.f32 %v287, 1.0
    %v289 = vrcp.pop %v288
    %v290 = vmul.f32 1.0, %v289
    %v291 = vtanh.pop %v284
    %v292 = vmul.f32 %v290, 0.0
    %294 = vrot.lane.b32.xlu0 %v291, 32
    %v295 = vpop.permute.xlu0 %294
    %v297 = vmul.f32 %v290, %v295
    %299 = vrot.lane.b32.xlu0 %v297, 32
    %v300 = vpop.permute.xlu0 %299
    %v302 = vadd.f32 %v292, %v300
    %v303 = vtanh.pop %v302
    %305 = vrot.lane.b32.xlu0 %v303, 32
    %v306 = vpop.permute.xlu0 %305
    %v308 = vmul.f32 %v290, %v306
    %310 = vset.pattern.permute.xlu0 0
    %311 = vperm.xlu0 %310, %v94
    %v312 = vpop.permute.xlu0 %311
    %v314 = vmul.f32 %v308, %v312
    %v315 = vadd.f32 %v314, 0.0
    %317 = vrot.lane.b32.xlu0 %v308, 64
    %v318 = vpop.permute.xlu0 %317
    %v319 = vsel %vm113, %v318, 0
    %321 = vmatprep.subr.mxu0 0.0
    %322 = vmatpush1.msra.mxu0 %v102
    %323 = vmatprep.subr.mxu0 0.0
    %324 = vmatpush1.msra.mxu0 %v103
    %325 = vmatprep.subr.mxu0 0.0
    %326 = vmatpush1.msra.mxu0 %v104
    %327 = vmatprep.subr.mxu0 0.0
    %328 = vmatpush1.msra.mxu0 %v105
    %329 = vmatprep.subr.mxu0 0.0
    %330 = vmatpush1.msra.mxu0 0.0
    %331 = vmatprep.subr.mxu0 0.0
    %332 = vmatpush1.msra.mxu0 0.0
    %333 = vmatprep.subr.mxu0 0.0
    %334 = vmatpush1.msra.mxu0 0.0
    %335 = vmatprep.subr.mxu0 0.0
    %336 = vmatpush1.msra.mxu0 0.0
    %337 = vmatprep.subr.mxu0 0.0
    %338 = vmatpush1.msra.mxu0 0.0
    %339 = vmatprep.subr.mxu0 0.0
    %340 = vmatpush1.msra.mxu0 0.0
    %341 = vmatprep.subr.mxu0 0.0
    %342 = vmatpush1.msra.mxu0 0.0
    %343 = vmatprep.subr.mxu0 0.0
    %344 = vmatpush1.msra.mxu0 0.0
    %345 = vmatprep.subr.mxu0 0.0
    %346 = vmatpush1.msra.mxu0 0.0
    %347 = vmatprep.subr.mxu0 0.0
    %348 = vmatpush1.msra.mxu0 0.0
    %349 = vmatprep.subr.mxu0 0.0
    %350 = vmatpush1.msra.mxu0 0.0
    %351 = vmatprep.subr.mxu0 0.0
    %352 = vmatpush1.msra.mxu0 0.0
    %353 = vmatprep.subr.mxu0 0.0
    %354 = vmatpush1.msra.mxu0 0.0
    %355 = vmatprep.subr.mxu0 0.0
    %356 = vmatpush1.msra.mxu0 0.0
    %357 = vmatprep.subr.mxu0 0.0
    %358 = vmatpush1.msra.mxu0 0.0
    %359 = vmatprep.subr.mxu0 0.0
    %360 = vmatpush1.msra.mxu0 0.0
    %361 = vmatprep.subr.mxu0 0.0
    %362 = vmatpush1.msra.mxu0 0.0
    %363 = vmatprep.subr.mxu0 0.0
    %364 = vmatpush1.msra.mxu0 0.0
    %365 = vmatprep.subr.mxu0 0.0
    %366 = vmatpush1.msra.mxu0 0.0
    %367 = vmatprep.subr.mxu0 0.0
    %368 = vmatpush1.msra.mxu0 0.0
    %369 = vmatprep.subr.mxu0 0.0
    %370 = vmatpush1.msra.mxu0 0.0
    %371 = vmatprep.subr.mxu0 0.0
    %372 = vmatpush1.msra.mxu0 0.0
    %373 = vmatprep.subr.mxu0 0.0
    %374 = vmatpush1.msra.mxu0 0.0
    %375 = vmatprep.subr.mxu0 0.0
    %376 = vmatpush1.msra.mxu0 0.0
    %377 = vmatprep.subr.mxu0 0.0
    %378 = vmatpush1.msra.mxu0 0.0
    %379 = vmatprep.subr.mxu0 0.0
    %380 = vmatpush1.msra.mxu0 0.0
    %381 = vmatprep.subr.mxu0 0.0
    %382 = vmatpush1.msra.mxu0 0.0
    %383 = vmatprep.subr.mxu0 0.0
    %384 = vmatpush1.msra.mxu0 0.0
    %385 = vmatprep.mubr.f32.mxu0 0.0
    %386 = vmatmul.mubr.f32.gmra.mrb[0].mxu0 %v319
    %v387 = vpop.f32.mrb[0].mxu0
    %v388 = vadd.f32 0.0, %v387
    %v389 = vpop.f32.mrb[0].mxu0
    %390 = vdwg.mxu0
    %v392 = vrot.slane %v388, 4
    %v394 = vadd.f32 %v193, %v392
    %v395 = vxor.u32 %v394, 2147483648
    %v396 = vmul.f32 %v395, 1.442695
    %v397 = vpow.pop %v396
    %v398 = vadd.f32 %v397, 1.0
    %v399 = vrcp.pop %v398
    %v400 = vmul.f32 1.0, %v399
    %v401 = vtanh.pop %v394
    %v403 = vrot.slane %v302, 4
    %v405 = vmul.f32 %v400, %v403
    %407 = vrot.lane.b32.xlu0 %v401, 32
    %v408 = vpop.permute.xlu0 %407
    %v410 = vmul.f32 %v400, %v408
    %412 = vrot.lane.b32.xlu0 %v410, 32
    %v413 = vpop.permute.xlu0 %412
    %v415 = vadd.f32 %v405, %v413
    %v416 = vtanh.pop %v415
    %418 = vrot.lane.b32.xlu0 %v416, 32
    %v419 = vpop.permute.xlu0 %418
    %v421 = vmul.f32 %v400, %v419
    %v422 = vmul.f32 %v421, %v312
    %v424 = vrot.slane %v422, 4
    %v426 = vadd.f32 %v315, %v424
    %v428 = vrot.slane %v421, 4
    %429 = vrot.lane.b32.xlu0 %v428, 64
    %v430 = vpop.permute.xlu0 %429
    %v431 = vsel %vm113, %v430, 0
    %433 = vmatprep.subr.mxu0 0.0
    %434 = vmatpush1.msra.mxu0 %v102
    %435 = vmatprep.subr.mxu0 0.0
    %436 = vmatpush1.msra.mxu0 %v103
    %437 = vmatprep.subr.mxu0 0.0
    %438 = vmatpush1.msra.mxu0 %v104
    %439 = vmatprep.subr.mxu0 0.0
    %440 = vmatpush1.msra.mxu0 %v105
    %441 = vmatprep.subr.mxu0 0.0
    %442 = vmatpush1.msra.mxu0 0.0
    %443 = vmatprep.subr.mxu0 0.0
    %444 = vmatpush1.msra.mxu0 0.0
    %445 = vmatprep.subr.mxu0 0.0
    %446 = vmatpush1.msra.mxu0 0.0
    %447 = vmatprep.subr.mxu0 0.0
    %448 = vmatpush1.msra.mxu0 0.0
    %449 = vmatprep.subr.mxu0 0.0
    %450 = vmatpush1.msra.mxu0 0.0
    %451 = vmatprep.subr.mxu0 0.0
    %452 = vmatpush1.msra.mxu0 0.0
    %453 = vmatprep.subr.mxu0 0.0
    %454 = vmatpush1.msra.mxu0 0.0
    %455 = vmatprep.subr.mxu0 0.0
    %456 = vmatpush1.msra.mxu0 0.0
    %457 = vmatprep.subr.mxu0 0.0
    %458 = vmatpush1.msra.mxu0 0.0
    %459 = vmatprep.subr.mxu0 0.0
    %460 = vmatpush1.msra.mxu0 0.0
    %461 = vmatprep.subr.mxu0 0.0
    %462 = vmatpush1.msra.mxu0 0.0
    %463 = vmatprep.subr.mxu0 0.0
    %464 = vmatpush1.msra.mxu0 0.0
    %465 = vmatprep.subr.mxu0 0.0
    %466 = vmatpush1.msra.mxu0 0.0
    %467 = vmatprep.subr.mxu0 0.0
    %468 = vmatpush1.msra.mxu0 0.0
    %469 = vmatprep.subr.mxu0 0.0
    %470 = vmatpush1.msra.mxu0 0.0
    %471 = vmatprep.subr.mxu0 0.0
    %472 = vmatpush1.msra.mxu0 0.0
    %473 = vmatprep.subr.mxu0 0.0
    %474 = vmatpush1.msra.mxu0 0.0
    %475 = vmatprep.subr.mxu0 0.0
    %476 = vmatpush1.msra.mxu0 0.0
    %477 = vmatprep.subr.mxu0 0.0
    %478 = vmatpush1.msra.mxu0 0.0
    %479 = vmatprep.subr.mxu0 0.0
    %480 = vmatpush1.msra.mxu0 0.0
    %481 = vmatprep.subr.mxu0 0.0
    %482 = vmatpush1.msra.mxu0 0.0
    %483 = vmatprep.subr.mxu0 0.0
    %484 = vmatpush1.msra.mxu0 0.0
    %485 = vmatprep.subr.mxu0 0.0
    %486 = vmatpush1.msra.mxu0 0.0
    %487 = vmatprep.subr.mxu0 0.0
    %488 = vmatpush1.msra.mxu0 0.0
    %489 = vmatprep.subr.mxu0 0.0
    %490 = vmatpush1.msra.mxu0 0.0
    %491 = vmatprep.subr.mxu0 0.0
    %492 = vmatpush1.msra.mxu0 0.0
    %493 = vmatprep.subr.mxu0 0.0
    %494 = vmatpush1.msra.mxu0 0.0
    %495 = vmatprep.subr.mxu0 0.0
    %496 = vmatpush1.msra.mxu0 0.0
    %497 = vmatprep.mubr.f32.mxu0 0.0
    %498 = vmatmul.mubr.f32.gmra.mrb[0].mxu0 %v431
    %v499 = vpop.f32.mrb[0].mxu0
    %v500 = vadd.f32 0.0, %v499
    %v501 = vpop.f32.mrb[0].mxu0
    %502 = vdwg.mxu0
    %v503 = vadd.f32 %v198, %v500
    %v504 = vxor.u32 %v503, 2147483648
    %v505 = vmul.f32 %v504, 1.442695
    %v506 = vpow.pop %v505
    %v507 = vadd.f32 %v506, 1.0
    %v508 = vrcp.pop %v507
    %v509 = vmul.f32 1.0, %v508
    %v510 = vtanh.pop %v503
    %v512 = vrot.slane %v415, 4
    %v514 = vmul.f32 %v509, %v512
    %516 = vrot.lane.b32.xlu0 %v510, 32
    %v517 = vpop.permute.xlu0 %516
    %v519 = vmul.f32 %v509, %v517
    %521 = vrot.lane.b32.xlu0 %v519, 32
    %v522 = vpop.permute.xlu0 %521
    %v524 = vadd.f32 %v514, %v522
    %v525 = vtanh.pop %v524
    %527 = vrot.lane.b32.xlu0 %v525, 32
    %v528 = vpop.permute.xlu0 %527
    %v530 = vmul.f32 %v509, %v528
    %532 = vset.pattern.permute.xlu0 0
    %533 = vperm.xlu0 %532, %v95
    %v534 = vpop.permute.xlu0 %533
    %v536 = vmul.f32 %v530, %v534
    %v537 = vadd.f32 %v426, %v536
    %539 = vrot.lane.b32.xlu0 %v530, 64
    %v540 = vpop.permute.xlu0 %539
    %v541 = vsel %vm113, %v540, 0
    %543 = vmatprep.subr.mxu0 0.0
    %544 = vmatpush1.msra.mxu0 %v102
    %545 = vmatprep.subr.mxu0 0.0
    %546 = vmatpush1.msra.mxu0 %v103
    %547 = vmatprep.subr.mxu0 0.0
    %548 = vmatpush1.msra.mxu0 %v104
    %549 = vmatprep.subr.mxu0 0.0
    %550 = vmatpush1.msra.mxu0 %v105
    %551 = vmatprep.subr.mxu0 0.0
    %552 = vmatpush1.msra.mxu0 0.0
    %553 = vmatprep.subr.mxu0 0.0
    %554 = vmatpush1.msra.mxu0 0.0
    %555 = vmatprep.subr.mxu0 0.0
    %556 = vmatpush1.msra.mxu0 0.0
    %557 = vmatprep.subr.mxu0 0.0
    %558 = vmatpush1.msra.mxu0 0.0
    %559 = vmatprep.subr.mxu0 0.0
    %560 = vmatpush1.msra.mxu0 0.0
    %561 = vmatprep.subr.mxu0 0.0
    %562 = vmatpush1.msra.mxu0 0.0
    %563 = vmatprep.subr.mxu0 0.0
    %564 = vmatpush1.msra.mxu0 0.0
    %565 = vmatprep.subr.mxu0 0.0
    %566 = vmatpush1.msra.mxu0 0.0
    %567 = vmatprep.subr.mxu0 0.0
    %568 = vmatpush1.msra.mxu0 0.0
    %569 = vmatprep.subr.mxu0 0.0
    %570 = vmatpush1.msra.mxu0 0.0
    %571 = vmatprep.subr.mxu0 0.0
    %572 = vmatpush1.msra.mxu0 0.0
    %573 = vmatprep.subr.mxu0 0.0
    %574 = vmatpush1.msra.mxu0 0.0
    %575 = vmatprep.subr.mxu0 0.0
    %576 = vmatpush1.msra.mxu0 0.0
    %577 = vmatprep.subr.mxu0 0.0
    %578 = vmatpush1.msra.mxu0 0.0
    %579 = vmatprep.subr.mxu0 0.0
    %580 = vmatpush1.msra.mxu0 0.0
    %581 = vmatprep.subr.mxu0 0.0
    %582 = vmatpush1.msra.mxu0 0.0
    %583 = vmatprep.subr.mxu0 0.0
    %584 = vmatpush1.msra.mxu0 0.0
    %585 = vmatprep.subr.mxu0 0.0
    %586 = vmatpush1.msra.mxu0 0.0
    %587 = vmatprep.subr.mxu0 0.0
    %588 = vmatpush1.msra.mxu0 0.0
    %589 = vmatprep.subr.mxu0 0.0
    %590 = vmatpush1.msra.mxu0 0.0
    %591 = vmatprep.subr.mxu0 0.0
    %592 = vmatpush1.msra.mxu0 0.0
    %593 = vmatprep.subr.mxu0 0.0
    %594 = vmatpush1.msra.mxu0 0.0
    %595 = vmatprep.subr.mxu0 0.0
    %596 = vmatpush1.msra.mxu0 0.0
    %597 = vmatprep.subr.mxu0 0.0
    %598 = vmatpush1.msra.mxu0 0.0
    %599 = vmatprep.subr.mxu0 0.0
    %600 = vmatpush1.msra.mxu0 0.0
    %601 = vmatprep.subr.mxu0 0.0
    %602 = vmatpush1.msra.mxu0 0.0
    %603 = vmatprep.subr.mxu0 0.0
    %604 = vmatpush1.msra.mxu0 0.0
    %605 = vmatprep.subr.mxu0 0.0
    %606 = vmatpush1.msra.mxu0 0.0
    %607 = vmatprep.mubr.f32.mxu0 0.0
    %608 = vmatmul.mubr.f32.gmra.mrb[0].mxu0 %v541
    %v609 = vpop.f32.mrb[0].mxu0
    %v610 = vadd.f32 0.0, %v609
    %v611 = vpop.f32.mrb[0].mxu0
    %612 = vdwg.mxu0
    %v614 = vrot.slane %v610, 4
    %v616 = vadd.f32 %v198, %v614
    %v617 = vxor.u32 %v616, 2147483648
    %v618 = vmul.f32 %v617, 1.442695
    %v619 = vpow.pop %v618
    %v620 = vadd.f32 %v619, 1.0
    %v621 = vrcp.pop %v620
    %v622 = vmul.f32 1.0, %v621
    %v623 = vtanh.pop %v616
    %v625 = vrot.slane %v524, 4
    %v627 = vmul.f32 %v622, %v625
    %629 = vrot.lane.b32.xlu0 %v623, 32
    %v630 = vpop.permute.xlu0 %629
    %v632 = vmul.f32 %v622, %v630
    %634 = vrot.lane.b32.xlu0 %v632, 32
    %v635 = vpop.permute.xlu0 %634
    %v637 = vadd.f32 %v627, %v635
    %v638 = vtanh.pop %v637
    %640 = vrot.lane.b32.xlu0 %v638, 32
    %v641 = vpop.permute.xlu0 %640
    %v643 = vmul.f32 %v622, %v641
    %v644 = vmul.f32 %v643, %v534
    %v646 = vrot.slane %v644, 4
    %v648 = vadd.f32 %v537, %v646
    %v650 = vrot.slane %v643, 4
    %651 = vrot.lane.b32.xlu0 %v650, 64
    %v652 = vpop.permute.xlu0 %651
    %v653 = vsel %vm113, %v652, 0
    %655 = vmatprep.subr.mxu0 0.0
    %656 = vmatpush1.msra.mxu0 %v102
    %657 = vmatprep.subr.mxu0 0.0
    %658 = vmatpush1.msra.mxu0 %v103
    %659 = vmatprep.subr.mxu0 0.0
    %660 = vmatpush1.msra.mxu0 %v104
    %661 = vmatprep.subr.mxu0 0.0
    %662 = vmatpush1.msra.mxu0 %v105
    %663 = vmatprep.subr.mxu0 0.0
    %664 = vmatpush1.msra.mxu0 0.0
    %665 = vmatprep.subr.mxu0 0.0
    %666 = vmatpush1.msra.mxu0 0.0
    %667 = vmatprep.subr.mxu0 0.0
    %668 = vmatpush1.msra.mxu0 0.0
    %669 = vmatprep.subr.mxu0 0.0
    %670 = vmatpush1.msra.mxu0 0.0
    %671 = vmatprep.subr.mxu0 0.0
    %672 = vmatpush1.msra.mxu0 0.0
    %673 = vmatprep.subr.mxu0 0.0
    %674 = vmatpush1.msra.mxu0 0.0
    %675 = vmatprep.subr.mxu0 0.0
    %676 = vmatpush1.msra.mxu0 0.0
    %677 = vmatprep.subr.mxu0 0.0
    %678 = vmatpush1.msra.mxu0 0.0
    %679 = vmatprep.subr.mxu0 0.0
    %680 = vmatpush1.msra.mxu0 0.0
    %681 = vmatprep.subr.mxu0 0.0
    %682 = vmatpush1.msra.mxu0 0.0
    %683 = vmatprep.subr.mxu0 0.0
    %684 = vmatpush1.msra.mxu0 0.0
    %685 = vmatprep.subr.mxu0 0.0
    %686 = vmatpush1.msra.mxu0 0.0
    %687 = vmatprep.subr.mxu0 0.0
    %688 = vmatpush1.msra.mxu0 0.0
    %689 = vmatprep.subr.mxu0 0.0
    %690 = vmatpush1.msra.mxu0 0.0
    %691 = vmatprep.subr.mxu0 0.0
    %692 = vmatpush1.msra.mxu0 0.0
    %693 = vmatprep.subr.mxu0 0.0
    %694 = vmatpush1.msra.mxu0 0.0
    %695 = vmatprep.subr.mxu0 0.0
    %696 = vmatpush1.msra.mxu0 0.0
    %697 = vmatprep.subr.mxu0 0.0
    %698 = vmatpush1.msra.mxu0 0.0
    %699 = vmatprep.subr.mxu0 0.0
    %700 = vmatpush1.msra.mxu0 0.0
    %701 = vmatprep.subr.mxu0 0.0
    %702 = vmatpush1.msra.mxu0 0.0
    %703 = vmatprep.subr.mxu0 0.0
    %704 = vmatpush1.msra.mxu0 0.0
    %705 = vmatprep.subr.mxu0 0.0
    %706 = vmatpush1.msra.mxu0 0.0
    %707 = vmatprep.subr.mxu0 0.0
    %708 = vmatpush1.msra.mxu0 0.0
    %709 = vmatprep.subr.mxu0 0.0
    %710 = vmatpush1.msra.mxu0 0.0
    %711 = vmatprep.subr.mxu0 0.0
    %712 = vmatpush1.msra.mxu0 0.0
    %713 = vmatprep.subr.mxu0 0.0
    %714 = vmatpush1.msra.mxu0 0.0
    %715 = vmatprep.subr.mxu0 0.0
    %716 = vmatpush1.msra.mxu0 0.0
    %717 = vmatprep.subr.mxu0 0.0
    %718 = vmatpush1.msra.mxu0 0.0
    %719 = vmatprep.mubr.f32.mxu0 0.0
    %720 = vmatmul.mubr.f32.gmra.mrb[0].mxu0 %v653
    %v721 = vpop.f32.mrb[0].mxu0
    %v722 = vadd.f32 0.0, %v721
    %v723 = vpop.f32.mrb[0].mxu0
    %724 = vdwg.mxu0
    %v725 = vadd.f32 %v203, %v722
    %v726 = vxor.u32 %v725, 2147483648
    %v727 = vmul.f32 %v726, 1.442695
    %v728 = vpow.pop %v727
    %v729 = vadd.f32 %v728, 1.0
    %v730 = vrcp.pop %v729
    %v731 = vmul.f32 1.0, %v730
    %v732 = vtanh.pop %v725
    %v734 = vrot.slane %v637, 4
    %v736 = vmul.f32 %v731, %v734
    %738 = vrot.lane.b32.xlu0 %v732, 32
    %v739 = vpop.permute.xlu0 %738
    %v741 = vmul.f32 %v731, %v739
    %743 = vrot.lane.b32.xlu0 %v741, 32
    %v744 = vpop.permute.xlu0 %743
    %v746 = vadd.f32 %v736, %v744
    %v747 = vtanh.pop %v746
    %749 = vrot.lane.b32.xlu0 %v747, 32
    %v750 = vpop.permute.xlu0 %749
    %v752 = vmul.f32 %v731, %v750
    %754 = vset.pattern.permute.xlu0 0
    %755 = vperm.xlu0 %754, %v96
    %v756 = vpop.permute.xlu0 %755
    %v758 = vmul.f32 %v752, %v756
    %v759 = vadd.f32 %v648, %v758
    %761 = vrot.lane.b32.xlu0 %v752, 64
    %v762 = vpop.permute.xlu0 %761
    %v763 = vsel %vm113, %v762, 0
    %765 = vmatprep.subr.mxu0 0.0
    %766 = vmatpush1.msra.mxu0 %v102
    %767 = vmatprep.subr.mxu0 0.0
    %768 = vmatpush1.msra.mxu0 %v103
    %769 = vmatprep.subr.mxu0 0.0
    %770 = vmatpush1.msra.mxu0 %v104
    %771 = vmatprep.subr.mxu0 0.0
    %772 = vmatpush1.msra.mxu0 %v105
    %773 = vmatprep.subr.mxu0 0.0
    %774 = vmatpush1.msra.mxu0 0.0
    %775 = vmatprep.subr.mxu0 0.0
    %776 = vmatpush1.msra.mxu0 0.0
    %777 = vmatprep.subr.mxu0 0.0
    %778 = vmatpush1.msra.mxu0 0.0
    %779 = vmatprep.subr.mxu0 0.0
    %780 = vmatpush1.msra.mxu0 0.0
    %781 = vmatprep.subr.mxu0 0.0
    %782 = vmatpush1.msra.mxu0 0.0
    %783 = vmatprep.subr.mxu0 0.0
    %784 = vmatpush1.msra.mxu0 0.0
    %785 = vmatprep.subr.mxu0 0.0
    %786 = vmatpush1.msra.mxu0 0.0
    %787 = vmatprep.subr.mxu0 0.0
    %788 = vmatpush1.msra.mxu0 0.0
    %789 = vmatprep.subr.mxu0 0.0
    %790 = vmatpush1.msra.mxu0 0.0
    %791 = vmatprep.subr.mxu0 0.0
    %792 = vmatpush1.msra.mxu0 0.0
    %793 = vmatprep.subr.mxu0 0.0
    %794 = vmatpush1.msra.mxu0 0.0
    %795 = vmatprep.subr.mxu0 0.0
    %796 = vmatpush1.msra.mxu0 0.0
    %797 = vmatprep.subr.mxu0 0.0
    %798 = vmatpush1.msra.mxu0 0.0
    %799 = vmatprep.subr.mxu0 0.0
    %800 = vmatpush1.msra.mxu0 0.0
    %801 = vmatprep.subr.mxu0 0.0
    %802 = vmatpush1.msra.mxu0 0.0
    %803 = vmatprep.subr.mxu0 0.0
    %804 = vmatpush1.msra.mxu0 0.0
    %805 = vmatprep.subr.mxu0 0.0
    %806 = vmatpush1.msra.mxu0 0.0
    %807 = vmatprep.subr.mxu0 0.0
    %808 = vmatpush1.msra.mxu0 0.0
    %809 = vmatprep.subr.mxu0 0.0
    %810 = vmatpush1.msra.mxu0 0.0
    %811 = vmatprep.subr.mxu0 0.0
    %812 = vmatpush1.msra.mxu0 0.0
    %813 = vmatprep.subr.mxu0 0.0
    %814 = vmatpush1.msra.mxu0 0.0
    %815 = vmatprep.subr.mxu0 0.0
    %816 = vmatpush1.msra.mxu0 0.0
    %817 = vmatprep.subr.mxu0 0.0
    %818 = vmatpush1.msra.mxu0 0.0
    %819 = vmatprep.subr.mxu0 0.0
    %820 = vmatpush1.msra.mxu0 0.0
    %821 = vmatprep.subr.mxu0 0.0
    %822 = vmatpush1.msra.mxu0 0.0
    %823 = vmatprep.subr.mxu0 0.0
    %824 = vmatpush1.msra.mxu0 0.0
    %825 = vmatprep.subr.mxu0 0.0
    %826 = vmatpush1.msra.mxu0 0.0
    %827 = vmatprep.subr.mxu0 0.0
    %828 = vmatpush1.msra.mxu0 0.0
    %829 = vmatprep.mubr.f32.mxu0 0.0
    %830 = vmatmul.mubr.f32.gmra.mrb[0].mxu0 %v763
    %v831 = vpop.f32.mrb[0].mxu0
    %v832 = vadd.f32 0.0, %v831
    %v833 = vpop.f32.mrb[0].mxu0
    %834 = vdwg.mxu0
    %v836 = vrot.slane %v832, 4
    %v838 = vadd.f32 %v203, %v836
    %v839 = vxor.u32 %v838, 2147483648
    %v840 = vmul.f32 %v839, 1.442695
    %v841 = vpow.pop %v840
    %v842 = vadd.f32 %v841, 1.0
    %v843 = vrcp.pop %v842
    %v844 = vmul.f32 1.0, %v843
    %v845 = vtanh.pop %v838
    %v847 = vrot.slane %v746, 4
    %v849 = vmul.f32 %v844, %v847
    %851 = vrot.lane.b32.xlu0 %v845, 32
    %v852 = vpop.permute.xlu0 %851
    %v854 = vmul.f32 %v844, %v852
    %856 = vrot.lane.b32.xlu0 %v854, 32
    %v857 = vpop.permute.xlu0 %856
    %v859 = vadd.f32 %v849, %v857
    %v860 = vtanh.pop %v859
    %862 = vrot.lane.b32.xlu0 %v860, 32
    %v863 = vpop.permute.xlu0 %862
    %v865 = vmul.f32 %v844, %v863
    %v866 = vmul.f32 %v865, %v756
    %v868 = vrot.slane %v866, 4
    %v870 = vadd.f32 %v759, %v868
    %v872 = vrot.slane %v865, 4
    %873 = vrot.lane.b32.xlu0 %v872, 64
    %v874 = vpop.permute.xlu0 %873
    %v875 = vsel %vm113, %v874, 0
    %877 = vmatprep.subr.mxu0 0.0
    %878 = vmatpush1.msra.mxu0 %v102
    %879 = vmatprep.subr.mxu0 0.0
    %880 = vmatpush1.msra.mxu0 %v103
    %881 = vmatprep.subr.mxu0 0.0
    %882 = vmatpush1.msra.mxu0 %v104
    %883 = vmatprep.subr.mxu0 0.0
    %884 = vmatpush1.msra.mxu0 %v105
    %885 = vmatprep.subr.mxu0 0.0
    %886 = vmatpush1.msra.mxu0 0.0
    %887 = vmatprep.subr.mxu0 0.0
    %888 = vmatpush1.msra.mxu0 0.0
    %889 = vmatprep.subr.mxu0 0.0
    %890 = vmatpush1.msra.mxu0 0.0
    %891 = vmatprep.subr.mxu0 0.0
    %892 = vmatpush1.msra.mxu0 0.0
    %893 = vmatprep.subr.mxu0 0.0
    %894 = vmatpush1.msra.mxu0 0.0
    %895 = vmatprep.subr.mxu0 0.0
    %896 = vmatpush1.msra.mxu0 0.0
    %897 = vmatprep.subr.mxu0 0.0
    %898 = vmatpush1.msra.mxu0 0.0
    %899 = vmatprep.subr.mxu0 0.0
    %900 = vmatpush1.msra.mxu0 0.0
    %901 = vmatprep.subr.mxu0 0.0
    %902 = vmatpush1.msra.mxu0 0.0
    %903 = vmatprep.subr.mxu0 0.0
    %904 = vmatpush1.msra.mxu0 0.0
    %905 = vmatprep.subr.mxu0 0.0
    %906 = vmatpush1.msra.mxu0 0.0
    %907 = vmatprep.subr.mxu0 0.0
    %908 = vmatpush1.msra.mxu0 0.0
    %909 = vmatprep.subr.mxu0 0.0
    %910 = vmatpush1.msra.mxu0 0.0
    %911 = vmatprep.subr.mxu0 0.0
    %912 = vmatpush1.msra.mxu0 0.0
    %913 = vmatprep.subr.mxu0 0.0
    %914 = vmatpush1.msra.mxu0 0.0
    %915 = vmatprep.subr.mxu0 0.0
    %916 = vmatpush1.msra.mxu0 0.0
    %917 = vmatprep.subr.mxu0 0.0
    %918 = vmatpush1.msra.mxu0 0.0
    %919 = vmatprep.subr.mxu0 0.0
    %920 = vmatpush1.msra.mxu0 0.0
    %921 = vmatprep.subr.mxu0 0.0
    %922 = vmatpush1.msra.mxu0 0.0
    %923 = vmatprep.subr.mxu0 0.0
    %924 = vmatpush1.msra.mxu0 0.0
    %925 = vmatprep.subr.mxu0 0.0
    %926 = vmatpush1.msra.mxu0 0.0
    %927 = vmatprep.subr.mxu0 0.0
    %928 = vmatpush1.msra.mxu0 0.0
    %929 = vmatprep.subr.mxu0 0.0
    %930 = vmatpush1.msra.mxu0 0.0
    %931 = vmatprep.subr.mxu0 0.0
    %932 = vmatpush1.msra.mxu0 0.0
    %933 = vmatprep.subr.mxu0 0.0
    %934 = vmatpush1.msra.mxu0 0.0
    %935 = vmatprep.subr.mxu0 0.0
    %936 = vmatpush1.msra.mxu0 0.0
    %937 = vmatprep.subr.mxu0 0.0
    %938 = vmatpush1.msra.mxu0 0.0
    %939 = vmatprep.subr.mxu0 0.0
    %940 = vmatpush1.msra.mxu0 0.0
    %941 = vmatprep.mubr.f32.mxu0 0.0
    %942 = vmatmul.mubr.f32.gmra.mrb[0].mxu0 %v875
    %v943 = vpop.f32.mrb[0].mxu0
    %v944 = vadd.f32 0.0, %v943
    %v945 = vpop.f32.mrb[0].mxu0
    %946 = vdwg.mxu0
    %v947 = vadd.f32 %v208, %v944
    %v948 = vxor.u32 %v947, 2147483648
    %v949 = vmul.f32 %v948, 1.442695
    %v950 = vpow.pop %v949
    %v951 = vadd.f32 %v950, 1.0
    %v952 = vrcp.pop %v951
    %v953 = vmul.f32 1.0, %v952
    %v954 = vtanh.pop %v947
    %v956 = vrot.slane %v859, 4
    %v958 = vmul.f32 %v953, %v956
    %960 = vrot.lane.b32.xlu0 %v954, 32
    %v961 = vpop.permute.xlu0 %960
    %v963 = vmul.f32 %v953, %v961
    %965 = vrot.lane.b32.xlu0 %v963, 32
    %v966 = vpop.permute.xlu0 %965
    %v968 = vadd.f32 %v958, %v966
    %v969 = vtanh.pop %v968
    %971 = vrot.lane.b32.xlu0 %v969, 32
    %v972 = vpop.permute.xlu0 %971
    %v974 = vmul.f32 %v953, %v972
    %976 = vset.pattern.permute.xlu0 0
    %977 = vperm.xlu0 %976, %v97
    %v978 = vpop.permute.xlu0 %977
    %v980 = vmul.f32 %v974, %v978
    %v981 = vadd.f32 %v870, %v980
    %983 = vrot.lane.b32.xlu0 %v974, 64
    %v984 = vpop.permute.xlu0 %983
    %v985 = vsel %vm113, %v984, 0
    %987 = vmatprep.subr.mxu0 0.0
    %988 = vmatpush1.msra.mxu0 %v102
    %989 = vmatprep.subr.mxu0 0.0
    %990 = vmatpush1.msra.mxu0 %v103
    %991 = vmatprep.subr.mxu0 0.0
    %992 = vmatpush1.msra.mxu0 %v104
    %993 = vmatprep.subr.mxu0 0.0
    %994 = vmatpush1.msra.mxu0 %v105
    %995 = vmatprep.subr.mxu0 0.0
    %996 = vmatpush1.msra.mxu0 0.0
    %997 = vmatprep.subr.mxu0 0.0
    %998 = vmatpush1.msra.mxu0 0.0
    %999 = vmatprep.subr.mxu0 0.0
    %1000 = vmatpush1.msra.mxu0 0.0
    %1001 = vmatprep.subr.mxu0 0.0
    %1002 = vmatpush1.msra.mxu0 0.0
    %1003 = vmatprep.subr.mxu0 0.0
    %1004 = vmatpush1.msra.mxu0 0.0
    %1005 = vmatprep.subr.mxu0 0.0
    %1006 = vmatpush1.msra.mxu0 0.0
    %1007 = vmatprep.subr.mxu0 0.0
    %1008 = vmatpush1.msra.mxu0 0.0
    %1009 = vmatprep.subr.mxu0 0.0
    %1010 = vmatpush1.msra.mxu0 0.0
    %1011 = vmatprep.subr.mxu0 0.0
    %1012 = vmatpush1.msra.mxu0 0.0
    %1013 = vmatprep.subr.mxu0 0.0
    %1014 = vmatpush1.msra.mxu0 0.0
    %1015 = vmatprep.subr.mxu0 0.0
    %1016 = vmatpush1.msra.mxu0 0.0
    %1017 = vmatprep.subr.mxu0 0.0
    %1018 = vmatpush1.msra.mxu0 0.0
    %1019 = vmatprep.subr.mxu0 0.0
    %1020 = vmatpush1.msra.mxu0 0.0
    %1021 = vmatprep.subr.mxu0 0.0
    %1022 = vmatpush1.msra.mxu0 0.0
    %1023 = vmatprep.subr.mxu0 0.0
    %1024 = vmatpush1.msra.mxu0 0.0
    %1025 = vmatprep.subr.mxu0 0.0
    %1026 = vmatpush1.msra.mxu0 0.0
    %1027 = vmatprep.subr.mxu0 0.0
    %1028 = vmatpush1.msra.mxu0 0.0
    %1029 = vmatprep.subr.mxu0 0.0
    %1030 = vmatpush1.msra.mxu0 0.0
    %1031 = vmatprep.subr.mxu0 0.0
    %1032 = vmatpush1.msra.mxu0 0.0
    %1033 = vmatprep.subr.mxu0 0.0
    %1034 = vmatpush1.msra.mxu0 0.0
    %1035 = vmatprep.subr.mxu0 0.0
    %1036 = vmatpush1.msra.mxu0 0.0
    %1037 = vmatprep.subr.mxu0 0.0
    %1038 = vmatpush1.msra.mxu0 0.0
    %1039 = vmatprep.subr.mxu0 0.0
    %1040 = vmatpush1.msra.mxu0 0.0
    %1041 = vmatprep.subr.mxu0 0.0
    %1042 = vmatpush1.msra.mxu0 0.0
    %1043 = vmatprep.subr.mxu0 0.0
    %1044 = vmatpush1.msra.mxu0 0.0
    %1045 = vmatprep.subr.mxu0 0.0
    %1046 = vmatpush1.msra.mxu0 0.0
    %1047 = vmatprep.subr.mxu0 0.0
    %1048 = vmatpush1.msra.mxu0 0.0
    %1049 = vmatprep.subr.mxu0 0.0
    %1050 = vmatpush1.msra.mxu0 0.0
    %1051 = vmatprep.mubr.f32.mxu0 0.0
    %1052 = vmatmul.mubr.f32.gmra.mrb[0].mxu0 %v985
    %v1053 = vpop.f32.mrb[0].mxu0
    %v1054 = vadd.f32 0.0, %v1053
    %v1055 = vpop.f32.mrb[0].mxu0
    %1056 = vdwg.mxu0
    %v1058 = vrot.slane %v1054, 4
    %v1060 = vadd.f32 %v208, %v1058
    %v1061 = vxor.u32 %v1060, 2147483648
    %v1062 = vmul.f32 %v1061, 1.442695
    %v1063 = vpow.pop %v1062
    %v1064 = vadd.f32 %v1063, 1.0
    %v1065 = vrcp.pop %v1064
    %v1066 = vmul.f32 1.0, %v1065
    %v1067 = vtanh.pop %v1060
    %v1069 = vrot.slane %v968, 4
    %v1071 = vmul.f32 %v1066, %v1069
    %1073 = vrot.lane.b32.xlu0 %v1067, 32
    %v1074 = vpop.permute.xlu0 %1073
    %v1076 = vmul.f32 %v1066, %v1074
    %1078 = vrot.lane.b32.xlu0 %v1076, 32
    %v1079 = vpop.permute.xlu0 %1078
    %v1081 = vadd.f32 %v1071, %v1079
    %v1082 = vtanh.pop %v1081
    %1084 = vrot.lane.b32.xlu0 %v1082, 32
    %v1085 = vpop.permute.xlu0 %1084
    %v1087 = vmul.f32 %v1066, %v1085
    %v1088 = vmul.f32 %v1087, %v978
    %v1090 = vrot.slane %v1088, 4
    %v1092 = vadd.f32 %v981, %v1090
    %vm1093 = vcmask 1043456
    %v1094 = vsel %vm1093, %v314, %v422
    %v1095 = vsel %vm1093, %v536, %v644
    %v1096 = vsel %vm1093, %v758, %v866
    %v1097 = vsel %vm1093, %v980, %v1088
    %v1098 = vld [vmem:[%s2] sm:$0xf]
    %1100 = vset.pattern.permute.xlu0 0
    %1101 = vperm.xlu0 %1100, %v1098
    %v1102 = vpop.permute.xlu0 %1101
    %v1104 = vmul.f32 %v1092, %v1102
    %v1105 = vld [vmem:[%s3] sm:$0xff]
    %v1106 = vld [vmem:[%s3 + $0x8] sm:$0xff]
    %v1107 = vld [vmem:[%s3 + $0x10] sm:$0xff]
    %v1108 = vld [vmem:[%s3 + $0x18] sm:$0xff]
    %v1109 = vld [vmem:[%s3 + $0x20] sm:$0xff]
    %v1110 = vld [vmem:[%s3 + $0x28] sm:$0xff]
    %v1111 = vld [vmem:[%s4] sm:$0xff]
    %v1112 = vld [vmem:[%s4 + $0x8] sm:$0xff]
    %v1113 = vld [vmem:[%s4 + $0x10] sm:$0xff]
    %v1114 = vld [vmem:[%s4 + $0x18] sm:$0xff]
    %v1115 = vld [vmem:[%s4 + $0x20] sm:$0xff]
    %v1116 = vld [vmem:[%s4 + $0x28] sm:$0xff]
    %v1117 = vld [vmem:[%s9] sm:$0xff]
    %v1118 = vld [vmem:[%s9 + $0x8] sm:$0xff]
    %v1119 = vld [vmem:[%s9 + $0x10] sm:$0xff]
    %v1120 = vld [vmem:[%s9 + $0x18] sm:$0xff]
    %v1121 = vld [vmem:[%s10] sm:$0xff]
    %v1122 = vld [vmem:[%s10 + $0x8] sm:$0xff]
    %v1123 = vld [vmem:[%s10 + $0x10] sm:$0xff]
    %v1124 = vld [vmem:[%s10 + $0x18] sm:$0xff]
    %v1125 = vld [vmem:[%s11] sm:$0x1]
    %v1127 = vlaneseq
    %v1128 = vshrl.u32 %v1127, 7
    %v1129 = vsub.s32 0, %v1128
    %v1130 = vrot.slane %v1125, %v1129
    %v1133 = vsel %vm113, %v1105, 0
    %v1136 = vsel %vm113, %v1106, 0
    %v1139 = vsel %vm113, %v1107, 0
    %v1142 = vsel %vm113, %v1108, 0
    %v1145 = vsel %vm113, %v1109, 0
    %v1148 = vsel %vm113, %v1110, 0
    %1150 = vmatprep.subr.mxu0 0.0
    %1151 = vmatpush1.msra.mxu0 %v1117
    %1152 = vmatprep.subr.mxu0 0.0
    %1153 = vmatpush1.msra.mxu0 %v1118
    %1154 = vmatprep.subr.mxu0 0.0
    %1155 = vmatpush1.msra.mxu0 %v1119
    %1156 = vmatprep.subr.mxu0 0.0
    %1157 = vmatpush1.msra.mxu0 %v1120
    %1158 = vmatprep.subr.mxu0 0.0
    %1159 = vmatpush1.msra.mxu0 0.0
    %1160 = vmatprep.subr.mxu0 0.0
    %1161 = vmatpush1.msra.mxu0 0.0
    %1162 = vmatprep.subr.mxu0 0.0
    %1163 = vmatpush1.msra.mxu0 0.0
    %1164 = vmatprep.subr.mxu0 0.0
    %1165 = vmatpush1.msra.mxu0 0.0
    %1166 = vmatprep.subr.mxu0 0.0
    %1167 = vmatpush1.msra.mxu0 0.0
    %1168 = vmatprep.subr.mxu0 0.0
    %1169 = vmatpush1.msra.mxu0 0.0
    %1170 = vmatprep.subr.mxu0 0.0
    %1171 = vmatpush1.msra.mxu0 0.0
    %1172 = vmatprep.subr.mxu0 0.0
    %1173 = vmatpush1.msra.mxu0 0.0
    %1174 = vmatprep.subr.mxu0 0.0
    %1175 = vmatpush1.msra.mxu0 0.0
    %1176 = vmatprep.subr.mxu0 0.0
    %1177 = vmatpush1.msra.mxu0 0.0
    %1178 = vmatprep.subr.mxu0 0.0
    %1179 = vmatpush1.msra.mxu0 0.0
    %1180 = vmatprep.subr.mxu0 0.0
    %1181 = vmatpush1.msra.mxu0 0.0
    %1182 = vmatprep.subr.mxu0 0.0
    %1183 = vmatpush1.msra.mxu0 0.0
    %1184 = vmatprep.subr.mxu0 0.0
    %1185 = vmatpush1.msra.mxu0 0.0
    %1186 = vmatprep.subr.mxu0 0.0
    %1187 = vmatpush1.msra.mxu0 0.0
    %1188 = vmatprep.subr.mxu0 0.0
    %1189 = vmatpush1.msra.mxu0 0.0
    %1190 = vmatprep.subr.mxu0 0.0
    %1191 = vmatpush1.msra.mxu0 0.0
    %1192 = vmatprep.subr.mxu0 0.0
    %1193 = vmatpush1.msra.mxu0 0.0
    %1194 = vmatprep.subr.mxu0 0.0
    %1195 = vmatpush1.msra.mxu0 0.0
    %1196 = vmatprep.subr.mxu0 0.0
    %1197 = vmatpush1.msra.mxu0 0.0
    %1198 = vmatprep.subr.mxu0 0.0
    %1199 = vmatpush1.msra.mxu0 0.0
    %1200 = vmatprep.subr.mxu0 0.0
    %1201 = vmatpush1.msra.mxu0 0.0
    %1202 = vmatprep.subr.mxu0 0.0
    %1203 = vmatpush1.msra.mxu0 0.0
    %1204 = vmatprep.subr.mxu0 0.0
    %1205 = vmatpush1.msra.mxu0 0.0
    %1206 = vmatprep.subr.mxu0 0.0
    %1207 = vmatpush1.msra.mxu0 0.0
    %1208 = vmatprep.subr.mxu0 0.0
    %1209 = vmatpush1.msra.mxu0 0.0
    %1210 = vmatprep.subr.mxu0 0.0
    %1211 = vmatpush1.msra.mxu0 0.0
    %1212 = vmatprep.subr.mxu0 0.0
    %1213 = vmatpush1.msra.mxu0 0.0
    %1214 = vmatprep.mubr.f32.mxu0 0.0
    %1215 = vmatmul.mubr.f32.gmra.mrb[0].mxu0 %v1133
    %v1216 = vpop.f32.mrb[0].mxu0
    %v1217 = vadd.f32 %v1130, %v1216
    %v1218 = vpop.f32.mrb[0].mxu0
    %1219 = vmatprep.mubr.f32.mxu0 0.0
    %1220 = vmatmul.mubr.f32.gmra.mrb[0].mxu0 %v1136
    %v1221 = vpop.f32.mrb[0].mxu0
    %v1222 = vadd.f32 %v1130, %v1221
    %v1223 = vpop.f32.mrb[0].mxu0
    %1224 = vmatprep.mubr.f32.mxu0 0.0
    %1225 = vmatmul.mubr.f32.gmra.mrb[0].mxu0 %v1139
    %v1226 = vpop.f32.mrb[0].mxu0
    %v1227 = vadd.f32 %v1130, %v1226
    %v1228 = vpop.f32.mrb[0].mxu0
    %1229 = vmatprep.mubr.f32.mxu0 0.0
    %1230 = vmatmul.mubr.f32.gmra.mrb[0].mxu0 %v1142
    %v1231 = vpop.f32.mrb[0].mxu0
    %v1232 = vadd.f32 %v1130, %v1231
    %v1233 = vpop.f32.mrb[0].mxu0
    %1234 = vmatprep.mubr.f32.mxu0 0.0
    %1235 = vmatmul.mubr.f32.gmra.mrb[0].mxu0 %v1145
    %v1236 = vpop.f32.mrb[0].mxu0
    %v1237 = vadd.f32 %v1130, %v1236
    %v1238 = vpop.f32.mrb[0].mxu0
    %1239 = vmatprep.mubr.f32.mxu0 0.0
    %1240 = vmatmul.mubr.f32.gmra.mrb[0].mxu0 %v1148
    %v1241 = vpop.f32.mrb[0].mxu0
    %v1242 = vadd.f32 %v1130, %v1241
    %v1243 = vpop.f32.mrb[0].mxu0
    %1244 = vdwg.mxu0
    %1245 = vmatprep.subr.mxu0 0.0
    %1246 = vmatpush1.msra.mxu0 %v1121
    %1247 = vmatprep.subr.mxu0 0.0
    %1248 = vmatpush1.msra.mxu0 %v1122
    %1249 = vmatprep.subr.mxu0 0.0
    %1250 = vmatpush1.msra.mxu0 %v1123
    %1251 = vmatprep.subr.mxu0 0.0
    %1252 = vmatpush1.msra.mxu0 %v1124
    %1253 = vmatprep.subr.mxu0 0.0
    %1254 = vmatpush1.msra.mxu0 0.0
    %1255 = vmatprep.subr.mxu0 0.0
    %1256 = vmatpush1.msra.mxu0 0.0
    %1257 = vmatprep.subr.mxu0 0.0
    %1258 = vmatpush1.msra.mxu0 0.0
    %1259 = vmatprep.subr.mxu0 0.0
    %1260 = vmatpush1.msra.mxu0 0.0
    %1261 = vmatprep.subr.mxu0 0.0
    %1262 = vmatpush1.msra.mxu0 0.0
    %1263 = vmatprep.subr.mxu0 0.0
    %1264 = vmatpush1.msra.mxu0 0.0
    %1265 = vmatprep.subr.mxu0 0.0
    %1266 = vmatpush1.msra.mxu0 0.0
    %1267 = vmatprep.subr.mxu0 0.0
    %1268 = vmatpush1.msra.mxu0 0.0
    %1269 = vmatprep.subr.mxu0 0.0
    %1270 = vmatpush1.msra.mxu0 0.0
    %1271 = vmatprep.subr.mxu0 0.0
    %1272 = vmatpush1.msra.mxu0 0.0
    %1273 = vmatprep.subr.mxu0 0.0
    %1274 = vmatpush1.msra.mxu0 0.0
    %1275 = vmatprep.subr.mxu0 0.0
    %1276 = vmatpush1.msra.mxu0 0.0
    %1277 = vmatprep.subr.mxu0 0.0
    %1278 = vmatpush1.msra.mxu0 0.0
    %1279 = vmatprep.subr.mxu0 0.0
    %1280 = vmatpush1.msra.mxu0 0.0
    %1281 = vmatprep.subr.mxu0 0.0
    %1282 = vmatpush1.msra.mxu0 0.0
    %1283 = vmatprep.subr.mxu0 0.0
    %1284 = vmatpush1.msra.mxu0 0.0
    %1285 = vmatprep.subr.mxu0 0.0
    %1286 = vmatpush1.msra.mxu0 0.0
    %1287 = vmatprep.subr.mxu0 0.0
    %1288 = vmatpush1.msra.mxu0 0.0
    %1289 = vmatprep.subr.mxu0 0.0
    %1290 = vmatpush1.msra.mxu0 0.0
    %1291 = vmatprep.subr.mxu0 0.0
    %1292 = vmatpush1.msra.mxu0 0.0
    %1293 = vmatprep.subr.mxu0 0.0
    %1294 = vmatpush1.msra.mxu0 0.0
    %1295 = vmatprep.subr.mxu0 0.0
    %1296 = vmatpush1.msra.mxu0 0.0
    %1297 = vmatprep.subr.mxu0 0.0
    %1298 = vmatpush1.msra.mxu0 0.0
    %1299 = vmatprep.subr.mxu0 0.0
    %1300 = vmatpush1.msra.mxu0 0.0
    %1301 = vmatprep.subr.mxu0 0.0
    %1302 = vmatpush1.msra.mxu0 0.0
    %1303 = vmatprep.subr.mxu0 0.0
    %1304 = vmatpush1.msra.mxu0 0.0
    %1305 = vmatprep.subr.mxu0 0.0
    %1306 = vmatpush1.msra.mxu0 0.0
    %1307 = vmatprep.subr.mxu0 0.0
    %1308 = vmatpush1.msra.mxu0 0.0
    %1309 = vmatprep.mubr.f32.mxu0 0.0
    %1310 = vmatmul.mubr.f32.gmra.mrb[0].mxu0 %v212
    %v1311 = vpop.f32.mrb[0].mxu0
    %v1312 = vadd.f32 0.0, %v1311
    %v1313 = vpop.f32.mrb[0].mxu0
    %1314 = vmatprep.mubr.f32.mxu0 0.0
    %1315 = vmatmul.mubr.f32.gmra.mrb[0].mxu0 %v212
    %v1316 = vpop.f32.mrb[0].mxu0
    %v1317 = vadd.f32 0.0, %v1316
    %v1318 = vpop.f32.mrb[0].mxu0
    %1319 = vdwg.mxu0
    %v1320 = vadd.f32 %v1217, %v1312
    %v1321 = vadd.f32 %v1222, %v1317
    %v1322 = vxor.u32 %v1320, 2147483648
    %v1323 = vxor.u32 %v1321, 2147483648
    %v1324 = vmul.f32 %v1322, 1.442695
    %v1325 = vpow.pop %v1324
    %v1326 = vmul.f32 %v1323, 1.442695
    %v1327 = vpow.pop %v1326
    %v1328 = vadd.f32 %v1325, 1.0
    %v1329 = vadd.f32 %v1327, 1.0
    %v1330 = vrcp.pop %v1328
    %v1331 = vmul.f32 1.0, %v1330
    %v1332 = vrcp.pop %v1329
    %v1333 = vmul.f32 1.0, %v1332
    %v1334 = vtanh.pop %v1320
    %v1335 = vtanh.pop %v1321
    %v1336 = vmul.f32 %v1331, 0.0
    %v1337 = vmul.f32 %v1333, 0.0
    %1340 = vrot.lane.b32.xlu0 %v1334, 32
    %v1341 = vpop.permute.xlu0 %1340
    %1342 = vrot.lane.b32.xlu0 %v1335, 32
    %v1343 = vpop.permute.xlu0 %1342
    %v1346 = vmul.f32 %v1331, %v1341
    %v1347 = vmul.f32 %v1333, %v1343
    %1350 = vrot.lane.b32.xlu0 %v1346, 32
    %v1351 = vpop.permute.xlu0 %1350
    %1352 = vrot.lane.b32.xlu0 %v1347, 32
    %v1353 = vpop.permute.xlu0 %1352
    %v1356 = vadd.f32 %v1336, %v1351
    %v1357 = vadd.f32 %v1337, %v1353
    %v1358 = vtanh.pop %v1356
    %v1359 = vtanh.pop %v1357
    %1362 = vrot.lane.b32.xlu0 %v1358, 32
    %v1363 = vpop.permute.xlu0 %1362
    %1364 = vrot.lane.b32.xlu0 %v1359, 32
    %v1365 = vpop.permute.xlu0 %1364
    %v1368 = vmul.f32 %v1331, %v1363
    %v1369 = vmul.f32 %v1333, %v1365
    %1371 = vset.pattern.permute.xlu0 0
    %1372 = vperm.xlu0 %1371, %v1111
    %v1373 = vpop.permute.xlu0 %1372
    %1376 = vset.pattern.permute.xlu0 0
    %1377 = vperm.xlu0 %1376, %v1112
    %v1378 = vpop.permute.xlu0 %1377
    %v1380 = vmul.f32 %v1368, %v1373
    %v1381 = vmul.f32 %v1369, %v1378
    %v1382 = vadd.f32 %v1380, 0.0
    %v1383 = vadd.f32 %v1381, 0.0
    %1386 = vrot.lane.b32.xlu0 %v1368, 64
    %v1387 = vpop.permute.xlu0 %1386
    %1388 = vrot.lane.b32.xlu0 %v1369, 64
    %v1389 = vpop.permute.xlu0 %1388
    %v1390 = vsel %vm113, %v1387, 0
    %v1392 = vsel %vm113, %v1389, 0
    %1394 = vmatprep.subr.mxu0 0.0
    %1395 = vmatpush1.msra.mxu0 %v1121
    %1396 = vmatprep.subr.mxu0 0.0
    %1397 = vmatpush1.msra.mxu0 %v1122
    %1398 = vmatprep.subr.mxu0 0.0
    %1399 = vmatpush1.msra.mxu0 %v1123
    %1400 = vmatprep.subr.mxu0 0.0
    %1401 = vmatpush1.msra.mxu0 %v1124
    %1402 = vmatprep.subr.mxu0 0.0
    %1403 = vmatpush1.msra.mxu0 0.0
    %1404 = vmatprep.subr.mxu0 0.0
    %1405 = vmatpush1.msra.mxu0 0.0
    %1406 = vmatprep.subr.mxu0 0.0
    %1407 = vmatpush1.msra.mxu0 0.0
    %1408 = vmatprep.subr.mxu0 0.0
    %1409 = vmatpush1.msra.mxu0 0.0
    %1410 = vmatprep.subr.mxu0 0.0
    %1411 = vmatpush1.msra.mxu0 0.0
    %1412 = vmatprep.subr.mxu0 0.0
    %1413 = vmatpush1.msra.mxu0 0.0
    %1414 = vmatprep.subr.mxu0 0.0
    %1415 = vmatpush1.msra.mxu0 0.0
    %1416 = vmatprep.subr.mxu0 0.0
    %1417 = vmatpush1.msra.mxu0 0.0
    %1418 = vmatprep.subr.mxu0 0.0
    %1419 = vmatpush1.msra.mxu0 0.0
    %1420 = vmatprep.subr.mxu0 0.0
    %1421 = vmatpush1.msra.mxu0 0.0
    %1422 = vmatprep.subr.mxu0 0.0
    %1423 = vmatpush1.msra.mxu0 0.0
    %1424 = vmatprep.subr.mxu0 0.0
    %1425 = vmatpush1.msra.mxu0 0.0
    %1426 = vmatprep.subr.mxu0 0.0
    %1427 = vmatpush1.msra.mxu0 0.0
    %1428 = vmatprep.subr.mxu0 0.0
    %1429 = vmatpush1.msra.mxu0 0.0
    %1430 = vmatprep.subr.mxu0 0.0
    %1431 = vmatpush1.msra.mxu0 0.0
    %1432 = vmatprep.subr.mxu0 0.0
    %1433 = vmatpush1.msra.mxu0 0.0
    %1434 = vmatprep.subr.mxu0 0.0
    %1435 = vmatpush1.msra.mxu0 0.0
    %1436 = vmatprep.subr.mxu0 0.0
    %1437 = vmatpush1.msra.mxu0 0.0
    %1438 = vmatprep.subr.mxu0 0.0
    %1439 = vmatpush1.msra.mxu0 0.0
    %1440 = vmatprep.subr.mxu0 0.0
    %1441 = vmatpush1.msra.mxu0 0.0
    %1442 = vmatprep.subr.mxu0 0.0
    %1443 = vmatpush1.msra.mxu0 0.0
    %1444 = vmatprep.subr.mxu0 0.0
    %1445 = vmatpush1.msra.mxu0 0.0
    %1446 = vmatprep.subr.mxu0 0.0
    %1447 = vmatpush1.msra.mxu0 0.0
    %1448 = vmatprep.subr.mxu0 0.0
    %1449 = vmatpush1.msra.mxu0 0.0
    %1450 = vmatprep.subr.mxu0 0.0
    %1451 = vmatpush1.msra.mxu0 0.0
    %1452 = vmatprep.subr.mxu0 0.0
    %1453 = vmatpush1.msra.mxu0 0.0
    %1454 = vmatprep.subr.mxu0 0.0
    %1455 = vmatpush1.msra.mxu0 0.0
    %1456 = vmatprep.subr.mxu0 0.0
    %1457 = vmatpush1.msra.mxu0 0.0
    %1458 = vmatprep.mubr.f32.mxu0 0.0
    %1459 = vmatmul.mubr.f32.gmra.mrb[0].mxu0 %v1390
    %v1460 = vpop.f32.mrb[0].mxu0
    %v1461 = vadd.f32 0.0, %v1460
    %v1462 = vpop.f32.mrb[0].mxu0
    %1463 = vmatprep.mubr.f32.mxu0 0.0
    %1464 = vmatmul.mubr.f32.gmra.mrb[0].mxu0 %v1392
    %v1465 = vpop.f32.mrb[0].mxu0
    %v1466 = vadd.f32 0.0, %v1465
    %v1467 = vpop.f32.mrb[0].mxu0
    %1468 = vdwg.mxu0
    %v1471 = vrot.slane %v1461, 4
    %v1472 = vrot.slane %v1466, 4
    %v1473 = vsel %vm1093, %v1471, %v1472
    %v1476 = vadd.f32 %v1222, %v1471
    %v1477 = vadd.f32 %v1227, %v1473
    %v1478 = vxor.u32 %v1476, 2147483648
    %v1479 = vxor.u32 %v1477, 2147483648
    %v1480 = vmul.f32 %v1478, 1.442695
    %v1481 = vpow.pop %v1480
    %v1482 = vmul.f32 %v1479, 1.442695
    %v1483 = vpow.pop %v1482
    %v1484 = vadd.f32 %v1481, 1.0
    %v1485 = vadd.f32 %v1483, 1.0
    %v1486 = vrcp.pop %v1484
    %v1487 = vmul.f32 1.0, %v1486
    %v1488 = vrcp.pop %v1485
    %v1489 = vmul.f32 1.0, %v1488
    %v1490 = vtanh.pop %v1476
    %v1491 = vtanh.pop %v1477
    %v1494 = vrot.slane %v1356, 4
    %v1495 = vrot.slane %v1357, 4
    %v1496 = vsel %vm1093, %v1494, %v1495
    %v1499 = vmul.f32 %v1487, %v1494
    %v1500 = vmul.f32 %v1489, %v1496
    %1503 = vrot.lane.b32.xlu0 %v1490, 32
    %v1504 = vpop.permute.xlu0 %1503
    %1505 = vrot.lane.b32.xlu0 %v1491, 32
    %v1506 = vpop.permute.xlu0 %1505
    %v1509 = vmul.f32 %v1487, %v1504
    %v1510 = vmul.f32 %v1489, %v1506
    %1513 = vrot.lane.b32.xlu0 %v1509, 32
    %v1514 = vpop.permute.xlu0 %1513
    %1515 = vrot.lane.b32.xlu0 %v1510, 32
    %v1516 = vpop.permute.xlu0 %1515
    %v1519 = vadd.f32 %v1499, %v1514
    %v1520 = vadd.f32 %v1500, %v1516
    %v1521 = vtanh.pop %v1519
    %v1522 = vtanh.pop %v1520
    %1525 = vrot.lane.b32.xlu0 %v1521, 32
    %v1526 = vpop.permute.xlu0 %1525
    %1527 = vrot.lane.b32.xlu0 %v1522, 32
    %v1528 = vpop.permute.xlu0 %1527
    %v1531 = vmul.f32 %v1487, %v1526
    %v1532 = vmul.f32 %v1489, %v1528
    %1534 = vset.pattern.permute.xlu0 0
    %1535 = vperm.xlu0 %1534, %v1113
    %v1536 = vpop.permute.xlu0 %1535
    %v1538 = vmul.f32 %v1531, %v1378
    %v1539 = vmul.f32 %v1532, %v1536
    %v1542 = vrot.slane %v1538, 4
    %v1543 = vrot.slane %v1539, 4
    %v1544 = vsel %vm1093, %v1542, %v1543
    %v1547 = vadd.f32 %v1382, %v1544
    %v1548 = vadd.f32 %v1383, %v1543
    %v1551 = vrot.slane %v1531, 4
    %v1552 = vrot.slane %v1532, 4
    %v1553 = vsel %vm1093, %v1551, %v1552
    %1554 = vrot.lane.b32.xlu0 %v1553, 64
    %v1555 = vpop.permute.xlu0 %1554
    %1556 = vrot.lane.b32.xlu0 %v1552, 64
    %v1557 = vpop.permute.xlu0 %1556
    %v1558 = vsel %vm113, %v1555, 0
    %v1560 = vsel %vm113, %v1557, 0
    %1562 = vmatprep.subr.mxu0 0.0
    %1563 = vmatpush1.msra.mxu0 %v1121
    %1564 = vmatprep.subr.mxu0 0.0
    %1565 = vmatpush1.msra.mxu0 %v1122
    %1566 = vmatprep.subr.mxu0 0.0
    %1567 = vmatpush1.msra.mxu0 %v1123
    %1568 = vmatprep.subr.mxu0 0.0
    %1569 = vmatpush1.msra.mxu0 %v1124
    %1570 = vmatprep.subr.mxu0 0.0
    %1571 = vmatpush1.msra.mxu0 0.0
    %1572 = vmatprep.subr.mxu0 0.0
    %1573 = vmatpush1.msra.mxu0 0.0
    %1574 = vmatprep.subr.mxu0 0.0
    %1575 = vmatpush1.msra.mxu0 0.0
    %1576 = vmatprep.subr.mxu0 0.0
    %1577 = vmatpush1.msra.mxu0 0.0
    %1578 = vmatprep.subr.mxu0 0.0
    %1579 = vmatpush1.msra.mxu0 0.0
    %1580 = vmatprep.subr.mxu0 0.0
    %1581 = vmatpush1.msra.mxu0 0.0
    %1582 = vmatprep.subr.mxu0 0.0
    %1583 = vmatpush1.msra.mxu0 0.0
    %1584 = vmatprep.subr.mxu0 0.0
    %1585 = vmatpush1.msra.mxu0 0.0
    %1586 = vmatprep.subr.mxu0 0.0
    %1587 = vmatpush1.msra.mxu0 0.0
    %1588 = vmatprep.subr.mxu0 0.0
    %1589 = vmatpush1.msra.mxu0 0.0
    %1590 = vmatprep.subr.mxu0 0.0
    %1591 = vmatpush1.msra.mxu0 0.0
    %1592 = vmatprep.subr.mxu0 0.0
    %1593 = vmatpush1.msra.mxu0 0.0
    %1594 = vmatprep.subr.mxu0 0.0
    %1595 = vmatpush1.msra.mxu0 0.0
    %1596 = vmatprep.subr.mxu0 0.0
    %1597 = vmatpush1.msra.mxu0 0.0
    %1598 = vmatprep.subr.mxu0 0.0
    %1599 = vmatpush1.msra.mxu0 0.0
    %1600 = vmatprep.subr.mxu0 0.0
    %1601 = vmatpush1.msra.mxu0 0.0
    %1602 = vmatprep.subr.mxu0 0.0
    %1603 = vmatpush1.msra.mxu0 0.0
    %1604 = vmatprep.subr.mxu0 0.0
    %1605 = vmatpush1.msra.mxu0 0.0
    %1606 = vmatprep.subr.mxu0 0.0
    %1607 = vmatpush1.msra.mxu0 0.0
    %1608 = vmatprep.subr.mxu0 0.0
    %1609 = vmatpush1.msra.mxu0 0.0
    %1610 = vmatprep.subr.mxu0 0.0
    %1611 = vmatpush1.msra.mxu0 0.0
    %1612 = vmatprep.subr.mxu0 0.0
    %1613 = vmatpush1.msra.mxu0 0.0
    %1614 = vmatprep.subr.mxu0 0.0
    %1615 = vmatpush1.msra.mxu0 0.0
    %1616 = vmatprep.subr.mxu0 0.0
    %1617 = vmatpush1.msra.mxu0 0.0
    %1618 = vmatprep.subr.mxu0 0.0
    %1619 = vmatpush1.msra.mxu0 0.0
    %1620 = vmatprep.subr.mxu0 0.0
    %1621 = vmatpush1.msra.mxu0 0.0
    %1622 = vmatprep.subr.mxu0 0.0
    %1623 = vmatpush1.msra.mxu0 0.0
    %1624 = vmatprep.subr.mxu0 0.0
    %1625 = vmatpush1.msra.mxu0 0.0
    %1626 = vmatprep.mubr.f32.mxu0 0.0
    %1627 = vmatmul.mubr.f32.gmra.mrb[0].mxu0 %v1558
    %v1628 = vpop.f32.mrb[0].mxu0
    %v1629 = vadd.f32 0.0, %v1628
    %v1630 = vpop.f32.mrb[0].mxu0
    %1631 = vmatprep.mubr.f32.mxu0 0.0
    %1632 = vmatmul.mubr.f32.gmra.mrb[0].mxu0 %v1560
    %v1633 = vpop.f32.mrb[0].mxu0
    %v1634 = vadd.f32 0.0, %v1633
    %v1635 = vpop.f32.mrb[0].mxu0
    %1636 = vdwg.mxu0
    %v1637 = vadd.f32 %v1232, %v1629
    %v1638 = vadd.f32 %v1237, %v1634
    %v1639 = vxor.u32 %v1637, 2147483648
    %v1640 = vxor.u32 %v1638, 2147483648
    %v1641 = vmul.f32 %v1639, 1.442695
    %v1642 = vpow.pop %v1641
    %v1643 = vmul.f32 %v1640, 1.442695
    %v1644 = vpow.pop %v1643
    %v1645 = vadd.f32 %v1642, 1.0
    %v1646 = vadd.f32 %v1644, 1.0
    %v1647 = vrcp.pop %v1645
    %v1648 = vmul.f32 1.0, %v1647
    %v1649 = vrcp.pop %v1646
    %v1650 = vmul.f32 1.0, %v1649
    %v1651 = vtanh.pop %v1637
    %v1652 = vtanh.pop %v1638
    %v1655 = vrot.slane %v1519, 4
    %v1656 = vrot.slane %v1520, 4
    %v1657 = vsel %vm1093, %v1655, %v1656
    %v1660 = vmul.f32 %v1648, %v1657
    %v1661 = vmul.f32 %v1650, %v1656
    %1664 = vrot.lane.b32.xlu0 %v1651, 32
    %v1665 = vpop.permute.xlu0 %1664
    %1666 = vrot.lane.b32.xlu0 %v1652, 32
    %v1667 = vpop.permute.xlu0 %1666
    %v1670 = vmul.f32 %v1648, %v1665
    %v1671 = vmul.f32 %v1650, %v1667
    %1674 = vrot.lane.b32.xlu0 %v1670, 32
    %v1675 = vpop.permute.xlu0 %1674
    %1676 = vrot.lane.b32.xlu0 %v1671, 32
    %v1677 = vpop.permute.xlu0 %1676
    %v1680 = vadd.f32 %v1660, %v1675
    %v1681 = vadd.f32 %v1661, %v1677
    %v1682 = vtanh.pop %v1680
    %v1683 = vtanh.pop %v1681
    %1686 = vrot.lane.b32.xlu0 %v1682, 32
    %v1687 = vpop.permute.xlu0 %1686
    %1688 = vrot.lane.b32.xlu0 %v1683, 32
    %v1689 = vpop.permute.xlu0 %1688
    %v1692 = vmul.f32 %v1648, %v1687
    %v1693 = vmul.f32 %v1650, %v1689
    %1695 = vset.pattern.permute.xlu0 0
    %1696 = vperm.xlu0 %1695, %v1114
    %v1697 = vpop.permute.xlu0 %1696
    %1700 = vset.pattern.permute.xlu0 0
    %1701 = vperm.xlu0 %1700, %v1115
    %v1702 = vpop.permute.xlu0 %1701
    %v1704 = vmul.f32 %v1692, %v1697
    %v1705 = vmul.f32 %v1693, %v1702
    %v1706 = vadd.f32 %v1547, %v1704
    %v1707 = vadd.f32 %v1548, %v1705
    %1710 = vrot.lane.b32.xlu0 %v1692, 64
    %v1711 = vpop.permute.xlu0 %1710
    %1712 = vrot.lane.b32.xlu0 %v1693, 64
    %v1713 = vpop.permute.xlu0 %1712
    %v1714 = vsel %vm113, %v1711, 0
    %v1716 = vsel %vm113, %v1713, 0
    %1718 = vmatprep.subr.mxu0 0.0
    %1719 = vmatpush1.msra.mxu0 %v1121
    %1720 = vmatprep.subr.mxu0 0.0
    %1721 = vmatpush1.msra.mxu0 %v1122
    %1722 = vmatprep.subr.mxu0 0.0
    %1723 = vmatpush1.msra.mxu0 %v1123
    %1724 = vmatprep.subr.mxu0 0.0
    %1725 = vmatpush1.msra.mxu0 %v1124
    %1726 = vmatprep.subr.mxu0 0.0
    %1727 = vmatpush1.msra.mxu0 0.0
    %1728 = vmatprep.subr.mxu0 0.0
    %1729 = vmatpush1.msra.mxu0 0.0
    %1730 = vmatprep.subr.mxu0 0.0
    %1731 = vmatpush1.msra.mxu0 0.0
    %1732 = vmatprep.subr.mxu0 0.0
    %1733 = vmatpush1.msra.mxu0 0.0
    %1734 = vmatprep.subr.mxu0 0.0
    %1735 = vmatpush1.msra.mxu0 0.0
    %1736 = vmatprep.subr.mxu0 0.0
    %1737 = vmatpush1.msra.mxu0 0.0
    %1738 = vmatprep.subr.mxu0 0.0
    %1739 = vmatpush1.msra.mxu0 0.0
    %1740 = vmatprep.subr.mxu0 0.0
    %1741 = vmatpush1.msra.mxu0 0.0
    %1742 = vmatprep.subr.mxu0 0.0
    %1743 = vmatpush1.msra.mxu0 0.0
    %1744 = vmatprep.subr.mxu0 0.0
    %1745 = vmatpush1.msra.mxu0 0.0
    %1746 = vmatprep.subr.mxu0 0.0
    %1747 = vmatpush1.msra.mxu0 0.0
    %1748 = vmatprep.subr.mxu0 0.0
    %1749 = vmatpush1.msra.mxu0 0.0
    %1750 = vmatprep.subr.mxu0 0.0
    %1751 = vmatpush1.msra.mxu0 0.0
    %1752 = vmatprep.subr.mxu0 0.0
    %1753 = vmatpush1.msra.mxu0 0.0
    %1754 = vmatprep.subr.mxu0 0.0
    %1755 = vmatpush1.msra.mxu0 0.0
    %1756 = vmatprep.subr.mxu0 0.0
    %1757 = vmatpush1.msra.mxu0 0.0
    %1758 = vmatprep.subr.mxu0 0.0
    %1759 = vmatpush1.msra.mxu0 0.0
    %1760 = vmatprep.subr.mxu0 0.0
    %1761 = vmatpush1.msra.mxu0 0.0
    %1762 = vmatprep.subr.mxu0 0.0
    %1763 = vmatpush1.msra.mxu0 0.0
    %1764 = vmatprep.subr.mxu0 0.0
    %1765 = vmatpush1.msra.mxu0 0.0
    %1766 = vmatprep.subr.mxu0 0.0
    %1767 = vmatpush1.msra.mxu0 0.0
    %1768 = vmatprep.subr.mxu0 0.0
    %1769 = vmatpush1.msra.mxu0 0.0
    %1770 = vmatprep.subr.mxu0 0.0
    %1771 = vmatpush1.msra.mxu0 0.0
    %1772 = vmatprep.subr.mxu0 0.0
    %1773 = vmatpush1.msra.mxu0 0.0
    %1774 = vmatprep.subr.mxu0 0.0
    %1775 = vmatpush1.msra.mxu0 0.0
    %1776 = vmatprep.subr.mxu0 0.0
    %1777 = vmatpush1.msra.mxu0 0.0
    %1778 = vmatprep.subr.mxu0 0.0
    %1779 = vmatpush1.msra.mxu0 0.0
    %1780 = vmatprep.subr.mxu0 0.0
    %1781 = vmatpush1.msra.mxu0 0.0
    %1782 = vmatprep.mubr.f32.mxu0 0.0
    %1783 = vmatmul.mubr.f32.gmra.mrb[0].mxu0 %v1714
    %v1784 = vpop.f32.mrb[0].mxu0
    %v1785 = vadd.f32 0.0, %v1784
    %v1786 = vpop.f32.mrb[0].mxu0
    %1787 = vmatprep.mubr.f32.mxu0 0.0
    %1788 = vmatmul.mubr.f32.gmra.mrb[0].mxu0 %v1716
    %v1789 = vpop.f32.mrb[0].mxu0
    %v1790 = vadd.f32 0.0, %v1789
    %v1791 = vpop.f32.mrb[0].mxu0
    %1792 = vdwg.mxu0
    %v1795 = vrot.slane %v1785, 4
    %v1796 = vrot.slane %v1790, 4
    %v1797 = vsel %vm1093, %v1795, %v1796
    %v1800 = vadd.f32 %v1237, %v1795
    %v1801 = vadd.f32 %v1242, %v1797
    %v1802 = vxor.u32 %v1800, 2147483648
    %v1803 = vxor.u32 %v1801, 2147483648
    %v1804 = vmul.f32 %v1802, 1.442695
    %v1805 = vpow.pop %v1804
    %v1806 = vmul.f32 %v1803, 1.442695
    %v1807 = vpow.pop %v1806
    %v1808 = vadd.f32 %v1805, 1.0
    %v1809 = vadd.f32 %v1807, 1.0
    %v1810 = vrcp.pop %v1808
    %v1811 = vmul.f32 1.0, %v1810
    %v1812 = vrcp.pop %v1809
    %v1813 = vmul.f32 1.0, %v1812
    %v1814 = vtanh.pop %v1800
    %v1815 = vtanh.pop %v1801
    %v1818 = vrot.slane %v1680, 4
    %v1819 = vrot.slane %v1681, 4
    %v1820 = vsel %vm1093, %v1818, %v1819
    %v1823 = vmul.f32 %v1811, %v1818
    %v1824 = vmul.f32 %v1813, %v1820
    %1827 = vrot.lane.b32.xlu0 %v1814, 32
    %v1828 = vpop.permute.xlu0 %1827
    %1829 = vrot.lane.b32.xlu0 %v1815, 32
    %v1830 = vpop.permute.xlu0 %1829
    %v1833 = vmul.f32 %v1811, %v1828
    %v1834 = vmul.f32 %v1813, %v1830
    %1837 = vrot.lane.b32.xlu0 %v1833, 32
    %v1838 = vpop.permute.xlu0 %1837
    %1839 = vrot.lane.b32.xlu0 %v1834, 32
    %v1840 = vpop.permute.xlu0 %1839
    %v1843 = vadd.f32 %v1823, %v1838
    %v1844 = vadd.f32 %v1824, %v1840
    %v1845 = vtanh.pop %v1843
    %v1846 = vtanh.pop %v1844
    %1849 = vrot.lane.b32.xlu0 %v1845, 32
    %v1850 = vpop.permute.xlu0 %1849
    %1851 = vrot.lane.b32.xlu0 %v1846, 32
    %v1852 = vpop.permute.xlu0 %1851
    %v1855 = vmul.f32 %v1811, %v1850
    %v1856 = vmul.f32 %v1813, %v1852
    %1858 = vset.pattern.permute.xlu0 0
    %1859 = vperm.xlu0 %1858, %v1116
    %v1860 = vpop.permute.xlu0 %1859
    %v1862 = vmul.f32 %v1855, %v1702
    %v1863 = vmul.f32 %v1856, %v1860
    %v1866 = vrot.slane %v1862, 4
    %v1867 = vrot.slane %v1863, 4
    %v1868 = vsel %vm1093, %v1866, %v1867
    %v1871 = vadd.f32 %v1706, %v1868
    %v1872 = vadd.f32 %v1707, %v1867
    %v1873 = vsel %vm1093, %v1381, %v1538
    %v1874 = vsel %vm1093, %v1705, %v1862
    %v1875 = vld [vmem:[%s5] sm:$0xff]
    %v1876 = vld [vmem:[%s5 + $0x8] sm:$0xf]
    %1878 = vset.pattern.permute.xlu0 0
    %1879 = vperm.xlu0 %1878, %v1875
    %v1880 = vpop.permute.xlu0 %1879
    %1883 = vset.pattern.permute.xlu0 0
    %1884 = vperm.xlu0 %1883, %v1876
    %v1885 = vpop.permute.xlu0 %1884
    %v1887 = vmul.f32 %v1871, %v1880
    %v1888 = vmul.f32 %v1872, %v1885
    %v1889 = vld [vmem:[%s12] sm:$0xff]
    %v1890 = vld [vmem:[%s12 + $0x8] sm:$0xff]
    %v1891 = vld [vmem:[%s12 + $0x10] sm:$0xff]
    %v1892 = vld [vmem:[%s12 + $0x18] sm:$0xff]
    %v1893 = vld [vmem:[%s13] sm:$0x1]
    %v1895 = vlaneseq
    %v1896 = vshrl.u32 %v1895, 7
    %v1897 = vsub.s32 0, %v1896
    %v1898 = vrot.slane %v1893, %v1897
    %1904 = vrot.lane.b32.xlu0 %v1380, 64
    %v1905 = vpop.permute.xlu0 %1904
    %1906 = vrot.lane.b32.xlu0 %v1873, 64
    %v1907 = vpop.permute.xlu0 %1906
    %1908 = vrot.lane.b32.xlu0 %v1539, 64
    %v1909 = vpop.permute.xlu0 %1908
    %1910 = vrot.lane.b32.xlu0 %v1704, 64
    %v1911 = vpop.permute.xlu0 %1910
    %1912 = vrot.lane.b32.xlu0 %v1874, 64
    %v1913 = vpop.permute.xlu0 %1912
    %1914 = vrot.lane.b32.xlu0 %v1863, 64
    %v1915 = vpop.permute.xlu0 %1914
    %v1916 = vsel %vm113, %v1905, 0
    %v1918 = vsel %vm113, %v1907, 0
    %v1920 = vsel %vm113, %v1909, 0
    %v1922 = vsel %vm113, %v1911, 0
    %v1924 = vsel %vm113, %v1913, 0
    %v1926 = vsel %vm113, %v1915, 0
    %1928 = vmatprep.subr.mxu0 0.0
    %1929 = vmatpush1.msra.mxu0 %v1889
    %1930 = vmatprep.subr.mxu0 0.0
    %1931 = vmatpush1.msra.mxu0 %v1890
    %1932 = vmatprep.subr.mxu0 0.0
    %1933 = vmatpush1.msra.mxu0 %v1891
    %1934 = vmatprep.subr.mxu0 0.0
    %1935 = vmatpush1.msra.mxu0 %v1892
    %1936 = vmatprep.subr.mxu0 0.0
    %1937 = vmatpush1.msra.mxu0 0.0
    %1938 = vmatprep.subr.mxu0 0.0
    %1939 = vmatpush1.msra.mxu0 0.0
    %1940 = vmatprep.subr.mxu0 0.0
    %1941 = vmatpush1.msra.mxu0 0.0
    %1942 = vmatprep.subr.mxu0 0.0
    %1943 = vmatpush1.msra.mxu0 0.0
    %1944 = vmatprep.subr.mxu0 0.0
    %1945 = vmatpush1.msra.mxu0 0.0
    %1946 = vmatprep.subr.mxu0 0.0
    %1947 = vmatpush1.msra.mxu0 0.0
    %1948 = vmatprep.subr.mxu0 0.0
    %1949 = vmatpush1.msra.mxu0 0.0
    %1950 = vmatprep.subr.mxu0 0.0
    %1951 = vmatpush1.msra.mxu0 0.0
    %1952 = vmatprep.subr.mxu0 0.0
    %1953 = vmatpush1.msra.mxu0 0.0
    %1954 = vmatprep.subr.mxu0 0.0
    %1955 = vmatpush1.msra.mxu0 0.0
    %1956 = vmatprep.subr.mxu0 0.0
    %1957 = vmatpush1.msra.mxu0 0.0
    %1958 = vmatprep.subr.mxu0 0.0
    %1959 = vmatpush1.msra.mxu0 0.0
    %1960 = vmatprep.subr.mxu0 0.0
    %1961 = vmatpush1.msra.mxu0 0.0
    %1962 = vmatprep.subr.mxu0 0.0
    %1963 = vmatpush1.msra.mxu0 0.0
    %1964 = vmatprep.subr.mxu0 0.0
    %1965 = vmatpush1.msra.mxu0 0.0
    %1966 = vmatprep.subr.mxu0 0.0
    %1967 = vmatpush1.msra.mxu0 0.0
    %1968 = vmatprep.subr.mxu0 0.0
    %1969 = vmatpush1.msra.mxu0 0.0
    %1970 = vmatprep.subr.mxu0 0.0
    %1971 = vmatpush1.msra.mxu0 0.0
    %1972 = vmatprep.subr.mxu0 0.0
    %1973 = vmatpush1.msra.mxu0 0.0
    %1974 = vmatprep.subr.mxu0 0.0
    %1975 = vmatpush1.msra.mxu0 0.0
    %1976 = vmatprep.subr.mxu0 0.0
    %1977 = vmatpush1.msra.mxu0 0.0
    %1978 = vmatprep.subr.mxu0 0.0
    %1979 = vmatpush1.msra.mxu0 0.0
    %1980 = vmatprep.subr.mxu0 0.0
    %1981 = vmatpush1.msra.mxu0 0.0
    %1982 = vmatprep.subr.mxu0 0.0
    %1983 = vmatpush1.msra.mxu0 0.0
    %1984 = vmatprep.subr.mxu0 0.0
    %1985 = vmatpush1.msra.mxu0 0.0
    %1986 = vmatprep.subr.mxu0 0.0
    %1987 = vmatpush1.msra.mxu0 0.0
    %1988 = vmatprep.subr.mxu0 0.0
    %1989 = vmatpush1.msra.mxu0 0.0
    %1990 = vmatprep.subr.mxu0 0.0
    %1991 = vmatpush1.msra.mxu0 0.0
    %1992 = vmatprep.mubr.f32.mxu0 0.0
    %1993 = vmatmul.mubr.f32.gmra.mrb[0].mxu0 %v1916
    %v1994 = vpop.f32.mrb[0].mxu0
    %v1995 = vadd.f32 %v1898, %v1994
    %v1996 = vpop.f32.mrb[0].mxu0
    %1997 = vmatprep.mubr.f32.mxu0 0.0
    %1998 = vmatmul.mubr.f32.gmra.mrb[0].mxu0 %v1918
    %v1999 = vpop.f32.mrb[0].mxu0
    %v2000 = vadd.f32 %v1898, %v1999
    %v2001 = vpop.f32.mrb[0].mxu0
    %2002 = vmatprep.mubr.f32.mxu0 0.0
    %2003 = vmatmul.mubr.f32.gmra.mrb[0].mxu0 %v1920
    %v2004 = vpop.f32.mrb[0].mxu0
    %v2005 = vadd.f32 %v1898, %v2004
    %v2006 = vpop.f32.mrb[0].mxu0
    %2007 = vmatprep.mubr.f32.mxu0 0.0
    %2008 = vmatmul.mubr.f32.gmra.mrb[0].mxu0 %v1922
    %v2009 = vpop.f32.mrb[0].mxu0
    %v2010 = vadd.f32 %v1898, %v2009
    %v2011 = vpop.f32.mrb[0].mxu0
    %2012 = vmatprep.mubr.f32.mxu0 0.0
    %2013 = vmatmul.mubr.f32.gmra.mrb[0].mxu0 %v1924
    %v2014 = vpop.f32.mrb[0].mxu0
    %v2015 = vadd.f32 %v1898, %v2014
    %v2016 = vpop.f32.mrb[0].mxu0
    %2017 = vmatprep.mubr.f32.mxu0 0.0
    %2018 = vmatmul.mubr.f32.gmra.mrb[0].mxu0 %v1926
    %v2019 = vpop.f32.mrb[0].mxu0
    %v2020 = vadd.f32 %v1898, %v2019
    %v2021 = vpop.f32.mrb[0].mxu0
    %2022 = vdwg.mxu0
    %v2023 = vld [vmem:[%s14] sm:$0xff]
    %v2024 = vld [vmem:[%s14 + $0x8] sm:$0xff]
    %v2025 = vld [vmem:[%s14 + $0x10] sm:$0xff]
    %v2026 = vld [vmem:[%s14 + $0x18] sm:$0xff]
    %v2027 = vld [vmem:[%s15] sm:$0x1]
    %v2029 = vlaneseq
    %v2030 = vshrl.u32 %v2029, 7
    %v2031 = vsub.s32 0, %v2030
    %v2032 = vrot.slane %v2027, %v2031
    %2035 = vrot.lane.b32.xlu0 %v1104, 64
    %v2036 = vpop.permute.xlu0 %2035
    %v2037 = vsel %vm113, %v2036, 0
    %2039 = vmatprep.subr.mxu0 0.0
    %2040 = vmatpush1.msra.mxu0 %v2023
    %2041 = vmatprep.subr.mxu0 0.0
    %2042 = vmatpush1.msra.mxu0 %v2024
    %2043 = vmatprep.subr.mxu0 0.0
    %2044 = vmatpush1.msra.mxu0 %v2025
    %2045 = vmatprep.subr.mxu0 0.0
    %2046 = vmatpush1.msra.mxu0 %v2026
    %2047 = vmatprep.subr.mxu0 0.0
    %2048 = vmatpush1.msra.mxu0 0.0
    %2049 = vmatprep.subr.mxu0 0.0
    %2050 = vmatpush1.msra.mxu0 0.0
    %2051 = vmatprep.subr.mxu0 0.0
    %2052 = vmatpush1.msra.mxu0 0.0
    %2053 = vmatprep.subr.mxu0 0.0
    %2054 = vmatpush1.msra.mxu0 0.0
    %2055 = vmatprep.subr.mxu0 0.0
    %2056 = vmatpush1.msra.mxu0 0.0
    %2057 = vmatprep.subr.mxu0 0.0
    %2058 = vmatpush1.msra.mxu0 0.0
    %2059 = vmatprep.subr.mxu0 0.0
    %2060 = vmatpush1.msra.mxu0 0.0
    %2061 = vmatprep.subr.mxu0 0.0
    %2062 = vmatpush1.msra.mxu0 0.0
    %2063 = vmatprep.subr.mxu0 0.0
    %2064 = vmatpush1.msra.mxu0 0.0
    %2065 = vmatprep.subr.mxu0 0.0
    %2066 = vmatpush1.msra.mxu0 0.0
    %2067 = vmatprep.subr.mxu0 0.0
    %2068 = vmatpush1.msra.mxu0 0.0
    %2069 = vmatprep.subr.mxu0 0.0
    %2070 = vmatpush1.msra.mxu0 0.0
    %2071 = vmatprep.subr.mxu0 0.0
    %2072 = vmatpush1.msra.mxu0 0.0
    %2073 = vmatprep.subr.mxu0 0.0
    %2074 = vmatpush1.msra.mxu0 0.0
    %2075 = vmatprep.subr.mxu0 0.0
    %2076 = vmatpush1.msra.mxu0 0.0
    %2077 = vmatprep.subr.mxu0 0.0
    %2078 = vmatpush1.msra.mxu0 0.0
    %2079 = vmatprep.subr.mxu0 0.0
    %2080 = vmatpush1.msra.mxu0 0.0
    %2081 = vmatprep.subr.mxu0 0.0
    %2082 = vmatpush1.msra.mxu0 0.0
    %2083 = vmatprep.subr.mxu0 0.0
    %2084 = vmatpush1.msra.mxu0 0.0
    %2085 = vmatprep.subr.mxu0 0.0
    %2086 = vmatpush1.msra.mxu0 0.0
    %2087 = vmatprep.subr.mxu0 0.0
    %2088 = vmatpush1.msra.mxu0 0.0
    %2089 = vmatprep.subr.mxu0 0.0
    %2090 = vmatpush1.msra.mxu0 0.0
    %2091 = vmatprep.subr.mxu0 0.0
    %2092 = vmatpush1.msra.mxu0 0.0
    %2093 = vmatprep.subr.mxu0 0.0
    %2094 = vmatpush1.msra.mxu0 0.0
    %2095 = vmatprep.subr.mxu0 0.0
    %2096 = vmatpush1.msra.mxu0 0.0
    %2097 = vmatprep.subr.mxu0 0.0
    %2098 = vmatpush1.msra.mxu0 0.0
    %2099 = vmatprep.subr.mxu0 0.0
    %2100 = vmatpush1.msra.mxu0 0.0
    %2101 = vmatprep.subr.mxu0 0.0
    %2102 = vmatpush1.msra.mxu0 0.0
    %2103 = vmatprep.mubr.f32.mxu0 0.0
    %2104 = vmatmul.mubr.f32.gmra.mrb[0].mxu0 %v2037
    %v2105 = vpop.f32.mrb[0].mxu0
    %v2106 = vadd.f32 %v2032, %v2105
    %v2107 = vpop.f32.mrb[0].mxu0
    %2108 = vdwg.mxu0
    %v2109 = vld [vmem:[%s16] sm:$0xff]
    %v2110 = vld [vmem:[%s16 + $0x8] sm:$0xff]
    %v2111 = vld [vmem:[%s16 + $0x10] sm:$0xff]
    %v2112 = vld [vmem:[%s16 + $0x18] sm:$0xff]
    %v2114 = vsel %vm113, %v2106, 0
    %2116 = vmatprep.subr.mxu0 0.0
    %2117 = vmatpush1.msra.mxu0 %v2109
    %2118 = vmatprep.subr.mxu0 0.0
    %2119 = vmatpush1.msra.mxu0 %v2110
    %2120 = vmatprep.subr.mxu0 0.0
    %2121 = vmatpush1.msra.mxu0 %v2111
    %2122 = vmatprep.subr.mxu0 0.0
    %2123 = vmatpush1.msra.mxu0 %v2112
    %2124 = vmatprep.subr.mxu0 0.0
    %2125 = vmatpush1.msra.mxu0 0.0
    %2126 = vmatprep.subr.mxu0 0.0
    %2127 = vmatpush1.msra.mxu0 0.0
    %2128 = vmatprep.subr.mxu0 0.0
    %2129 = vmatpush1.msra.mxu0 0.0
    %2130 = vmatprep.subr.mxu0 0.0
    %2131 = vmatpush1.msra.mxu0 0.0
    %2132 = vmatprep.subr.mxu0 0.0
    %2133 = vmatpush1.msra.mxu0 0.0
    %2134 = vmatprep.subr.mxu0 0.0
    %2135 = vmatpush1.msra.mxu0 0.0
    %2136 = vmatprep.subr.mxu0 0.0
    %2137 = vmatpush1.msra.mxu0 0.0
    %2138 = vmatprep.subr.mxu0 0.0
    %2139 = vmatpush1.msra.mxu0 0.0
    %2140 = vmatprep.subr.mxu0 0.0
    %2141 = vmatpush1.msra.mxu0 0.0
    %2142 = vmatprep.subr.mxu0 0.0
    %2143 = vmatpush1.msra.mxu0 0.0
    %2144 = vmatprep.subr.mxu0 0.0
    %2145 = vmatpush1.msra.mxu0 0.0
    %2146 = vmatprep.subr.mxu0 0.0
    %2147 = vmatpush1.msra.mxu0 0.0
    %2148 = vmatprep.subr.mxu0 0.0
    %2149 = vmatpush1.msra.mxu0 0.0
    %2150 = vmatprep.subr.mxu0 0.0
    %2151 = vmatpush1.msra.mxu0 0.0
    %2152 = vmatprep.subr.mxu0 0.0
    %2153 = vmatpush1.msra.mxu0 0.0
    %2154 = vmatprep.subr.mxu0 0.0
    %2155 = vmatpush1.msra.mxu0 0.0
    %2156 = vmatprep.subr.mxu0 0.0
    %2157 = vmatpush1.msra.mxu0 0.0
    %2158 = vmatprep.subr.mxu0 0.0
    %2159 = vmatpush1.msra.mxu0 0.0
    %2160 = vmatprep.subr.mxu0 0.0
    %2161 = vmatpush1.msra.mxu0 0.0
    %2162 = vmatprep.subr.mxu0 0.0
    %2163 = vmatpush1.msra.mxu0 0.0
    %2164 = vmatprep.subr.mxu0 0.0
    %2165 = vmatpush1.msra.mxu0 0.0
    %2166 = vmatprep.subr.mxu0 0.0
    %2167 = vmatpush1.msra.mxu0 0.0
    %2168 = vmatprep.subr.mxu0 0.0
    %2169 = vmatpush1.msra.mxu0 0.0
    %2170 = vmatprep.subr.mxu0 0.0
    %2171 = vmatpush1.msra.mxu0 0.0
    %2172 = vmatprep.subr.mxu0 0.0
    %2173 = vmatpush1.msra.mxu0 0.0
    %2174 = vmatprep.subr.mxu0 0.0
    %2175 = vmatpush1.msra.mxu0 0.0
    %2176 = vmatprep.subr.mxu0 0.0
    %2177 = vmatpush1.msra.mxu0 0.0
    %2178 = vmatprep.subr.mxu0 0.0
    %2179 = vmatpush1.msra.mxu0 0.0
    %2180 = vmatprep.mubr.f32.mxu0 0.0
    %2181 = vmatmul.mubr.f32.gmra.mrb[0].mxu0 %v2114
    %v2182 = vpop.f32.mrb[0].mxu0
    %v2183 = vadd.f32 0.0, %v2182
    %v2184 = vpop.f32.mrb[0].mxu0
    %2185 = vdwg.mxu0
    %v2187 = vrot.slane %v2183, 4
    %v2189 = vsel %vm1093, %v2183, %v2187
    %v2190 = vmul.f32 %v2189, %v1995
    %v2191 = vmul.f32 %v2183, %v2000
    %v2192 = vsel %vm113, %v2190, 0.0
    %2193 = vadd.xlane.f32.xlu0 %v2192
    %v2194 = vpop.xlane.xlu0 %2193
    %vm2195 = vcmask 257024
    %v2196 = vsel %vm2195, %v2191, 0.0
    %2197 = vadd.xlane.f32.xlu0 %v2196
    %v2198 = vpop.xlane.xlu0 %2197
    %v2201 = vrot.slane %v2000, 4
    %v2202 = vrot.slane %v2005, 4
    %v2203 = vsel %vm1093, %v2201, %v2202
    %v2206 = vmul.f32 %v2189, %v2203
    %v2207 = vmul.f32 %v2183, %v2202
    %v2208 = vsel %vm113, %v2206, 0.0
    %2209 = vadd.xlane.f32.xlu0 %v2208
    %v2210 = vpop.xlane.xlu0 %2209
    %v2211 = vsel %vm2195, %v2207, 0.0
    %2212 = vadd.xlane.f32.xlu0 %v2211
    %v2213 = vpop.xlane.xlu0 %2212
    %v2214 = vmul.f32 %v2189, %v2010
    %v2215 = vmul.f32 %v2183, %v2015
    %v2216 = vsel %vm113, %v2214, 0.0
    %2217 = vadd.xlane.f32.xlu0 %v2216
    %v2218 = vpop.xlane.xlu0 %2217
    %v2219 = vsel %vm2195, %v2215, 0.0
    %2220 = vadd.xlane.f32.xlu0 %v2219
    %v2221 = vpop.xlane.xlu0 %2220
    %v2224 = vrot.slane %v2015, 4
    %v2225 = vrot.slane %v2020, 4
    %v2226 = vsel %vm1093, %v2224, %v2225
    %v2229 = vmul.f32 %v2189, %v2226
    %v2230 = vmul.f32 %v2183, %v2225
    %v2231 = vsel %vm113, %v2229, 0.0
    %2232 = vadd.xlane.f32.xlu0 %v2231
    %v2233 = vpop.xlane.xlu0 %2232
    %v2234 = vsel %vm2195, %v2230, 0.0
    %2235 = vadd.xlane.f32.xlu0 %v2234
    %v2236 = vpop.xlane.xlu0 %2235
    %vm2237 = vcmask 7168
    %v2238 = vsel %vm2237, %v2194, %v2210
    %v2239 = vsel %vm2237, %v2198, %v2213
    %vm2240 = vcmask 15360
    %v2241 = vsel %vm2240, %v2238, %v2218
    %v2242 = vsel %vm2240, %v2239, %v2221
    %vm2243 = vcmask 23552
    %v2244 = vsel %vm2243, %v2241, %v2233
    %v2245 = vsel %vm2243, %v2242, %v2236
    %vm2246 = vcmask 31744
    %v2247 = vsel %vm2246, %v2244, -inf
    %2248 = vmax.xlane.f32.xlu0 %v2247
    %v2249 = vpop.xlane.xlu0 %2248
    %vm2250 = vcmask 27648
    %v2251 = vsel %vm2250, %v2245, -inf
    %2252 = vmax.xlane.f32.xlu0 %v2251
    %v2253 = vpop.xlane.xlu0 %2252
    %v2254 = vsub.f32 %v2244, %v2249
    %v2255 = vsub.f32 %v2245, %v2253
    %v2256 = vmul.f32 %v2254, 1.442695
    %v2257 = vpow.pop %v2256
    %v2258 = vmul.f32 %v2255, 1.442695
    %v2259 = vpow.pop %v2258
    %v2260 = vsel %vm2246, %v2257, 0.0
    %2261 = vadd.xlane.f32.xlu0 %v2260
    %v2262 = vpop.xlane.xlu0 %2261
    %v2263 = vsel %vm2250, %v2259, 0.0
    %2264 = vadd.xlane.f32.xlu0 %v2263
    %v2265 = vpop.xlane.xlu0 %2264
    %v2266 = vrcp.pop %v2262
    %v2267 = vmul.f32 %v2257, %v2266
    %v2268 = vrcp.pop %v2265
    %v2269 = vmul.f32 %v2259, %v2268
    %2271 = vset.pattern.permute.xlu0 0
    %2272 = vperm.xlu0 %2271, %v2267
    %v2273 = vpop.permute.xlu0 %2272
    %2276 = vset.pattern.permute.xlu0 0
    %2277 = vperm.xlu0 %2276, %v2269
    %v2278 = vpop.permute.xlu0 %2277
    %v2280 = vmul.f32 %v2273, %v1995
    %v2281 = vmul.f32 %v2278, %v2000
    %v2282 = vadd.f32 %v2280, 0.0
    %v2283 = vadd.f32 %v2281, 0.0
    %2284 = vset.pattern.permute.xlu0 1
    %2285 = vperm.xlu0 %2284, %v2267
    %v2286 = vpop.permute.xlu0 %2285
    %2288 = vset.pattern.permute.xlu0 1
    %2289 = vperm.xlu0 %2288, %v2269
    %v2290 = vpop.permute.xlu0 %2289
    %v2292 = vmul.f32 %v2286, %v2203
    %v2293 = vmul.f32 %v2290, %v2202
    %v2294 = vadd.f32 %v2282, %v2292
    %v2295 = vadd.f32 %v2283, %v2293
    %2296 = vset.pattern.permute.xlu0 2
    %2297 = vperm.xlu0 %2296, %v2267
    %v2298 = vpop.permute.xlu0 %2297
    %2300 = vset.pattern.permute.xlu0 2
    %2301 = vperm.xlu0 %2300, %v2269
    %v2302 = vpop.permute.xlu0 %2301
    %v2304 = vmul.f32 %v2298, %v2010
    %v2305 = vmul.f32 %v2302, %v2015
    %v2306 = vadd.f32 %v2294, %v2304
    %v2307 = vadd.f32 %v2295, %v2305
    %2308 = vset.pattern.permute.xlu0 3
    %2309 = vperm.xlu0 %2308, %v2267
    %v2310 = vpop.permute.xlu0 %2309
    %2312 = vset.pattern.permute.xlu0 3
    %2313 = vperm.xlu0 %2312, %v2269
    %v2314 = vpop.permute.xlu0 %2313
    %v2316 = vmul.f32 %v2310, %v2226
    %v2317 = vmul.f32 %v2314, %v2225
    %v2318 = vadd.f32 %v2306, %v2316
    %v2319 = vadd.f32 %v2307, %v2317
    %v2320 = vld [vmem:[%s17] sm:$0xff]
    %v2321 = vld [vmem:[%s17 + $0x8] sm:$0xff]
    %v2322 = vld [vmem:[%s17 + $0x10] sm:$0xff]
    %v2323 = vld [vmem:[%s17 + $0x18] sm:$0xff]
    %v2324 = vld [vmem:[%s18] sm:$0x1]
    %v2326 = vlaneseq
    %v2327 = vshrl.u32 %v2326, 7
    %v2328 = vsub.s32 0, %v2327
    %v2329 = vrot.slane %v2324, %v2328
    %v2332 = vsel %vm113, %v2318, 0
    %v2335 = vsel %vm113, %v2319, 0
    %2337 = vmatprep.subr.mxu0 0.0
    %2338 = vmatpush1.msra.mxu0 %v2320
    %2339 = vmatprep.subr.mxu0 0.0
    %2340 = vmatpush1.msra.mxu0 %v2321
    %2341 = vmatprep.subr.mxu0 0.0
    %2342 = vmatpush1.msra.mxu0 %v2322
    %2343 = vmatprep.subr.mxu0 0.0
    %2344 = vmatpush1.msra.mxu0 %v2323
    %2345 = vmatprep.subr.mxu0 0.0
    %2346 = vmatpush1.msra.mxu0 0.0
    %2347 = vmatprep.subr.mxu0 0.0
    %2348 = vmatpush1.msra.mxu0 0.0
    %2349 = vmatprep.subr.mxu0 0.0
    %2350 = vmatpush1.msra.mxu0 0.0
    %2351 = vmatprep.subr.mxu0 0.0
    %2352 = vmatpush1.msra.mxu0 0.0
    %2353 = vmatprep.subr.mxu0 0.0
    %2354 = vmatpush1.msra.mxu0 0.0
    %2355 = vmatprep.subr.mxu0 0.0
    %2356 = vmatpush1.msra.mxu0 0.0
    %2357 = vmatprep.subr.mxu0 0.0
    %2358 = vmatpush1.msra.mxu0 0.0
    %2359 = vmatprep.subr.mxu0 0.0
    %2360 = vmatpush1.msra.mxu0 0.0
    %2361 = vmatprep.subr.mxu0 0.0
    %2362 = vmatpush1.msra.mxu0 0.0
    %2363 = vmatprep.subr.mxu0 0.0
    %2364 = vmatpush1.msra.mxu0 0.0
    %2365 = vmatprep.subr.mxu0 0.0
    %2366 = vmatpush1.msra.mxu0 0.0
    %2367 = vmatprep.subr.mxu0 0.0
    %2368 = vmatpush1.msra.mxu0 0.0
    %2369 = vmatprep.subr.mxu0 0.0
    %2370 = vmatpush1.msra.mxu0 0.0
    %2371 = vmatprep.subr.mxu0 0.0
    %2372 = vmatpush1.msra.mxu0 0.0
    %2373 = vmatprep.subr.mxu0 0.0
    %2374 = vmatpush1.msra.mxu0 0.0
    %2375 = vmatprep.subr.mxu0 0.0
    %2376 = vmatpush1.msra.mxu0 0.0
    %2377 = vmatprep.subr.mxu0 0.0
    %2378 = vmatpush1.msra.mxu0 0.0
    %2379 = vmatprep.subr.mxu0 0.0
    %2380 = vmatpush1.msra.mxu0 0.0
    %2381 = vmatprep.subr.mxu0 0.0
    %2382 = vmatpush1.msra.mxu0 0.0
    %2383 = vmatprep.subr.mxu0 0.0
    %2384 = vmatpush1.msra.mxu0 0.0
    %2385 = vmatprep.subr.mxu0 0.0
    %2386 = vmatpush1.msra.mxu0 0.0
    %2387 = vmatprep.subr.mxu0 0.0
    %2388 = vmatpush1.msra.mxu0 0.0
    %2389 = vmatprep.subr.mxu0 0.0
    %2390 = vmatpush1.msra.mxu0 0.0
    %2391 = vmatprep.subr.mxu0 0.0
    %2392 = vmatpush1.msra.mxu0 0.0
    %2393 = vmatprep.subr.mxu0 0.0
    %2394 = vmatpush1.msra.mxu0 0.0
    %2395 = vmatprep.subr.mxu0 0.0
    %2396 = vmatpush1.msra.mxu0 0.0
    %2397 = vmatprep.subr.mxu0 0.0
    %2398 = vmatpush1.msra.mxu0 0.0
    %2399 = vmatprep.subr.mxu0 0.0
    %2400 = vmatpush1.msra.mxu0 0.0
    %2401 = vmatprep.mubr.f32.mxu0 0.0
    %2402 = vmatmul.mubr.f32.gmra.mrb[0].mxu0 %v2332
    %v2403 = vpop.f32.mrb[0].mxu0
    %v2404 = vadd.f32 %v2329, %v2403
    %v2405 = vpop.f32.mrb[0].mxu0
    %2406 = vmatprep.mubr.f32.mxu0 0.0
    %2407 = vmatmul.mubr.f32.gmra.mrb[0].mxu0 %v2335
    %v2408 = vpop.f32.mrb[0].mxu0
    %v2409 = vadd.f32 %v2329, %v2408
    %v2410 = vpop.f32.mrb[0].mxu0
    %2411 = vdwg.mxu0
    %v2412 = vld [vmem:[%s19] sm:$0xff]
    %v2413 = vld [vmem:[%s19 + $0x8] sm:$0xff]
    %v2414 = vld [vmem:[%s19 + $0x10] sm:$0xff]
    %v2415 = vld [vmem:[%s19 + $0x18] sm:$0xff]
    %v2416 = vld [vmem:[%s20] sm:$0x1]
    %v2418 = vlaneseq
    %v2419 = vshrl.u32 %v2418, 7
    %v2420 = vsub.s32 0, %v2419
    %v2421 = vrot.slane %v2416, %v2420
    %2427 = vrot.lane.b32.xlu0 %v1094, 64
    %v2428 = vpop.permute.xlu0 %2427
    %2429 = vrot.lane.b32.xlu0 %v1095, 64
    %v2430 = vpop.permute.xlu0 %2429
    %2431 = vrot.lane.b32.xlu0 %v1096, 64
    %v2432 = vpop.permute.xlu0 %2431
    %2433 = vrot.lane.b32.xlu0 %v1097, 64
    %v2434 = vpop.permute.xlu0 %2433
    %v2435 = vsel %vm113, %v2428, 0
    %v2437 = vsel %vm113, %v2430, 0
    %v2439 = vsel %vm113, %v2432, 0
    %v2441 = vsel %vm113, %v2434, 0
    %2443 = vmatprep.subr.mxu0 0.0
    %2444 = vmatpush1.msra.mxu0 %v2412
    %2445 = vmatprep.subr.mxu0 0.0
    %2446 = vmatpush1.msra.mxu0 %v2413
    %2447 = vmatprep.subr.mxu0 0.0
    %2448 = vmatpush1.msra.mxu0 %v2414
    %2449 = vmatprep.subr.mxu0 0.0
    %2450 = vmatpush1.msra.mxu0 %v2415
    %2451 = vmatprep.subr.mxu0 0.0
    %2452 = vmatpush1.msra.mxu0 0.0
    %2453 = vmatprep.subr.mxu0 0.0
    %2454 = vmatpush1.msra.mxu0 0.0
    %2455 = vmatprep.subr.mxu0 0.0
    %2456 = vmatpush1.msra.mxu0 0.0
    %2457 = vmatprep.subr.mxu0 0.0
    %2458 = vmatpush1.msra.mxu0 0.0
    %2459 = vmatprep.subr.mxu0 0.0
    %2460 = vmatpush1.msra.mxu0 0.0
    %2461 = vmatprep.subr.mxu0 0.0
    %2462 = vmatpush1.msra.mxu0 0.0
    %2463 = vmatprep.subr.mxu0 0.0
    %2464 = vmatpush1.msra.mxu0 0.0
    %2465 = vmatprep.subr.mxu0 0.0
    %2466 = vmatpush1.msra.mxu0 0.0
    %2467 = vmatprep.subr.mxu0 0.0
    %2468 = vmatpush1.msra.mxu0 0.0
    %2469 = vmatprep.subr.mxu0 0.0
    %2470 = vmatpush1.msra.mxu0 0.0
    %2471 = vmatprep.subr.mxu0 0.0
    %2472 = vmatpush1.msra.mxu0 0.0
    %2473 = vmatprep.subr.mxu0 0.0
    %2474 = vmatpush1.msra.mxu0 0.0
    %2475 = vmatprep.subr.mxu0 0.0
    %2476 = vmatpush1.msra.mxu0 0.0
    %2477 = vmatprep.subr.mxu0 0.0
    %2478 = vmatpush1.msra.mxu0 0.0
    %2479 = vmatprep.subr.mxu0 0.0
    %2480 = vmatpush1.msra.mxu0 0.0
    %2481 = vmatprep.subr.mxu0 0.0
    %2482 = vmatpush1.msra.mxu0 0.0
    %2483 = vmatprep.subr.mxu0 0.0
    %2484 = vmatpush1.msra.mxu0 0.0
    %2485 = vmatprep.subr.mxu0 0.0
    %2486 = vmatpush1.msra.mxu0 0.0
    %2487 = vmatprep.subr.mxu0 0.0
    %2488 = vmatpush1.msra.mxu0 0.0
    %2489 = vmatprep.subr.mxu0 0.0
    %2490 = vmatpush1.msra.mxu0 0.0
    %2491 = vmatprep.subr.mxu0 0.0
    %2492 = vmatpush1.msra.mxu0 0.0
    %2493 = vmatprep.subr.mxu0 0.0
    %2494 = vmatpush1.msra.mxu0 0.0
    %2495 = vmatprep.subr.mxu0 0.0
    %2496 = vmatpush1.msra.mxu0 0.0
    %2497 = vmatprep.subr.mxu0 0.0
    %2498 = vmatpush1.msra.mxu0 0.0
    %2499 = vmatprep.subr.mxu0 0.0
    %2500 = vmatpush1.msra.mxu0 0.0
    %2501 = vmatprep.subr.mxu0 0.0
    %2502 = vmatpush1.msra.mxu0 0.0
    %2503 = vmatprep.subr.mxu0 0.0
    %2504 = vmatpush1.msra.mxu0 0.0
    %2505 = vmatprep.subr.mxu0 0.0
    %2506 = vmatpush1.msra.mxu0 0.0
    %2507 = vmatprep.mubr.f32.mxu0 0.0
    %2508 = vmatmul.mubr.f32.gmra.mrb[0].mxu0 %v2435
    %v2509 = vpop.f32.mrb[0].mxu0
    %v2510 = vadd.f32 %v2421, %v2509
    %v2511 = vpop.f32.mrb[0].mxu0
    %2512 = vmatprep.mubr.f32.mxu0 0.0
    %2513 = vmatmul.mubr.f32.gmra.mrb[0].mxu0 %v2437
    %v2514 = vpop.f32.mrb[0].mxu0
    %v2515 = vadd.f32 %v2421, %v2514
    %v2516 = vpop.f32.mrb[0].mxu0
    %2517 = vmatprep.mubr.f32.mxu0 0.0
    %2518 = vmatmul.mubr.f32.gmra.mrb[0].mxu0 %v2439
    %v2519 = vpop.f32.mrb[0].mxu0
    %v2520 = vadd.f32 %v2421, %v2519
    %v2521 = vpop.f32.mrb[0].mxu0
    %2522 = vmatprep.mubr.f32.mxu0 0.0
    %2523 = vmatmul.mubr.f32.gmra.mrb[0].mxu0 %v2441
    %v2524 = vpop.f32.mrb[0].mxu0
    %v2525 = vadd.f32 %v2421, %v2524
    %v2526 = vpop.f32.mrb[0].mxu0
    %2527 = vdwg.mxu0
    %v2528 = vld [vmem:[%s21] sm:$0xff]
    %v2529 = vld [vmem:[%s21 + $0x8] sm:$0xff]
    %v2530 = vld [vmem:[%s21 + $0x10] sm:$0xff]
    %v2531 = vld [vmem:[%s21 + $0x18] sm:$0xff]
    %v2532 = vld [vmem:[%s22] sm:$0x1]
    %v2534 = vlaneseq
    %v2535 = vshrl.u32 %v2534, 7
    %v2536 = vsub.s32 0, %v2535
    %v2537 = vrot.slane %v2532, %v2536
    %2541 = vrot.lane.b32.xlu0 %v1887, 64
    %v2542 = vpop.permute.xlu0 %2541
    %2543 = vrot.lane.b32.xlu0 %v1888, 64
    %v2544 = vpop.permute.xlu0 %2543
    %v2545 = vsel %vm113, %v2542, 0
    %v2547 = vsel %vm113, %v2544, 0
    %2549 = vmatprep.subr.mxu0 0.0
    %2550 = vmatpush1.msra.mxu0 %v2528
    %2551 = vmatprep.subr.mxu0 0.0
    %2552 = vmatpush1.msra.mxu0 %v2529
    %2553 = vmatprep.subr.mxu0 0.0
    %2554 = vmatpush1.msra.mxu0 %v2530
    %2555 = vmatprep.subr.mxu0 0.0
    %2556 = vmatpush1.msra.mxu0 %v2531
    %2557 = vmatprep.subr.mxu0 0.0
    %2558 = vmatpush1.msra.mxu0 0.0
    %2559 = vmatprep.subr.mxu0 0.0
    %2560 = vmatpush1.msra.mxu0 0.0
    %2561 = vmatprep.subr.mxu0 0.0
    %2562 = vmatpush1.msra.mxu0 0.0
    %2563 = vmatprep.subr.mxu0 0.0
    %2564 = vmatpush1.msra.mxu0 0.0
    %2565 = vmatprep.subr.mxu0 0.0
    %2566 = vmatpush1.msra.mxu0 0.0
    %2567 = vmatprep.subr.mxu0 0.0
    %2568 = vmatpush1.msra.mxu0 0.0
    %2569 = vmatprep.subr.mxu0 0.0
    %2570 = vmatpush1.msra.mxu0 0.0
    %2571 = vmatprep.subr.mxu0 0.0
    %2572 = vmatpush1.msra.mxu0 0.0
    %2573 = vmatprep.subr.mxu0 0.0
    %2574 = vmatpush1.msra.mxu0 0.0
    %2575 = vmatprep.subr.mxu0 0.0
    %2576 = vmatpush1.msra.mxu0 0.0
    %2577 = vmatprep.subr.mxu0 0.0
    %2578 = vmatpush1.msra.mxu0 0.0
    %2579 = vmatprep.subr.mxu0 0.0
    %2580 = vmatpush1.msra.mxu0 0.0
    %2581 = vmatprep.subr.mxu0 0.0
    %2582 = vmatpush1.msra.mxu0 0.0
    %2583 = vmatprep.subr.mxu0 0.0
    %2584 = vmatpush1.msra.mxu0 0.0
    %2585 = vmatprep.subr.mxu0 0.0
    %2586 = vmatpush1.msra.mxu0 0.0
    %2587 = vmatprep.subr.mxu0 0.0
    %2588 = vmatpush1.msra.mxu0 0.0
    %2589 = vmatprep.subr.mxu0 0.0
    %2590 = vmatpush1.msra.mxu0 0.0
    %2591 = vmatprep.subr.mxu0 0.0
    %2592 = vmatpush1.msra.mxu0 0.0
    %2593 = vmatprep.subr.mxu0 0.0
    %2594 = vmatpush1.msra.mxu0 0.0
    %2595 = vmatprep.subr.mxu0 0.0
    %2596 = vmatpush1.msra.mxu0 0.0
    %2597 = vmatprep.subr.mxu0 0.0
    %2598 = vmatpush1.msra.mxu0 0.0
    %2599 = vmatprep.subr.mxu0 0.0
    %2600 = vmatpush1.msra.mxu0 0.0
    %2601 = vmatprep.subr.mxu0 0.0
    %2602 = vmatpush1.msra.mxu0 0.0
    %2603 = vmatprep.subr.mxu0 0.0
    %2604 = vmatpush1.msra.mxu0 0.0
    %2605 = vmatprep.subr.mxu0 0.0
    %2606 = vmatpush1.msra.mxu0 0.0
    %2607 = vmatprep.subr.mxu0 0.0
    %2608 = vmatpush1.msra.mxu0 0.0
    %2609 = vmatprep.subr.mxu0 0.0
    %2610 = vmatpush1.msra.mxu0 0.0
    %2611 = vmatprep.subr.mxu0 0.0
    %2612 = vmatpush1.msra.mxu0 0.0
    %2613 = vmatprep.mubr.f32.mxu0 0.0
    %2614 = vmatmul.mubr.f32.gmra.mrb[0].mxu0 %v2545
    %v2615 = vpop.f32.mrb[0].mxu0
    %v2616 = vadd.f32 %v2537, %v2615
    %v2617 = vpop.f32.mrb[0].mxu0
    %2618 = vmatprep.mubr.f32.mxu0 0.0
    %2619 = vmatmul.mubr.f32.gmra.mrb[0].mxu0 %v2547
    %v2620 = vpop.f32.mrb[0].mxu0
    %v2621 = vadd.f32 %v2537, %v2620
    %v2622 = vpop.f32.mrb[0].mxu0
    %2623 = vdwg.mxu0
    %v2624 = vld [vmem:[%s23] sm:$0xff]
    %v2625 = vld [vmem:[%s23 + $0x8] sm:$0xff]
    %v2626 = vld [vmem:[%s23 + $0x10] sm:$0xff]
    %v2627 = vld [vmem:[%s23 + $0x18] sm:$0xff]
    %v2629 = vsel %vm113, %v2616, 0
    %v2632 = vsel %vm113, %v2621, 0
    %2634 = vmatprep.subr.mxu0 0.0
    %2635 = vmatpush1.msra.mxu0 %v2624
    %2636 = vmatprep.subr.mxu0 0.0
    %2637 = vmatpush1.msra.mxu0 %v2625
    %2638 = vmatprep.subr.mxu0 0.0
    %2639 = vmatpush1.msra.mxu0 %v2626
    %2640 = vmatprep.subr.mxu0 0.0
    %2641 = vmatpush1.msra.mxu0 %v2627
    %2642 = vmatprep.subr.mxu0 0.0
    %2643 = vmatpush1.msra.mxu0 0.0
    %2644 = vmatprep.subr.mxu0 0.0
    %2645 = vmatpush1.msra.mxu0 0.0
    %2646 = vmatprep.subr.mxu0 0.0
    %2647 = vmatpush1.msra.mxu0 0.0
    %2648 = vmatprep.subr.mxu0 0.0
    %2649 = vmatpush1.msra.mxu0 0.0
    %2650 = vmatprep.subr.mxu0 0.0
    %2651 = vmatpush1.msra.mxu0 0.0
    %2652 = vmatprep.subr.mxu0 0.0
    %2653 = vmatpush1.msra.mxu0 0.0
    %2654 = vmatprep.subr.mxu0 0.0
    %2655 = vmatpush1.msra.mxu0 0.0
    %2656 = vmatprep.subr.mxu0 0.0
    %2657 = vmatpush1.msra.mxu0 0.0
    %2658 = vmatprep.subr.mxu0 0.0
    %2659 = vmatpush1.msra.mxu0 0.0
    %2660 = vmatprep.subr.mxu0 0.0
    %2661 = vmatpush1.msra.mxu0 0.0
    %2662 = vmatprep.subr.mxu0 0.0
    %2663 = vmatpush1.msra.mxu0 0.0
    %2664 = vmatprep.subr.mxu0 0.0
    %2665 = vmatpush1.msra.mxu0 0.0
    %2666 = vmatprep.subr.mxu0 0.0
    %2667 = vmatpush1.msra.mxu0 0.0
    %2668 = vmatprep.subr.mxu0 0.0
    %2669 = vmatpush1.msra.mxu0 0.0
    %2670 = vmatprep.subr.mxu0 0.0
    %2671 = vmatpush1.msra.mxu0 0.0
    %2672 = vmatprep.subr.mxu0 0.0
    %2673 = vmatpush1.msra.mxu0 0.0
    %2674 = vmatprep.subr.mxu0 0.0
    %2675 = vmatpush1.msra.mxu0 0.0
    %2676 = vmatprep.subr.mxu0 0.0
    %2677 = vmatpush1.msra.mxu0 0.0
    %2678 = vmatprep.subr.mxu0 0.0
    %2679 = vmatpush1.msra.mxu0 0.0
    %2680 = vmatprep.subr.mxu0 0.0
    %2681 = vmatpush1.msra.mxu0 0.0
    %2682 = vmatprep.subr.mxu0 0.0
    %2683 = vmatpush1.msra.mxu0 0.0
    %2684 = vmatprep.subr.mxu0 0.0
    %2685 = vmatpush1.msra.mxu0 0.0
    %2686 = vmatprep.subr.mxu0 0.0
    %2687 = vmatpush1.msra.mxu0 0.0
    %2688 = vmatprep.subr.mxu0 0.0
    %2689 = vmatpush1.msra.mxu0 0.0
    %2690 = vmatprep.subr.mxu0 0.0
    %2691 = vmatpush1.msra.mxu0 0.0
    %2692 = vmatprep.subr.mxu0 0.0
    %2693 = vmatpush1.msra.mxu0 0.0
    %2694 = vmatprep.subr.mxu0 0.0
    %2695 = vmatpush1.msra.mxu0 0.0
    %2696 = vmatprep.subr.mxu0 0.0
    %2697 = vmatpush1.msra.mxu0 0.0
    %2698 = vmatprep.mubr.f32.mxu0 0.0
    %2699 = vmatmul.mubr.f32.gmra.mrb[0].mxu0 %v2629
    %v2700 = vpop.f32.mrb[0].mxu0
    %v2701 = vadd.f32 0.0, %v2700
    %v2702 = vpop.f32.mrb[0].mxu0
    %2703 = vmatprep.mubr.f32.mxu0 0.0
    %2704 = vmatmul.mubr.f32.gmra.mrb[0].mxu0 %v2632
    %v2705 = vpop.f32.mrb[0].mxu0
    %v2706 = vadd.f32 0.0, %v2705
    %v2707 = vpop.f32.mrb[0].mxu0
    %2708 = vdwg.mxu0
    %v2710 = vrot.slane %v2510, 4
    %v2712 = vsel %vm1093, %v2510, %v2710
    %v2713 = vmul.f32 %v2701, %v2712
    %v2714 = vmul.f32 %v2706, %v2510
    %v2715 = vsel %vm113, %v2713, 0.0
    %2716 = vadd.xlane.f32.xlu0 %v2715
    %v2717 = vpop.xlane.xlu0 %2716
    %v2718 = vsel %vm2195, %v2714, 0.0
    %2719 = vadd.xlane.f32.xlu0 %v2718
    %v2720 = vpop.xlane.xlu0 %2719
    %v2721 = vsel %vm1093, %v2710, %v2510
    %v2722 = vmul.f32 %v2701, %v2721
    %v2723 = vmul.f32 %v2706, %v2710
    %v2724 = vsel %vm113, %v2722, 0.0
    %2725 = vadd.xlane.f32.xlu0 %v2724
    %v2726 = vpop.xlane.xlu0 %2725
    %v2727 = vsel %vm2195, %v2723, 0.0
    %2728 = vadd.xlane.f32.xlu0 %v2727
    %v2729 = vpop.xlane.xlu0 %2728
    %v2731 = vrot.slane %v2515, 4
    %v2733 = vsel %vm1093, %v2515, %v2731
    %v2734 = vmul.f32 %v2701, %v2733
    %v2735 = vmul.f32 %v2706, %v2515
    %v2736 = vsel %vm113, %v2734, 0.0
    %2737 = vadd.xlane.f32.xlu0 %v2736
    %v2738 = vpop.xlane.xlu0 %2737
    %v2739 = vsel %vm2195, %v2735, 0.0
    %2740 = vadd.xlane.f32.xlu0 %v2739
    %v2741 = vpop.xlane.xlu0 %2740
    %v2742 = vsel %vm1093, %v2731, %v2515
    %v2743 = vmul.f32 %v2701, %v2742
    %v2744 = vmul.f32 %v2706, %v2731
    %v2745 = vsel %vm113, %v2743, 0.0
    %2746 = vadd.xlane.f32.xlu0 %v2745
    %v2747 = vpop.xlane.xlu0 %2746
    %v2748 = vsel %vm2195, %v2744, 0.0
    %2749 = vadd.xlane.f32.xlu0 %v2748
    %v2750 = vpop.xlane.xlu0 %2749
    %v2752 = vrot.slane %v2520, 4
    %v2754 = vsel %vm1093, %v2520, %v2752
    %v2755 = vmul.f32 %v2701, %v2754
    %v2756 = vmul.f32 %v2706, %v2520
    %v2757 = vsel %vm113, %v2755, 0.0
    %2758 = vadd.xlane.f32.xlu0 %v2757
    %v2759 = vpop.xlane.xlu0 %2758
    %v2760 = vsel %vm2195, %v2756, 0.0
    %2761 = vadd.xlane.f32.xlu0 %v2760
    %v2762 = vpop.xlane.xlu0 %2761
    %v2763 = vsel %vm1093, %v2752, %v2520
    %v2764 = vmul.f32 %v2701, %v2763
    %v2765 = vmul.f32 %v2706, %v2752
    %v2766 = vsel %vm113, %v2764, 0.0
    %2767 = vadd.xlane.f32.xlu0 %v2766
    %v2768 = vpop.xlane.xlu0 %2767
    %v2769 = vsel %vm2195, %v2765, 0.0
    %2770 = vadd.xlane.f32.xlu0 %v2769
    %v2771 = vpop.xlane.xlu0 %2770
    %v2773 = vrot.slane %v2525, 4
    %v2775 = vsel %vm1093, %v2525, %v2773
    %v2776 = vmul.f32 %v2701, %v2775
    %v2777 = vmul.f32 %v2706, %v2525
    %v2778 = vsel %vm113, %v2776, 0.0
    %2779 = vadd.xlane.f32.xlu0 %v2778
    %v2780 = vpop.xlane.xlu0 %2779
    %v2781 = vsel %vm2195, %v2777, 0.0
    %2782 = vadd.xlane.f32.xlu0 %v2781
    %v2783 = vpop.xlane.xlu0 %2782
    %v2784 = vsel %vm1093, %v2773, %v2525
    %v2785 = vmul.f32 %v2701, %v2784
    %v2786 = vmul.f32 %v2706, %v2773
    %v2787 = vsel %vm113, %v2785, 0.0
    %2788 = vadd.xlane.f32.xlu0 %v2787
    %v2789 = vpop.xlane.xlu0 %2788
    %v2790 = vsel %vm2195, %v2786, 0.0
    %2791 = vadd.xlane.f32.xlu0 %v2790
    %v2792 = vpop.xlane.xlu0 %2791
    %v2793 = vsel %vm2237, %v2717, %v2726
    %v2794 = vsel %vm2237, %v2720, %v2729
    %v2795 = vsel %vm2240, %v2793, %v2738
    %v2796 = vsel %vm2240, %v2794, %v2741
    %v2797 = vsel %vm2243, %v2795, %v2747
    %v2798 = vsel %vm2243, %v2796, %v2750
    %v2799 = vsel %vm2246, %v2797, %v2759
    %v2800 = vsel %vm2246, %v2798, %v2762
    %vm2801 = vcmask 39936
    %v2802 = vsel %vm2801, %v2799, %v2768
    %v2803 = vsel %vm2801, %v2800, %v2771
    %vm2804 = vcmask 48128
    %v2805 = vsel %vm2804, %v2802, %v2780
    %v2806 = vsel %vm2804, %v2803, %v2783
    %vm2807 = vcmask 56320
    %v2808 = vsel %vm2807, %v2805, %v2789
    %v2809 = vsel %vm2807, %v2806, %v2792
    %vm2810 = vcmask 64512
    %v2811 = vsel %vm2810, %v2808, -inf
    %2812 = vmax.xlane.f32.xlu0 %v2811
    %v2813 = vpop.xlane.xlu0 %2812
    %vm2814 = vcmask 60416
    %v2815 = vsel %vm2814, %v2809, -inf
    %2816 = vmax.xlane.f32.xlu0 %v2815
    %v2817 = vpop.xlane.xlu0 %2816
    %v2818 = vsub.f32 %v2808, %v2813
    %v2819 = vsub.f32 %v2809, %v2817
    %v2820 = vmul.f32 %v2818, 1.442695
    %v2821 = vpow.pop %v2820
    %v2822 = vmul.f32 %v2819, 1.442695
    %v2823 = vpow.pop %v2822
    %v2824 = vsel %vm2810, %v2821, 0.0
    %2825 = vadd.xlane.f32.xlu0 %v2824
    %v2826 = vpop.xlane.xlu0 %2825
    %v2827 = vsel %vm2814, %v2823, 0.0
    %2828 = vadd.xlane.f32.xlu0 %v2827
    %v2829 = vpop.xlane.xlu0 %2828
    %v2830 = vrcp.pop %v2826
    %v2831 = vmul.f32 %v2821, %v2830
    %v2832 = vrcp.pop %v2829
    %v2833 = vmul.f32 %v2823, %v2832
    %2835 = vset.pattern.permute.xlu0 0
    %2836 = vperm.xlu0 %2835, %v2831
    %v2837 = vpop.permute.xlu0 %2836
    %2840 = vset.pattern.permute.xlu0 0
    %2841 = vperm.xlu0 %2840, %v2833
    %v2842 = vpop.permute.xlu0 %2841
    %v2844 = vmul.f32 %v2837, %v2712
    %v2845 = vmul.f32 %v2842, %v2510
    %v2846 = vadd.f32 %v2844, 0.0
    %v2847 = vadd.f32 %v2845, 0.0
    %2848 = vset.pattern.permute.xlu0 1
    %2849 = vperm.xlu0 %2848, %v2831
    %v2850 = vpop.permute.xlu0 %2849
    %2852 = vset.pattern.permute.xlu0 1
    %2853 = vperm.xlu0 %2852, %v2833
    %v2854 = vpop.permute.xlu0 %2853
    %v2856 = vmul.f32 %v2850, %v2721
    %v2857 = vmul.f32 %v2854, %v2710
    %v2858 = vadd.f32 %v2846, %v2856
    %v2859 = vadd.f32 %v2847, %v2857
    %2860 = vset.pattern.permute.xlu0 2
    %2861 = vperm.xlu0 %2860, %v2831
    %v2862 = vpop.permute.xlu0 %2861
    %2864 = vset.pattern.permute.xlu0 2
    %2865 = vperm.xlu0 %2864, %v2833
    %v2866 = vpop.permute.xlu0 %2865
    %v2868 = vmul.f32 %v2862, %v2733
    %v2869 = vmul.f32 %v2866, %v2515
    %v2870 = vadd.f32 %v2858, %v2868
    %v2871 = vadd.f32 %v2859, %v2869
    %2872 = vset.pattern.permute.xlu0 3
    %2873 = vperm.xlu0 %2872, %v2831
    %v2874 = vpop.permute.xlu0 %2873
    %2876 = vset.pattern.permute.xlu0 3
    %2877 = vperm.xlu0 %2876, %v2833
    %v2878 = vpop.permute.xlu0 %2877
    %v2880 = vmul.f32 %v2874, %v2742
    %v2881 = vmul.f32 %v2878, %v2731
    %v2882 = vadd.f32 %v2870, %v2880
    %v2883 = vadd.f32 %v2871, %v2881
    %2884 = vset.pattern.permute.xlu0 4
    %2885 = vperm.xlu0 %2884, %v2831
    %v2886 = vpop.permute.xlu0 %2885
    %2888 = vset.pattern.permute.xlu0 4
    %2889 = vperm.xlu0 %2888, %v2833
    %v2890 = vpop.permute.xlu0 %2889
    %v2892 = vmul.f32 %v2886, %v2754
    %v2893 = vmul.f32 %v2890, %v2520
    %v2894 = vadd.f32 %v2882, %v2892
    %v2895 = vadd.f32 %v2883, %v2893
    %2896 = vset.pattern.permute.xlu0 5
    %2897 = vperm.xlu0 %2896, %v2831
    %v2898 = vpop.permute.xlu0 %2897
    %2900 = vset.pattern.permute.xlu0 5
    %2901 = vperm.xlu0 %2900, %v2833
    %v2902 = vpop.permute.xlu0 %2901
    %v2904 = vmul.f32 %v2898, %v2763
    %v2905 = vmul.f32 %v2902, %v2752
    %v2906 = vadd.f32 %v2894, %v2904
    %v2907 = vadd.f32 %v2895, %v2905
    %2908 = vset.pattern.permute.xlu0 6
    %2909 = vperm.xlu0 %2908, %v2831
    %v2910 = vpop.permute.xlu0 %2909
    %2912 = vset.pattern.permute.xlu0 6
    %2913 = vperm.xlu0 %2912, %v2833
    %v2914 = vpop.permute.xlu0 %2913
    %v2916 = vmul.f32 %v2910, %v2775
    %v2917 = vmul.f32 %v2914, %v2525
    %v2918 = vadd.f32 %v2906, %v2916
    %v2919 = vadd.f32 %v2907, %v2917
    %2920 = vset.pattern.permute.xlu0 7
    %2921 = vperm.xlu0 %2920, %v2831
    %v2922 = vpop.permute.xlu0 %2921
    %2924 = vset.pattern.permute.xlu0 7
    %2925 = vperm.xlu0 %2924, %v2833
    %v2926 = vpop.permute.xlu0 %2925
    %v2928 = vmul.f32 %v2922, %v2784
    %v2929 = vmul.f32 %v2926, %v2773
    %v2930 = vadd.f32 %v2918, %v2928
    %v2931 = vadd.f32 %v2919, %v2929
    %v2932 = vld [vmem:[%s24] sm:$0xff]
    %v2933 = vld [vmem:[%s24 + $0x8] sm:$0xff]
    %v2934 = vld [vmem:[%s24 + $0x10] sm:$0xff]
    %v2935 = vld [vmem:[%s24 + $0x18] sm:$0xff]
    %v2936 = vld [vmem:[%s25] sm:$0x1]
    %v2938 = vlaneseq
    %v2939 = vshrl.u32 %v2938, 7
    %v2940 = vsub.s32 0, %v2939
    %v2941 = vrot.slane %v2936, %v2940
    %v2944 = vsel %vm113, %v2930, 0
    %v2947 = vsel %vm113, %v2931, 0
    %2949 = vmatprep.subr.mxu0 0.0
    %2950 = vmatpush1.msra.mxu0 %v2932
    %2951 = vmatprep.subr.mxu0 0.0
    %2952 = vmatpush1.msra.mxu0 %v2933
    %2953 = vmatprep.subr.mxu0 0.0
    %2954 = vmatpush1.msra.mxu0 %v2934
    %2955 = vmatprep.subr.mxu0 0.0
    %2956 = vmatpush1.msra.mxu0 %v2935
    %2957 = vmatprep.subr.mxu0 0.0
    %2958 = vmatpush1.msra.mxu0 0.0
    %2959 = vmatprep.subr.mxu0 0.0
    %2960 = vmatpush1.msra.mxu0 0.0
    %2961 = vmatprep.subr.mxu0 0.0
    %2962 = vmatpush1.msra.mxu0 0.0
    %2963 = vmatprep.subr.mxu0 0.0
    %2964 = vmatpush1.msra.mxu0 0.0
    %2965 = vmatprep.subr.mxu0 0.0
    %2966 = vmatpush1.msra.mxu0 0.0
    %2967 = vmatprep.subr.mxu0 0.0
    %2968 = vmatpush1.msra.mxu0 0.0
    %2969 = vmatprep.subr.mxu0 0.0
    %2970 = vmatpush1.msra.mxu0 0.0
    %2971 = vmatprep.subr.mxu0 0.0
    %2972 = vmatpush1.msra.mxu0 0.0
    %2973 = vmatprep.subr.mxu0 0.0
    %2974 = vmatpush1.msra.mxu0 0.0
    %2975 = vmatprep.subr.mxu0 0.0
    %2976 = vmatpush1.msra.mxu0 0.0
    %2977 = vmatprep.subr.mxu0 0.0
    %2978 = vmatpush1.msra.mxu0 0.0
    %2979 = vmatprep.subr.mxu0 0.0
    %2980 = vmatpush1.msra.mxu0 0.0
    %2981 = vmatprep.subr.mxu0 0.0
    %2982 = vmatpush1.msra.mxu0 0.0
    %2983 = vmatprep.subr.mxu0 0.0
    %2984 = vmatpush1.msra.mxu0 0.0
    %2985 = vmatprep.subr.mxu0 0.0
    %2986 = vmatpush1.msra.mxu0 0.0
    %2987 = vmatprep.subr.mxu0 0.0
    %2988 = vmatpush1.msra.mxu0 0.0
    %2989 = vmatprep.subr.mxu0 0.0
    %2990 = vmatpush1.msra.mxu0 0.0
    %2991 = vmatprep.subr.mxu0 0.0
    %2992 = vmatpush1.msra.mxu0 0.0
    %2993 = vmatprep.subr.mxu0 0.0
    %2994 = vmatpush1.msra.mxu0 0.0
    %2995 = vmatprep.subr.mxu0 0.0
    %2996 = vmatpush1.msra.mxu0 0.0
    %2997 = vmatprep.subr.mxu0 0.0
    %2998 = vmatpush1.msra.mxu0 0.0
    %2999 = vmatprep.subr.mxu0 0.0
    %3000 = vmatpush1.msra.mxu0 0.0
    %3001 = vmatprep.subr.mxu0 0.0
    %3002 = vmatpush1.msra.mxu0 0.0
    %3003 = vmatprep.subr.mxu0 0.0
    %3004 = vmatpush1.msra.mxu0 0.0
    %3005 = vmatprep.subr.mxu0 0.0
    %3006 = vmatpush1.msra.mxu0 0.0
    %3007 = vmatprep.subr.mxu0 0.0
    %3008 = vmatpush1.msra.mxu0 0.0
    %3009 = vmatprep.subr.mxu0 0.0
    %3010 = vmatpush1.msra.mxu0 0.0
    %3011 = vmatprep.subr.mxu0 0.0
    %3012 = vmatpush1.msra.mxu0 0.0
    %3013 = vmatprep.mubr.f32.mxu0 0.0
    %3014 = vmatmul.mubr.f32.gmra.mrb[0].mxu0 %v2944
    %v3015 = vpop.f32.mrb[0].mxu0
    %v3016 = vadd.f32 %v2941, %v3015
    %v3017 = vpop.f32.mrb[0].mxu0
    %3018 = vmatprep.mubr.f32.mxu0 0.0
    %3019 = vmatmul.mubr.f32.gmra.mrb[0].mxu0 %v2947
    %v3020 = vpop.f32.mrb[0].mxu0
    %v3021 = vadd.f32 %v2941, %v3020
    %v3022 = vpop.f32.mrb[0].mxu0
    %3023 = vdwg.mxu0
    %3025 = vrot.lane.b32.xlu0 %v3016, 32
    %v3026 = vpop.permute.xlu0 %3025
    %v3028 = vsel %vm113, %v2404, %v3026
    %3030 = vrot.lane.b32.xlu0 %v3021, 32
    %v3031 = vpop.permute.xlu0 %3030
    %v3033 = vsel %vm113, %v2409, %v3031
    %v3035 = vrot.slane %v3028, 4
    %3036 = vrot.lane.b32.xlu0 %v3035, 64
    %v3037 = vpop.permute.xlu0 %3036
    %vm3039 = vcmask 523264
    %v3040 = vsel %vm3039, %v3028, %v3037
    %v3041 = vld [vmem:[%s26] sm:$0xff]
    %v3042 = vld [vmem:[%s26 + $0x8] sm:$0xff]
    %v3043 = vld [vmem:[%s26 + $0x10] sm:$0xff]
    %v3044 = vld [vmem:[%s26 + $0x18] sm:$0xff]
    %v3045 = vld [vmem:[%s26 + $0x20] sm:$0xff]
    %v3046 = vld [vmem:[%s26 + $0x28] sm:$0xff]
    %v3047 = vld [vmem:[%s26 + $0x30] sm:$0xff]
    %v3048 = vld [vmem:[%s26 + $0x38] sm:$0xff]
    %v3049 = vld [vmem:[%s26 + $0x40] sm:$0xff]
    %v3050 = vld [vmem:[%s26 + $0x48] sm:$0xff]
    %v3051 = vld [vmem:[%s26 + $0x50] sm:$0xff]
    %v3052 = vld [vmem:[%s26 + $0x58] sm:$0xff]
    %v3053 = vld [vmem:[%s26 + $0x60] sm:$0xff]
    %v3054 = vld [vmem:[%s26 + $0x68] sm:$0xff]
    %v3055 = vld [vmem:[%s26 + $0x70] sm:$0xff]
    %v3056 = vld [vmem:[%s26 + $0x78] sm:$0xff]
    %v3057 = vld [vmem:[%s26 + $0x80] sm:$0xff]
    %v3058 = vld [vmem:[%s26 + $0x88] sm:$0xff]
    %v3059 = vld [vmem:[%s26 + $0x90] sm:$0xff]
    %v3060 = vld [vmem:[%s26 + $0x98] sm:$0xff]
    %v3061 = vld [vmem:[%s26 + $0xa0] sm:$0xff]
    %v3062 = vld [vmem:[%s26 + $0xa8] sm:$0xff]
    %v3063 = vld [vmem:[%s26 + $0xb0] sm:$0xff]
    %v3064 = vld [vmem:[%s26 + $0xb8] sm:$0xff]
    %v3065 = vld [vmem:[%s27] sm:$0x1]
    %v3067 = vlaneseq
    %v3068 = vshrl.u32 %v3067, 7
    %v3069 = vsub.s32 0, %v3068
    %v3070 = vrot.slane %v3065, %v3069
    %v3073 = vsel %vm3039, %v3033, 0
    %3075 = vmatprep.subr.mxu0 0.0
    %3076 = vmatpush1.msra.mxu0 %v3041
    %3077 = vmatprep.subr.mxu0 0.0
    %3078 = vmatpush1.msra.mxu0 %v3042
    %3079 = vmatprep.subr.mxu0 0.0
    %3080 = vmatpush1.msra.mxu0 %v3043
    %3081 = vmatprep.subr.mxu0 0.0
    %3082 = vmatpush1.msra.mxu0 %v3044
    %3083 = vmatprep.subr.mxu0 0.0
    %3084 = vmatpush1.msra.mxu0 %v3045
    %3085 = vmatprep.subr.mxu0 0.0
    %3086 = vmatpush1.msra.mxu0 %v3046
    %3087 = vmatprep.subr.mxu0 0.0
    %3088 = vmatpush1.msra.mxu0 %v3047
    %3089 = vmatprep.subr.mxu0 0.0
    %3090 = vmatpush1.msra.mxu0 %v3048
    %3091 = vmatprep.subr.mxu0 0.0
    %3092 = vmatpush1.msra.mxu0 %v3049
    %3093 = vmatprep.subr.mxu0 0.0
    %3094 = vmatpush1.msra.mxu0 %v3050
    %3095 = vmatprep.subr.mxu0 0.0
    %3096 = vmatpush1.msra.mxu0 %v3051
    %3097 = vmatprep.subr.mxu0 0.0
    %3098 = vmatpush1.msra.mxu0 %v3052
    %3099 = vmatprep.subr.mxu0 0.0
    %3100 = vmatpush1.msra.mxu0 %v3053
    %3101 = vmatprep.subr.mxu0 0.0
    %3102 = vmatpush1.msra.mxu0 %v3054
    %3103 = vmatprep.subr.mxu0 0.0
    %3104 = vmatpush1.msra.mxu0 %v3055
    %3105 = vmatprep.subr.mxu0 0.0
    %3106 = vmatpush1.msra.mxu0 %v3056
    %3107 = vmatprep.subr.mxu0 0.0
    %3108 = vmatpush1.msra.mxu0 %v3057
    %3109 = vmatprep.subr.mxu0 0.0
    %3110 = vmatpush1.msra.mxu0 %v3058
    %3111 = vmatprep.subr.mxu0 0.0
    %3112 = vmatpush1.msra.mxu0 %v3059
    %3113 = vmatprep.subr.mxu0 0.0
    %3114 = vmatpush1.msra.mxu0 %v3060
    %3115 = vmatprep.subr.mxu0 0.0
    %3116 = vmatpush1.msra.mxu0 %v3061
    %3117 = vmatprep.subr.mxu0 0.0
    %3118 = vmatpush1.msra.mxu0 %v3062
    %3119 = vmatprep.subr.mxu0 0.0
    %3120 = vmatpush1.msra.mxu0 %v3063
    %3121 = vmatprep.subr.mxu0 0.0
    %3122 = vmatpush1.msra.mxu0 %v3064
    %3123 = vmatprep.subr.mxu0 0.0
    %3124 = vmatpush1.msra.mxu0 0.0
    %3125 = vmatprep.subr.mxu0 0.0
    %3126 = vmatpush1.msra.mxu0 0.0
    %3127 = vmatprep.subr.mxu0 0.0
    %3128 = vmatpush1.msra.mxu0 0.0
    %3129 = vmatprep.subr.mxu0 0.0
    %3130 = vmatpush1.msra.mxu0 0.0
    %3131 = vmatprep.subr.mxu0 0.0
    %3132 = vmatpush1.msra.mxu0 0.0
    %3133 = vmatprep.subr.mxu0 0.0
    %3134 = vmatpush1.msra.mxu0 0.0
    %3135 = vmatprep.subr.mxu0 0.0
    %3136 = vmatpush1.msra.mxu0 0.0
    %3137 = vmatprep.subr.mxu0 0.0
    %3138 = vmatpush1.msra.mxu0 0.0
    %3139 = vmatprep.mubr.f32.mxu0 %v3073
    %3140 = vmatmul.mubr.f32.gmra.mrb[0].mxu0 %v3040
    %v3141 = vpop.f32.mrb[0].mxu0
    %v3142 = vadd.f32 %v3070, %v3141
    %v3143 = vpop.f32.mrb[0].mxu0
    %3144 = vdwg.mxu0
    %vm3145 = vcmask 19456
    %3146 = vst.msk [vmem:[#allocation2] sm:$0xf] %vm3145, %v3142
    // Predicated region
    $region114: #{forward.1} parent=1 // pred_check
      _
    $region115: #{forward.1} parent=1 // pred_check_branch
      %3148 = sbr.rel (0) target = $region117
    $region116: #{forward.1} parent=1 // pred_region
      %s3150 = ssub.s32 64, 64
      %3151 = vsyncadd [#allocation3], %s3150
      %s3153 = sshll.u32 [#allocation2], 4
      %s3154 = int_to_ptr.vmem [resolvable:$true] %s3153
      %3156 = dma.vmem_to_hbm [thread:$0]  %s3154, 64, %s28, [#allocation3]
    $region117: #{forward.1} parent=1 // pred_fallthru
      _
    // Predicated region
    $region118: #{forward.1} parent=1 // pred_check
      _
    $region119: #{forward.1} parent=1 // pred_check_branch
      %3158 = sbr.rel (0) target = $region121
    $region120: #{forward.1} parent=1 // pred_region
      %3159 = dma.done [#allocation3], 64
    $region121: #{forward.1} parent=1 // pred_fallthru
      _
    %3160 = vsyncpa [#allocation3], 1

</llo_original>
